<compile_context>
chip_gen: v7x
topology: tpu7x:2x2x1
jax: 0.10.0
libtpu: 0.0.40
codegen_flags: <defaults>
</compile_context>

<pallas_src>
import functools

import jax
import jax.numpy as jnp
import numpy as np
from jax.experimental import pallas as pl
from jax.experimental.pallas import tpu as pltpu


# ----------------------------------------------------------------------------
# Pallas kernel
# ----------------------------------------------------------------------------
def _make_lstm_classifier_kernel(num_layers, T, Bp, H):
    """Fused kernel for fixed (num_layers, T, Bp, H).

    Gate-column packing (8H wide): [i_f i_b f_f f_b o_f o_b g_f g_b].
    Activation slab layout, row-block t (4H wide):
        [h_f(t) | h_b(T-1-t) | h_f(T-1-t) | h_b(t)]
    so xp row-block s = [fwd gates at time s | bwd gates at time T-1-s] after one matmul.
    """
    H2, H4, H6 = 2 * H, 4 * H, 6 * H

    def kernel(*refs):
        idx = 0
        x2_ref = refs[idx]; idx += 1                      # (T*Bp, 2*D)  [x(t) | x(T-1-t)]
        layer_refs = []
        for _ in range(num_layers):
            layer_refs.append(refs[idx:idx + 3]); idx += 3  # wih8, whh8, b8
        fcw_ref = refs[idx]; idx += 1                     # (4H, 1)
        fcb_ref = refs[idx]; idx += 1                     # (1, 1)
        out_ref = refs[idx]; idx += 1                     # (Bp, 1)
        xp_ref, act_ref = refs[idx], refs[idx + 1]        # VMEM scratch

        for layer in range(num_layers):
            wih8_ref, whh8_ref, b8_ref = layer_refs[layer]

            inp = x2_ref[...] if layer == 0 else act_ref[...]

            # ONE fused whole-sequence input-projection matmul per layer (both directions).
            xp_ref[...] = jnp.dot(inp, wih8_ref[...],
                                  preferred_element_type=jnp.float32) + b8_ref[...]

            whh8 = whh8_ref[...]                          # (2H, 8H) hoisted into vregs
            h = jnp.zeros((Bp, H2), jnp.float32)          # [h_f | h_b]
            c = jnp.zeros((Bp, H2), jnp.float32)          # [c_f | c_b]

            # Fused fwd+bwd recurrence, fully unrolled (T small & static).
            for s in range(T):
                row_f = s * Bp
                row_b = (T - 1 - s) * Bp
                gates = xp_ref[pl.ds(row_f, Bp), :] + jnp.dot(
                    h, whh8, preferred_element_type=jnp.float32)      # (Bp, 8H)
                sig = jax.nn.sigmoid(gates[:, :H6])       # [i_f i_b f_f f_b o_f o_b]
                g = jnp.tanh(gates[:, H6:])               # [g_f g_b]
                i_g = sig[:, :H2]
                f_g = sig[:, H2:2 * H2]
                o_g = sig[:, 2 * H2:]
                c = f_g * c + i_g * g
                h = o_g * jnp.tanh(c)
                # In-place writes: time-ordered half and time-reversed half of the slab.
                act_ref[pl.ds(row_f, Bp), pl.ds(0, H2)] = h
                act_ref[pl.ds(row_b, Bp), pl.ds(H2, H2)] = h

        # FC head fused: last_hidden = [h_f(T-1), h_b(T-1)] lives in row-block T-1,
        # columns {0:H, 3H:4H}; fc weights are packed to (4H, 1) with zeros in H:3H.
        last = (T - 1) * Bp
        out_ref[...] = jnp.dot(act_ref[pl.ds(last, Bp), :], fcw_ref[...],
                               preferred_element_type=jnp.float32) + fcb_ref[...]

    return kernel


# ----------------------------------------------------------------------------
# One-time weight packing (PyTorch layout -> fused kernel layout)
# ----------------------------------------------------------------------------
def _gate_cols(w, H):
    """w: (4H, K) PyTorch gate rows [i, f, g, o] -> dict of (K, H) transposed blocks."""
    w = jnp.asarray(w, jnp.float32)
    return dict(i=w[0:H].T, f=w[H:2 * H].T, g=w[2 * H:3 * H].T, o=w[3 * H:4 * H].T)


def _pack_whh(whh_f, whh_b, H):
    """(2H, 8H) block-structured recurrent weight, columns [i_f i_b f_f f_b o_f o_b g_f g_b]."""
    f = _gate_cols(whh_f, H)
    b = _gate_cols(whh_b, H)
    Z = jnp.zeros((H, H), jnp.float32)
    top = jnp.concatenate([f["i"], Z, f["f"], Z, f["o"], Z, f["g"], Z], axis=1)  # from h_f
    bot = jnp.concatenate([Z, b["i"], Z, b["f"], Z, b["o"], Z, b["g"]], axis=1)  # from h_b
    return jnp.concatenate([top, bot], axis=0)


def _pack_bias(b_f, b_b, H):
    bf = jnp.asarray(b_f, jnp.float32)
    bb = jnp.asarray(b_b, jnp.float32)
    parts = [bf[0:H], bb[0:H], bf[H:2 * H], bb[H:2 * H],
             bf[3 * H:4 * H], bb[3 * H:4 * H], bf[2 * H:3 * H], bb[2 * H:3 * H]]
    return jnp.concatenate(parts).reshape(1, 8 * H)


def _pack_wih_layer0(wih_f, wih_b, H, D):
    """(2D, 8H): rows 0:D multiply x(t) -> fwd gates, rows D:2D multiply x(T-1-t) -> bwd gates."""
    f = _gate_cols(wih_f, H)   # each (D, H)
    b = _gate_cols(wih_b, H)
    Z = jnp.zeros((D, H), jnp.float32)
    top = jnp.concatenate([f["i"], Z, f["f"], Z, f["o"], Z, f["g"], Z], axis=1)
    bot = jnp.concatenate([Z, b["i"], Z, b["f"], Z, b["o"], Z, b["g"]], axis=1)
    return jnp.concatenate([top, bot], axis=0)


def _pack_wih_deep(wih_f, wih_b, H):
    """(4H, 8H) for layers >= 1, matching the act-slab row layout
    [h_f(t), h_b(T-1-t), h_f(T-1-t), h_b(t)]."""
    wih_f = jnp.asarray(wih_f, jnp.float32)   # (4H, 2H): cols 0:H <- h_f, cols H:2H <- h_b
    wih_b = jnp.asarray(wih_b, jnp.float32)
    wf_hf = _gate_cols(wih_f[:, 0:H], H)
    wf_hb = _gate_cols(wih_f[:, H:2 * H], H)
    wb_hf = _gate_cols(wih_b[:, 0:H], H)
    wb_hb = _gate_cols(wih_b[:, H:2 * H], H)
    Z = jnp.zeros((H, H), jnp.float32)
    r0 = jnp.concatenate([wf_hf["i"], Z, wf_hf["f"], Z, wf_hf["o"], Z, wf_hf["g"], Z], axis=1)
    r1 = jnp.concatenate([Z, wb_hb["i"], Z, wb_hb["f"], Z, wb_hb["o"], Z, wb_hb["g"]], axis=1)
    r2 = jnp.concatenate([Z, wb_hf["i"], Z, wb_hf["f"], Z, wb_hf["o"], Z, wb_hf["g"]], axis=1)
    r3 = jnp.concatenate([wf_hb["i"], Z, wf_hb["f"], Z, wf_hb["o"], Z, wf_hb["g"], Z], axis=1)
    return jnp.concatenate([r0, r1, r2, r3], axis=0)


def prepack_params(params, input_size, hidden_size, num_layers):
    """Pack PyTorch-layout parameters into kernel layout ONCE (outside the per-call path)."""
    H = hidden_size
    layers = []
    for layer in range(num_layers):
        p = params["lstm"][layer]
        if layer == 0:
            wih8 = _pack_wih_layer0(p["w_ih_f"], p["w_ih_b"], H, input_size)
        else:
            wih8 = _pack_wih_deep(p["w_ih_f"], p["w_ih_b"], H)
        whh8 = _pack_whh(p["w_hh_f"], p["w_hh_b"], H)
        b8 = _pack_bias(p["b_f"], p["b_b"], H)
        layers.append((wih8, whh8, b8))
    fc_w = jnp.asarray(params["fc_w"], jnp.float32)            # (1, 2H)
    fcw = jnp.concatenate(
        [fc_w[0, 0:H], jnp.zeros((2 * H,), jnp.float32), fc_w[0, H:2 * H]]
    ).reshape(4 * H, 1)
    fcb = jnp.asarray(params["fc_b"], jnp.float32).reshape(1, 1)
    return (tuple(layers), fcw, fcb)


# ----------------------------------------------------------------------------
# Forward wrapper (only input prep + one pallas_call per call)
# ----------------------------------------------------------------------------
def lstm_classifier_forward(x_btd, packed, *, hidden_size):
    """Forward matching LSTMClassifier.forward. x_btd: (B, T, D) float32."""
    layers, fcw, fcb = packed
    num_layers = len(layers)
    H = hidden_size
    B, T, D = x_btd.shape
    Bp = ((B + 7) // 8) * 8                                # sublane-aligned batch

    # Time-major, batch-padded; doubled stream [x(t) | x(T-1-t)] for the fused projection.
    x_t = jnp.transpose(x_btd.astype(jnp.float32), (1, 0, 2))          # (T, B, D)
    x_t = jnp.pad(x_t, ((0, 0), (0, Bp - B), (0, 0)))                  # (T, Bp, D)
    x2 = jnp.concatenate([x_t, x_t[::-1]], axis=-1).reshape(T * Bp, 2 * D)

    operands = [x2]
    for (wih8, whh8, b8) in layers:
        operands += [wih8, whh8, b8]
    operands += [fcw, fcb]

    kernel = _make_lstm_classifier_kernel(num_layers, T, Bp, H)
    out = pl.pallas_call(
        kernel,
        out_shape=jax.ShapeDtypeStruct((Bp, 1), jnp.float32),
        scratch_shapes=[
            pltpu.VMEM((T * Bp, 8 * H), jnp.float32),      # xp  (fused gate pre-activations)
            pltpu.VMEM((T * Bp, 4 * H), jnp.float32),      # act (time-ordered + reversed halves)
        ],
    )(*operands)
    return out[:B, 0]


# ----------------------------------------------------------------------------
# Deterministic parameter init (xavier_uniform for weights, zeros for biases)
# ----------------------------------------------------------------------------
def xavier_uniform(key, shape):
    fan_out, fan_in = shape
    a = float(np.sqrt(6.0 / (fan_in + fan_out)))
    return jax.random.uniform(key, shape, jnp.float32, -a, a)


def init_params(key, input_size, hidden_size, num_layers):
    H = hidden_size
    params = {"lstm": []}
    for layer in range(num_layers):
        din = input_size if layer == 0 else 2 * H
        keys = jax.random.split(key, 5)
        key = keys[0]
        params["lstm"].append(
            dict(
                w_ih_f=xavier_uniform(keys[1], (4 * H, din)),
                w_hh_f=xavier_uniform(keys[2], (4 * H, H)),
                b_f=jnp.zeros((4 * H,), jnp.float32),      # b_ih + b_hh (both zero)
                w_ih_b=xavier_uniform(keys[3], (4 * H, din)),
                w_hh_b=xavier_uniform(keys[4], (4 * H, H)),
                b_b=jnp.zeros((4 * H,), jnp.float32),
            )
        )
    k1, k2 = jax.random.split(key, 2)
    params["fc_w"] = xavier_uniform(k1, (1, 2 * H))
    params["fc_b"] = jnp.zeros((1,), jnp.float32)
    return params


# ----------------------------------------------------------------------------
# Pure-JAX reference (mirrors torch.nn.LSTM semantics, original gate order)
# ----------------------------------------------------------------------------
def _ref_lstm_dir(x_tbd, w_ih, w_hh, bias):
    T, B, _ = x_tbd.shape
    H = w_hh.shape[1]
    h = jnp.zeros((B, H), jnp.float32)
    c = jnp.zeros((B, H), jnp.float32)
    outs = []
    for t in range(T):
        gates = x_tbd[t] @ w_ih.T + h @ w_hh.T + bias
        i = jax.nn.sigmoid(gates[:, 0 * H:1 * H])
        f = jax.nn.sigmoid(gates[:, 1 * H:2 * H])
        g = jnp.tanh(gates[:, 2 * H:3 * H])
        o = jax.nn.sigmoid(gates[:, 3 * H:4 * H])
        c = f * c + i * g
        h = o * jnp.tanh(c)
        outs.append(h)
    return jnp.stack(outs, axis=0)


def reference_forward(x_btd, params, hidden_size, num_layers):
    x = jnp.transpose(x_btd, (1, 0, 2))
    layer_in = x
    for layer in range(num_layers):
        p = params["lstm"][layer]
        out_f = _ref_lstm_dir(layer_in, p["w_ih_f"], p["w_hh_f"], p["b_f"])
        out_b = _ref_lstm_dir(layer_in[::-1], p["w_ih_b"], p["w_hh_b"], p["b_b"])[::-1]
        layer_in = jnp.concatenate([out_f, out_b], axis=-1)
    last_hidden = layer_in[-1]
    out = last_hidden @ params["fc_w"].T + params["fc_b"]
    return jnp.squeeze(out)


# ----------------------------------------------------------------------------
if __name__ == "__main__":
    input_size = 1
    hidden_size = 32
    num_layers = 2
    batch = 2
    seq_len = 8

    key = jax.random.PRNGKey(0)
    k_param, k_x = jax.random.split(key)
    params = init_params(k_param, input_size, hidden_size, num_layers)
    x = jax.random.normal(k_x, (batch, seq_len, input_size), jnp.float32)

    # Weight packing happens ONCE, outside the jitted per-call forward.
    packed = jax.tree_util.tree_map(
        jax.block_until_ready,
        prepack_params(params, input_size, hidden_size, num_layers))

    fwd = jax.jit(functools.partial(lstm_classifier_forward, hidden_size=hidden_size))
    out = jax.block_until_ready(fwd(x, packed))

    ref = jax.block_until_ready(reference_forward(x, params, hidden_size, num_layers))
    np.testing.assert_allclose(np.asarray(out), np.asarray(ref), rtol=1e-5, atol=1e-5)
    assert out.shape == (batch,)

    print("KERNEL_OK")
</pallas_src>

<mosaic_0001>
module attributes {stable_mosaic.version = 11 : i64} {
  func.func @kernel(%arg0: memref<64x2xf32, #tpu.memory_space<vmem>>, %arg1: memref<2x256xf32, #tpu.memory_space<vmem>>, %arg2: memref<64x256xf32, #tpu.memory_space<vmem>>, %arg3: memref<1x256xf32, #tpu.memory_space<vmem>>, %arg4: memref<128x256xf32, #tpu.memory_space<vmem>>, %arg5: memref<64x256xf32, #tpu.memory_space<vmem>>, %arg6: memref<1x256xf32, #tpu.memory_space<vmem>>, %arg7: memref<128x1xf32, #tpu.memory_space<vmem>>, %arg8: memref<1x1xf32, #tpu.memory_space<vmem>>, %arg9: memref<8x1xf32, #tpu.memory_space<vmem>>, %arg10: memref<64x256xf32, #tpu.memory_space<vmem>>, %arg11: memref<64x128xf32, #tpu.memory_space<vmem>>) attributes {dimension_semantics = [], scalar_prefetch = 0 : i64, scratch_operands = 2 : i64, tpu.core_type = #tpu.core_type<tc>} {
    %c0 = arith.constant 0 : index
    %c0_0 = arith.constant 0 : index
    %0 = vector.load %arg0[%c0, %c0_0] : memref<64x2xf32, #tpu.memory_space<vmem>>, vector<64x2xf32>
    %c0_1 = arith.constant 0 : index
    %c0_2 = arith.constant 0 : index
    %1 = vector.load %arg1[%c0_1, %c0_2] : memref<2x256xf32, #tpu.memory_space<vmem>>, vector<2x256xf32>
    %cst = arith.constant dense<0.000000e+00> : vector<64x256xf32>
    %2 = tpu.matmul %0, %1, %cst {dimension_numbers = #tpu.dot_dimension_numbers<[1], [0], [0], [1], [0, 0, 1, 1], [], []>} : vector<64x2xf32>, vector<2x256xf32>, vector<64x256xf32> -> vector<64x256xf32>
    %c0_3 = arith.constant 0 : index
    %c0_4 = arith.constant 0 : index
    %3 = vector.load %arg3[%c0_3, %c0_4] : memref<1x256xf32, #tpu.memory_space<vmem>>, vector<1x256xf32>
    %4 = vector.broadcast %3 : vector<1x256xf32> to vector<64x256xf32>
    %5 = arith.addf %2, %4 : vector<64x256xf32>
    %c0_5 = arith.constant 0 : index
    %c0_6 = arith.constant 0 : index
    %6 = vector.load %arg10[%c0_5, %c0_6] : memref<64x256xf32, #tpu.memory_space<vmem>>, vector<64x256xf32>
    tpu.vector_store %arg10[%c0_5, %c0_6], %5 {strides = array<i32>} : memref<64x256xf32, #tpu.memory_space<vmem>>, vector<64x256xf32>,
    %c0_7 = arith.constant 0 : index
    %c0_8 = arith.constant 0 : index
    %7 = vector.load %arg2[%c0_7, %c0_8] : memref<64x256xf32, #tpu.memory_space<vmem>>, vector<64x256xf32>
    %cst_9 = arith.constant 0.000000e+00 : f32
    %8 = vector.broadcast %cst_9 : f32 to vector<8x64xf32>
    %cst_10 = arith.constant 0.000000e+00 : f32
    %9 = vector.broadcast %cst_10 : f32 to vector<8x64xf32>
    %c0_11 = arith.constant 0 : index
    %c0_12 = arith.constant 0 : index
    %10 = vector.load %arg10[%c0_11, %c0_12] : memref<64x256xf32, #tpu.memory_space<vmem>>, vector<8x256xf32>
    %cst_13 = arith.constant dense<0.000000e+00> : vector<8x256xf32>
    %11 = tpu.matmul %8, %7, %cst_13 {dimension_numbers = #tpu.dot_dimension_numbers<[1], [0], [0], [1], [0, 0, 1, 1], [], []>} : vector<8x64xf32>, vector<64x256xf32>, vector<8x256xf32> -> vector<8x256xf32>
    %12 = arith.addf %10, %11 : vector<8x256xf32>
    %13 = vector.extract_strided_slice %12 {offsets = [0, 0], sizes = [8, 192], strides = [1, 1]} : vector<8x256xf32> to vector<8x192xf32>
    %14 = arith.negf %13 : vector<8x192xf32>
    %15 = math.exp %14 : vector<8x192xf32>
    %cst_14 = arith.constant 1.000000e+00 : f32
    %16 = vector.broadcast %cst_14 : f32 to vector<8x192xf32>
    %17 = arith.addf %16, %15 : vector<8x192xf32>
    %18 = arith.divf %16, %17 : vector<8x192xf32>
    %19 = vector.extract_strided_slice %12 {offsets = [0, 192], sizes = [8, 64], strides = [1, 1]} : vector<8x256xf32> to vector<8x64xf32>
    %20 = math.tanh %19 : vector<8x64xf32>
    %21 = vector.extract_strided_slice %18 {offsets = [0, 0], sizes = [8, 64], strides = [1, 1]} : vector<8x192xf32> to vector<8x64xf32>
    %22 = vector.extract_strided_slice %18 {offsets = [0, 64], sizes = [8, 64], strides = [1, 1]} : vector<8x192xf32> to vector<8x64xf32>
    %23 = vector.extract_strided_slice %18 {offsets = [0, 128], sizes = [8, 64], strides = [1, 1]} : vector<8x192xf32> to vector<8x64xf32>
    %24 = arith.mulf %22, %9 : vector<8x64xf32>
    %25 = arith.mulf %21, %20 : vector<8x64xf32>
    %26 = arith.addf %24, %25 : vector<8x64xf32>
    %27 = math.tanh %26 : vector<8x64xf32>
    %28 = arith.mulf %23, %27 : vector<8x64xf32>
    %c0_15 = arith.constant 0 : index
    %c0_16 = arith.constant 0 : index
    %29 = vector.load %arg11[%c0_15, %c0_16] : memref<64x128xf32, #tpu.memory_space<vmem>>, vector<8x64xf32>
    tpu.vector_store %arg11[%c0_15, %c0_16], %28 {strides = array<i32>} : memref<64x128xf32, #tpu.memory_space<vmem>>, vector<8x64xf32>,
    %c56 = arith.constant 56 : index
    %c64 = arith.constant 64 : index
    %30 = vector.load %arg11[%c56, %c64] : memref<64x128xf32, #tpu.memory_space<vmem>>, vector<8x64xf32>
    tpu.vector_store %arg11[%c56, %c64], %28 {strides = array<i32>} : memref<64x128xf32, #tpu.memory_space<vmem>>, vector<8x64xf32>,
    %c8 = arith.constant 8 : index
    %c0_17 = arith.constant 0 : index
    %31 = vector.load %arg10[%c8, %c0_17] : memref<64x256xf32, #tpu.memory_space<vmem>>, vector<8x256xf32>
    %cst_18 = arith.constant dense<0.000000e+00> : vector<8x256xf32>
    %32 = tpu.matmul %28, %7, %cst_18 {dimension_numbers = #tpu.dot_dimension_numbers<[1], [0], [0], [1], [0, 0, 1, 1], [], []>} : vector<8x64xf32>, vector<64x256xf32>, vector<8x256xf32> -> vector<8x256xf32>
    %33 = arith.addf %31, %32 : vector<8x256xf32>
    %34 = vector.extract_strided_slice %33 {offsets = [0, 0], sizes = [8, 192], strides = [1, 1]} : vector<8x256xf32> to vector<8x192xf32>
    %35 = arith.negf %34 : vector<8x192xf32>
    %36 = math.exp %35 : vector<8x192xf32>
    %cst_19 = arith.constant 1.000000e+00 : f32
    %37 = vector.broadcast %cst_19 : f32 to vector<8x192xf32>
    %38 = arith.addf %37, %36 : vector<8x192xf32>
    %39 = arith.divf %37, %38 : vector<8x192xf32>
    %40 = vector.extract_strided_slice %33 {offsets = [0, 192], sizes = [8, 64], strides = [1, 1]} : vector<8x256xf32> to vector<8x64xf32>
    %41 = math.tanh %40 : vector<8x64xf32>
    %42 = vector.extract_strided_slice %39 {offsets = [0, 0], sizes = [8, 64], strides = [1, 1]} : vector<8x192xf32> to vector<8x64xf32>
    %43 = vector.extract_strided_slice %39 {offsets = [0, 64], sizes = [8, 64], strides = [1, 1]} : vector<8x192xf32> to vector<8x64xf32>
    %44 = vector.extract_strided_slice %39 {offsets = [0, 128], sizes = [8, 64], strides = [1, 1]} : vector<8x192xf32> to vector<8x64xf32>
    %45 = arith.mulf %43, %26 : vector<8x64xf32>
    %46 = arith.mulf %42, %41 : vector<8x64xf32>
    %47 = arith.addf %45, %46 : vector<8x64xf32>
    %48 = math.tanh %47 : vector<8x64xf32>
    %49 = arith.mulf %44, %48 : vector<8x64xf32>
    %c8_20 = arith.constant 8 : index
    %c0_21 = arith.constant 0 : index
    %50 = vector.load %arg11[%c8_20, %c0_21] : memref<64x128xf32, #tpu.memory_space<vmem>>, vector<8x64xf32>
    tpu.vector_store %arg11[%c8_20, %c0_21], %49 {strides = array<i32>} : memref<64x128xf32, #tpu.memory_space<vmem>>, vector<8x64xf32>,
    %c48 = arith.constant 48 : index
    %c64_22 = arith.constant 64 : index
    %51 = vector.load %arg11[%c48, %c64_22] : memref<64x128xf32, #tpu.memory_space<vmem>>, vector<8x64xf32>
    tpu.vector_store %arg11[%c48, %c64_22], %49 {strides = array<i32>} : memref<64x128xf32, #tpu.memory_space<vmem>>, vector<8x64xf32>,
    %c16 = arith.constant 16 : index
    %c0_23 = arith.constant 0 : index
    %52 = vector.load %arg10[%c16, %c0_23] : memref<64x256xf32, #tpu.memory_space<vmem>>, vector<8x256xf32>
    %cst_24 = arith.constant dense<0.000000e+00> : vector<8x256xf32>
    %53 = tpu.matmul %49, %7, %cst_24 {dimension_numbers = #tpu.dot_dimension_numbers<[1], [0], [0], [1], [0, 0, 1, 1], [], []>} : vector<8x64xf32>, vector<64x256xf32>, vector<8x256xf32> -> vector<8x256xf32>
    %54 = arith.addf %52, %53 : vector<8x256xf32>
    %55 = vector.extract_strided_slice %54 {offsets = [0, 0], sizes = [8, 192], strides = [1, 1]} : vector<8x256xf32> to vector<8x192xf32>
    %56 = arith.negf %55 : vector<8x192xf32>
    %57 = math.exp %56 : vector<8x192xf32>
    %cst_25 = arith.constant 1.000000e+00 : f32
    %58 = vector.broadcast %cst_25 : f32 to vector<8x192xf32>
    %59 = arith.addf %58, %57 : vector<8x192xf32>
    %60 = arith.divf %58, %59 : vector<8x192xf32>
    %61 = vector.extract_strided_slice %54 {offsets = [0, 192], sizes = [8, 64], strides = [1, 1]} : vector<8x256xf32> to vector<8x64xf32>
    %62 = math.tanh %61 : vector<8x64xf32>
    %63 = vector.extract_strided_slice %60 {offsets = [0, 0], sizes = [8, 64], strides = [1, 1]} : vector<8x192xf32> to vector<8x64xf32>
    %64 = vector.extract_strided_slice %60 {offsets = [0, 64], sizes = [8, 64], strides = [1, 1]} : vector<8x192xf32> to vector<8x64xf32>
    %65 = vector.extract_strided_slice %60 {offsets = [0, 128], sizes = [8, 64], strides = [1, 1]} : vector<8x192xf32> to vector<8x64xf32>
    %66 = arith.mulf %64, %47 : vector<8x64xf32>
    %67 = arith.mulf %63, %62 : vector<8x64xf32>
    %68 = arith.addf %66, %67 : vector<8x64xf32>
    %69 = math.tanh %68 : vector<8x64xf32>
    %70 = arith.mulf %65, %69 : vector<8x64xf32>
    %c16_26 = arith.constant 16 : index
    %c0_27 = arith.constant 0 : index
    %71 = vector.load %arg11[%c16_26, %c0_27] : memref<64x128xf32, #tpu.memory_space<vmem>>, vector<8x64xf32>
    tpu.vector_store %arg11[%c16_26, %c0_27], %70 {strides = array<i32>} : memref<64x128xf32, #tpu.memory_space<vmem>>, vector<8x64xf32>,
    %c40 = arith.constant 40 : index
    %c64_28 = arith.constant 64 : index
    %72 = vector.load %arg11[%c40, %c64_28] : memref<64x128xf32, #tpu.memory_space<vmem>>, vector<8x64xf32>
    tpu.vector_store %arg11[%c40, %c64_28], %70 {strides = array<i32>} : memref<64x128xf32, #tpu.memory_space<vmem>>, vector<8x64xf32>,
    %c24 = arith.constant 24 : index
    %c0_29 = arith.constant 0 : index
    %73 = vector.load %arg10[%c24, %c0_29] : memref<64x256xf32, #tpu.memory_space<vmem>>, vector<8x256xf32>
    %cst_30 = arith.constant dense<0.000000e+00> : vector<8x256xf32>
    %74 = tpu.matmul %70, %7, %cst_30 {dimension_numbers = #tpu.dot_dimension_numbers<[1], [0], [0], [1], [0, 0, 1, 1], [], []>} : vector<8x64xf32>, vector<64x256xf32>, vector<8x256xf32> -> vector<8x256xf32>
    %75 = arith.addf %73, %74 : vector<8x256xf32>
    %76 = vector.extract_strided_slice %75 {offsets = [0, 0], sizes = [8, 192], strides = [1, 1]} : vector<8x256xf32> to vector<8x192xf32>
    %77 = arith.negf %76 : vector<8x192xf32>
    %78 = math.exp %77 : vector<8x192xf32>
    %cst_31 = arith.constant 1.000000e+00 : f32
    %79 = vector.broadcast %cst_31 : f32 to vector<8x192xf32>
    %80 = arith.addf %79, %78 : vector<8x192xf32>
    %81 = arith.divf %79, %80 : vector<8x192xf32>
    %82 = vector.extract_strided_slice %75 {offsets = [0, 192], sizes = [8, 64], strides = [1, 1]} : vector<8x256xf32> to vector<8x64xf32>
    %83 = math.tanh %82 : vector<8x64xf32>
    %84 = vector.extract_strided_slice %81 {offsets = [0, 0], sizes = [8, 64], strides = [1, 1]} : vector<8x192xf32> to vector<8x64xf32>
    %85 = vector.extract_strided_slice %81 {offsets = [0, 64], sizes = [8, 64], strides = [1, 1]} : vector<8x192xf32> to vector<8x64xf32>
    %86 = vector.extract_strided_slice %81 {offsets = [0, 128], sizes = [8, 64], strides = [1, 1]} : vector<8x192xf32> to vector<8x64xf32>
    %87 = arith.mulf %85, %68 : vector<8x64xf32>
    %88 = arith.mulf %84, %83 : vector<8x64xf32>
    %89 = arith.addf %87, %88 : vector<8x64xf32>
    %90 = math.tanh %89 : vector<8x64xf32>
    %91 = arith.mulf %86, %90 : vector<8x64xf32>
    %c24_32 = arith.constant 24 : index
    %c0_33 = arith.constant 0 : index
    %92 = vector.load %arg11[%c24_32, %c0_33] : memref<64x128xf32, #tpu.memory_space<vmem>>, vector<8x64xf32>
    tpu.vector_store %arg11[%c24_32, %c0_33], %91 {strides = array<i32>} : memref<64x128xf32, #tpu.memory_space<vmem>>, vector<8x64xf32>,
    %c32 = arith.constant 32 : index
    %c64_34 = arith.constant 64 : index
    %93 = vector.load %arg11[%c32, %c64_34] : memref<64x128xf32, #tpu.memory_space<vmem>>, vector<8x64xf32>
    tpu.vector_store %arg11[%c32, %c64_34], %91 {strides = array<i32>} : memref<64x128xf32, #tpu.memory_space<vmem>>, vector<8x64xf32>,
    %c32_35 = arith.constant 32 : index
    %c0_36 = arith.constant 0 : index
    %94 = vector.load %arg10[%c32_35, %c0_36] : memref<64x256xf32, #tpu.memory_space<vmem>>, vector<8x256xf32>
    %cst_37 = arith.constant dense<0.000000e+00> : vector<8x256xf32>
    %95 = tpu.matmul %91, %7, %cst_37 {dimension_numbers = #tpu.dot_dimension_numbers<[1], [0], [0], [1], [0, 0, 1, 1], [], []>} : vector<8x64xf32>, vector<64x256xf32>, vector<8x256xf32> -> vector<8x256xf32>
    %96 = arith.addf %94, %95 : vector<8x256xf32>
    %97 = vector.extract_strided_slice %96 {offsets = [0, 0], sizes = [8, 192], strides = [1, 1]} : vector<8x256xf32> to vector<8x192xf32>
    %98 = arith.negf %97 : vector<8x192xf32>
    %99 = math.exp %98 : vector<8x192xf32>
    %cst_38 = arith.constant 1.000000e+00 : f32
    %100 = vector.broadcast %cst_38 : f32 to vector<8x192xf32>
    %101 = arith.addf %100, %99 : vector<8x192xf32>
    %102 = arith.divf %100, %101 : vector<8x192xf32>
    %103 = vector.extract_strided_slice %96 {offsets = [0, 192], sizes = [8, 64], strides = [1, 1]} : vector<8x256xf32> to vector<8x64xf32>
    %104 = math.tanh %103 : vector<8x64xf32>
    %105 = vector.extract_strided_slice %102 {offsets = [0, 0], sizes = [8, 64], strides = [1, 1]} : vector<8x192xf32> to vector<8x64xf32>
    %106 = vector.extract_strided_slice %102 {offsets = [0, 64], sizes = [8, 64], strides = [1, 1]} : vector<8x192xf32> to vector<8x64xf32>
    %107 = vector.extract_strided_slice %102 {offsets = [0, 128], sizes = [8, 64], strides = [1, 1]} : vector<8x192xf32> to vector<8x64xf32>
    %108 = arith.mulf %106, %89 : vector<8x64xf32>
    %109 = arith.mulf %105, %104 : vector<8x64xf32>
    %110 = arith.addf %108, %109 : vector<8x64xf32>
    %111 = math.tanh %110 : vector<8x64xf32>
    %112 = arith.mulf %107, %111 : vector<8x64xf32>
    %c32_39 = arith.constant 32 : index
    %c0_40 = arith.constant 0 : index
    %113 = vector.load %arg11[%c32_39, %c0_40] : memref<64x128xf32, #tpu.memory_space<vmem>>, vector<8x64xf32>
    tpu.vector_store %arg11[%c32_39, %c0_40], %112 {strides = array<i32>} : memref<64x128xf32, #tpu.memory_space<vmem>>, vector<8x64xf32>,
    %c24_41 = arith.constant 24 : index
    %c64_42 = arith.constant 64 : index
    %114 = vector.load %arg11[%c24_41, %c64_42] : memref<64x128xf32, #tpu.memory_space<vmem>>, vector<8x64xf32>
    tpu.vector_store %arg11[%c24_41, %c64_42], %112 {strides = array<i32>} : memref<64x128xf32, #tpu.memory_space<vmem>>, vector<8x64xf32>,
    %c40_43 = arith.constant 40 : index
    %c0_44 = arith.constant 0 : index
    %115 = vector.load %arg10[%c40_43, %c0_44] : memref<64x256xf32, #tpu.memory_space<vmem>>, vector<8x256xf32>
    %cst_45 = arith.constant dense<0.000000e+00> : vector<8x256xf32>
    %116 = tpu.matmul %112, %7, %cst_45 {dimension_numbers = #tpu.dot_dimension_numbers<[1], [0], [0], [1], [0, 0, 1, 1], [], []>} : vector<8x64xf32>, vector<64x256xf32>, vector<8x256xf32> -> vector<8x256xf32>
    %117 = arith.addf %115, %116 : vector<8x256xf32>
    %118 = vector.extract_strided_slice %117 {offsets = [0, 0], sizes = [8, 192], strides = [1, 1]} : vector<8x256xf32> to vector<8x192xf32>
    %119 = arith.negf %118 : vector<8x192xf32>
    %120 = math.exp %119 : vector<8x192xf32>
    %cst_46 = arith.constant 1.000000e+00 : f32
    %121 = vector.broadcast %cst_46 : f32 to vector<8x192xf32>
    %122 = arith.addf %121, %120 : vector<8x192xf32>
    %123 = arith.divf %121, %122 : vector<8x192xf32>
    %124 = vector.extract_strided_slice %117 {offsets = [0, 192], sizes = [8, 64], strides = [1, 1]} : vector<8x256xf32> to vector<8x64xf32>
    %125 = math.tanh %124 : vector<8x64xf32>
    %126 = vector.extract_strided_slice %123 {offsets = [0, 0], sizes = [8, 64], strides = [1, 1]} : vector<8x192xf32> to vector<8x64xf32>
    %127 = vector.extract_strided_slice %123 {offsets = [0, 64], sizes = [8, 64], strides = [1, 1]} : vector<8x192xf32> to vector<8x64xf32>
    %128 = vector.extract_strided_slice %123 {offsets = [0, 128], sizes = [8, 64], strides = [1, 1]} : vector<8x192xf32> to vector<8x64xf32>
    %129 = arith.mulf %127, %110 : vector<8x64xf32>
    %130 = arith.mulf %126, %125 : vector<8x64xf32>
    %131 = arith.addf %129, %130 : vector<8x64xf32>
    %132 = math.tanh %131 : vector<8x64xf32>
    %133 = arith.mulf %128, %132 : vector<8x64xf32>
    %c40_47 = arith.constant 40 : index
    %c0_48 = arith.constant 0 : index
    %134 = vector.load %arg11[%c40_47, %c0_48] : memref<64x128xf32, #tpu.memory_space<vmem>>, vector<8x64xf32>
    tpu.vector_store %arg11[%c40_47, %c0_48], %133 {strides = array<i32>} : memref<64x128xf32, #tpu.memory_space<vmem>>, vector<8x64xf32>,
    %c16_49 = arith.constant 16 : index
    %c64_50 = arith.constant 64 : index
    %135 = vector.load %arg11[%c16_49, %c64_50] : memref<64x128xf32, #tpu.memory_space<vmem>>, vector<8x64xf32>
    tpu.vector_store %arg11[%c16_49, %c64_50], %133 {strides = array<i32>} : memref<64x128xf32, #tpu.memory_space<vmem>>, vector<8x64xf32>,
    %c48_51 = arith.constant 48 : index
    %c0_52 = arith.constant 0 : index
    %136 = vector.load %arg10[%c48_51, %c0_52] : memref<64x256xf32, #tpu.memory_space<vmem>>, vector<8x256xf32>
    %cst_53 = arith.constant dense<0.000000e+00> : vector<8x256xf32>
    %137 = tpu.matmul %133, %7, %cst_53 {dimension_numbers = #tpu.dot_dimension_numbers<[1], [0], [0], [1], [0, 0, 1, 1], [], []>} : vector<8x64xf32>, vector<64x256xf32>, vector<8x256xf32> -> vector<8x256xf32>
    %138 = arith.addf %136, %137 : vector<8x256xf32>
    %139 = vector.extract_strided_slice %138 {offsets = [0, 0], sizes = [8, 192], strides = [1, 1]} : vector<8x256xf32> to vector<8x192xf32>
    %140 = arith.negf %139 : vector<8x192xf32>
    %141 = math.exp %140 : vector<8x192xf32>
    %cst_54 = arith.constant 1.000000e+00 : f32
    %142 = vector.broadcast %cst_54 : f32 to vector<8x192xf32>
    %143 = arith.addf %142, %141 : vector<8x192xf32>
    %144 = arith.divf %142, %143 : vector<8x192xf32>
    %145 = vector.extract_strided_slice %138 {offsets = [0, 192], sizes = [8, 64], strides = [1, 1]} : vector<8x256xf32> to vector<8x64xf32>
    %146 = math.tanh %145 : vector<8x64xf32>
    %147 = vector.extract_strided_slice %144 {offsets = [0, 0], sizes = [8, 64], strides = [1, 1]} : vector<8x192xf32> to vector<8x64xf32>
    %148 = vector.extract_strided_slice %144 {offsets = [0, 64], sizes = [8, 64], strides = [1, 1]} : vector<8x192xf32> to vector<8x64xf32>
    %149 = vector.extract_strided_slice %144 {offsets = [0, 128], sizes = [8, 64], strides = [1, 1]} : vector<8x192xf32> to vector<8x64xf32>
    %150 = arith.mulf %148, %131 : vector<8x64xf32>
    %151 = arith.mulf %147, %146 : vector<8x64xf32>
    %152 = arith.addf %150, %151 : vector<8x64xf32>
    %153 = math.tanh %152 : vector<8x64xf32>
    %154 = arith.mulf %149, %153 : vector<8x64xf32>
    %c48_55 = arith.constant 48 : index
    %c0_56 = arith.constant 0 : index
    %155 = vector.load %arg11[%c48_55, %c0_56] : memref<64x128xf32, #tpu.memory_space<vmem>>, vector<8x64xf32>
    tpu.vector_store %arg11[%c48_55, %c0_56], %154 {strides = array<i32>} : memref<64x128xf32, #tpu.memory_space<vmem>>, vector<8x64xf32>,
    %c8_57 = arith.constant 8 : index
    %c64_58 = arith.constant 64 : index
    %156 = vector.load %arg11[%c8_57, %c64_58] : memref<64x128xf32, #tpu.memory_space<vmem>>, vector<8x64xf32>
    tpu.vector_store %arg11[%c8_57, %c64_58], %154 {strides = array<i32>} : memref<64x128xf32, #tpu.memory_space<vmem>>, vector<8x64xf32>,
    %c56_59 = arith.constant 56 : index
    %c0_60 = arith.constant 0 : index
    %157 = vector.load %arg10[%c56_59, %c0_60] : memref<64x256xf32, #tpu.memory_space<vmem>>, vector<8x256xf32>
    %cst_61 = arith.constant dense<0.000000e+00> : vector<8x256xf32>
    %158 = tpu.matmul %154, %7, %cst_61 {dimension_numbers = #tpu.dot_dimension_numbers<[1], [0], [0], [1], [0, 0, 1, 1], [], []>} : vector<8x64xf32>, vector<64x256xf32>, vector<8x256xf32> -> vector<8x256xf32>
    %159 = arith.addf %157, %158 : vector<8x256xf32>
    %160 = vector.extract_strided_slice %159 {offsets = [0, 0], sizes = [8, 192], strides = [1, 1]} : vector<8x256xf32> to vector<8x192xf32>
    %161 = arith.negf %160 : vector<8x192xf32>
    %162 = math.exp %161 : vector<8x192xf32>
    %cst_62 = arith.constant 1.000000e+00 : f32
    %163 = vector.broadcast %cst_62 : f32 to vector<8x192xf32>
    %164 = arith.addf %163, %162 : vector<8x192xf32>
    %165 = arith.divf %163, %164 : vector<8x192xf32>
    %166 = vector.extract_strided_slice %159 {offsets = [0, 192], sizes = [8, 64], strides = [1, 1]} : vector<8x256xf32> to vector<8x64xf32>
    %167 = math.tanh %166 : vector<8x64xf32>
    %168 = vector.extract_strided_slice %165 {offsets = [0, 0], sizes = [8, 64], strides = [1, 1]} : vector<8x192xf32> to vector<8x64xf32>
    %169 = vector.extract_strided_slice %165 {offsets = [0, 64], sizes = [8, 64], strides = [1, 1]} : vector<8x192xf32> to vector<8x64xf32>
    %170 = vector.extract_strided_slice %165 {offsets = [0, 128], sizes = [8, 64], strides = [1, 1]} : vector<8x192xf32> to vector<8x64xf32>
    %171 = arith.mulf %169, %152 : vector<8x64xf32>
    %172 = arith.mulf %168, %167 : vector<8x64xf32>
    %173 = arith.addf %171, %172 : vector<8x64xf32>
    %174 = math.tanh %173 : vector<8x64xf32>
    %175 = arith.mulf %170, %174 : vector<8x64xf32>
    %c56_63 = arith.constant 56 : index
    %c0_64 = arith.constant 0 : index
    %176 = vector.load %arg11[%c56_63, %c0_64] : memref<64x128xf32, #tpu.memory_space<vmem>>, vector<8x64xf32>
    tpu.vector_store %arg11[%c56_63, %c0_64], %175 {strides = array<i32>} : memref<64x128xf32, #tpu.memory_space<vmem>>, vector<8x64xf32>,
    %c0_65 = arith.constant 0 : index
    %c64_66 = arith.constant 64 : index
    %177 = vector.load %arg11[%c0_65, %c64_66] : memref<64x128xf32, #tpu.memory_space<vmem>>, vector<8x64xf32>
    tpu.vector_store %arg11[%c0_65, %c64_66], %175 {strides = array<i32>} : memref<64x128xf32, #tpu.memory_space<vmem>>, vector<8x64xf32>,
    %c0_67 = arith.constant 0 : index
    %c0_68 = arith.constant 0 : index
    %178 = vector.load %arg11[%c0_67, %c0_68] : memref<64x128xf32, #tpu.memory_space<vmem>>, vector<64x128xf32>
    %c0_69 = arith.constant 0 : index
    %c0_70 = arith.constant 0 : index
    %179 = vector.load %arg4[%c0_69, %c0_70] : memref<128x256xf32, #tpu.memory_space<vmem>>, vector<128x256xf32>
    %cst_71 = arith.constant dense<0.000000e+00> : vector<64x256xf32>
    %180 = tpu.matmul %178, %179, %cst_71 {dimension_numbers = #tpu.dot_dimension_numbers<[1], [0], [0], [1], [0, 0, 1, 1], [], []>} : vector<64x128xf32>, vector<128x256xf32>, vector<64x256xf32> -> vector<64x256xf32>
    %c0_72 = arith.constant 0 : index
    %c0_73 = arith.constant 0 : index
    %181 = vector.load %arg6[%c0_72, %c0_73] : memref<1x256xf32, #tpu.memory_space<vmem>>, vector<1x256xf32>
    %182 = vector.broadcast %181 : vector<1x256xf32> to vector<64x256xf32>
    %183 = arith.addf %180, %182 : vector<64x256xf32>
    %c0_74 = arith.constant 0 : index
    %c0_75 = arith.constant 0 : index
    %184 = vector.load %arg10[%c0_74, %c0_75] : memref<64x256xf32, #tpu.memory_space<vmem>>, vector<64x256xf32>
    tpu.vector_store %arg10[%c0_74, %c0_75], %183 {strides = array<i32>} : memref<64x256xf32, #tpu.memory_space<vmem>>, vector<64x256xf32>,
    %c0_76 = arith.constant 0 : index
    %c0_77 = arith.constant 0 : index
    %185 = vector.load %arg5[%c0_76, %c0_77] : memref<64x256xf32, #tpu.memory_space<vmem>>, vector<64x256xf32>
    %cst_78 = arith.constant 0.000000e+00 : f32
    %186 = vector.broadcast %cst_78 : f32 to vector<8x64xf32>
    %cst_79 = arith.constant 0.000000e+00 : f32
    %187 = vector.broadcast %cst_79 : f32 to vector<8x64xf32>
    %c0_80 = arith.constant 0 : index
    %c0_81 = arith.constant 0 : index
    %188 = vector.load %arg10[%c0_80, %c0_81] : memref<64x256xf32, #tpu.memory_space<vmem>>, vector<8x256xf32>
    %cst_82 = arith.constant dense<0.000000e+00> : vector<8x256xf32>
    %189 = tpu.matmul %186, %185, %cst_82 {dimension_numbers = #tpu.dot_dimension_numbers<[1], [0], [0], [1], [0, 0, 1, 1], [], []>} : vector<8x64xf32>, vector<64x256xf32>, vector<8x256xf32> -> vector<8x256xf32>
    %190 = arith.addf %188, %189 : vector<8x256xf32>
    %191 = vector.extract_strided_slice %190 {offsets = [0, 0], sizes = [8, 192], strides = [1, 1]} : vector<8x256xf32> to vector<8x192xf32>
    %192 = arith.negf %191 : vector<8x192xf32>
    %193 = math.exp %192 : vector<8x192xf32>
    %cst_83 = arith.constant 1.000000e+00 : f32
    %194 = vector.broadcast %cst_83 : f32 to vector<8x192xf32>
    %195 = arith.addf %194, %193 : vector<8x192xf32>
    %196 = arith.divf %194, %195 : vector<8x192xf32>
    %197 = vector.extract_strided_slice %190 {offsets = [0, 192], sizes = [8, 64], strides = [1, 1]} : vector<8x256xf32> to vector<8x64xf32>
    %198 = math.tanh %197 : vector<8x64xf32>
    %199 = vector.extract_strided_slice %196 {offsets = [0, 0], sizes = [8, 64], strides = [1, 1]} : vector<8x192xf32> to vector<8x64xf32>
    %200 = vector.extract_strided_slice %196 {offsets = [0, 64], sizes = [8, 64], strides = [1, 1]} : vector<8x192xf32> to vector<8x64xf32>
    %201 = vector.extract_strided_slice %196 {offsets = [0, 128], sizes = [8, 64], strides = [1, 1]} : vector<8x192xf32> to vector<8x64xf32>
    %202 = arith.mulf %200, %187 : vector<8x64xf32>
    %203 = arith.mulf %199, %198 : vector<8x64xf32>
    %204 = arith.addf %202, %203 : vector<8x64xf32>
    %205 = math.tanh %204 : vector<8x64xf32>
    %206 = arith.mulf %201, %205 : vector<8x64xf32>
    %c0_84 = arith.constant 0 : index
    %c0_85 = arith.constant 0 : index
    %207 = vector.load %arg11[%c0_84, %c0_85] : memref<64x128xf32, #tpu.memory_space<vmem>>, vector<8x64xf32>
    tpu.vector_store %arg11[%c0_84, %c0_85], %206 {strides = array<i32>} : memref<64x128xf32, #tpu.memory_space<vmem>>, vector<8x64xf32>,
    %c56_86 = arith.constant 56 : index
    %c64_87 = arith.constant 64 : index
    %208 = vector.load %arg11[%c56_86, %c64_87] : memref<64x128xf32, #tpu.memory_space<vmem>>, vector<8x64xf32>
    tpu.vector_store %arg11[%c56_86, %c64_87], %206 {strides = array<i32>} : memref<64x128xf32, #tpu.memory_space<vmem>>, vector<8x64xf32>,
    %c8_88 = arith.constant 8 : index
    %c0_89 = arith.constant 0 : index
    %209 = vector.load %arg10[%c8_88, %c0_89] : memref<64x256xf32, #tpu.memory_space<vmem>>, vector<8x256xf32>
    %cst_90 = arith.constant dense<0.000000e+00> : vector<8x256xf32>
    %210 = tpu.matmul %206, %185, %cst_90 {dimension_numbers = #tpu.dot_dimension_numbers<[1], [0], [0], [1], [0, 0, 1, 1], [], []>} : vector<8x64xf32>, vector<64x256xf32>, vector<8x256xf32> -> vector<8x256xf32>
    %211 = arith.addf %209, %210 : vector<8x256xf32>
    %212 = vector.extract_strided_slice %211 {offsets = [0, 0], sizes = [8, 192], strides = [1, 1]} : vector<8x256xf32> to vector<8x192xf32>
    %213 = arith.negf %212 : vector<8x192xf32>
    %214 = math.exp %213 : vector<8x192xf32>
    %cst_91 = arith.constant 1.000000e+00 : f32
    %215 = vector.broadcast %cst_91 : f32 to vector<8x192xf32>
    %216 = arith.addf %215, %214 : vector<8x192xf32>
    %217 = arith.divf %215, %216 : vector<8x192xf32>
    %218 = vector.extract_strided_slice %211 {offsets = [0, 192], sizes = [8, 64], strides = [1, 1]} : vector<8x256xf32> to vector<8x64xf32>
    %219 = math.tanh %218 : vector<8x64xf32>
    %220 = vector.extract_strided_slice %217 {offsets = [0, 0], sizes = [8, 64], strides = [1, 1]} : vector<8x192xf32> to vector<8x64xf32>
    %221 = vector.extract_strided_slice %217 {offsets = [0, 64], sizes = [8, 64], strides = [1, 1]} : vector<8x192xf32> to vector<8x64xf32>
    %222 = vector.extract_strided_slice %217 {offsets = [0, 128], sizes = [8, 64], strides = [1, 1]} : vector<8x192xf32> to vector<8x64xf32>
    %223 = arith.mulf %221, %204 : vector<8x64xf32>
    %224 = arith.mulf %220, %219 : vector<8x64xf32>
    %225 = arith.addf %223, %224 : vector<8x64xf32>
    %226 = math.tanh %225 : vector<8x64xf32>
    %227 = arith.mulf %222, %226 : vector<8x64xf32>
    %c8_92 = arith.constant 8 : index
    %c0_93 = arith.constant 0 : index
    %228 = vector.load %arg11[%c8_92, %c0_93] : memref<64x128xf32, #tpu.memory_space<vmem>>, vector<8x64xf32>
    tpu.vector_store %arg11[%c8_92, %c0_93], %227 {strides = array<i32>} : memref<64x128xf32, #tpu.memory_space<vmem>>, vector<8x64xf32>,
    %c48_94 = arith.constant 48 : index
    %c64_95 = arith.constant 64 : index
    %229 = vector.load %arg11[%c48_94, %c64_95] : memref<64x128xf32, #tpu.memory_space<vmem>>, vector<8x64xf32>
    tpu.vector_store %arg11[%c48_94, %c64_95], %227 {strides = array<i32>} : memref<64x128xf32, #tpu.memory_space<vmem>>, vector<8x64xf32>,
    %c16_96 = arith.constant 16 : index
    %c0_97 = arith.constant 0 : index
    %230 = vector.load %arg10[%c16_96, %c0_97] : memref<64x256xf32, #tpu.memory_space<vmem>>, vector<8x256xf32>
    %cst_98 = arith.constant dense<0.000000e+00> : vector<8x256xf32>
    %231 = tpu.matmul %227, %185, %cst_98 {dimension_numbers = #tpu.dot_dimension_numbers<[1], [0], [0], [1], [0, 0, 1, 1], [], []>} : vector<8x64xf32>, vector<64x256xf32>, vector<8x256xf32> -> vector<8x256xf32>
    %232 = arith.addf %230, %231 : vector<8x256xf32>
    %233 = vector.extract_strided_slice %232 {offsets = [0, 0], sizes = [8, 192], strides = [1, 1]} : vector<8x256xf32> to vector<8x192xf32>
    %234 = arith.negf %233 : vector<8x192xf32>
    %235 = math.exp %234 : vector<8x192xf32>
    %cst_99 = arith.constant 1.000000e+00 : f32
    %236 = vector.broadcast %cst_99 : f32 to vector<8x192xf32>
    %237 = arith.addf %236, %235 : vector<8x192xf32>
    %238 = arith.divf %236, %237 : vector<8x192xf32>
    %239 = vector.extract_strided_slice %232 {offsets = [0, 192], sizes = [8, 64], strides = [1, 1]} : vector<8x256xf32> to vector<8x64xf32>
    %240 = math.tanh %239 : vector<8x64xf32>
    %241 = vector.extract_strided_slice %238 {offsets = [0, 0], sizes = [8, 64], strides = [1, 1]} : vector<8x192xf32> to vector<8x64xf32>
    %242 = vector.extract_strided_slice %238 {offsets = [0, 64], sizes = [8, 64], strides = [1, 1]} : vector<8x192xf32> to vector<8x64xf32>
    %243 = vector.extract_strided_slice %238 {offsets = [0, 128], sizes = [8, 64], strides = [1, 1]} : vector<8x192xf32> to vector<8x64xf32>
    %244 = arith.mulf %242, %225 : vector<8x64xf32>
    %245 = arith.mulf %241, %240 : vector<8x64xf32>
    %246 = arith.addf %244, %245 : vector<8x64xf32>
    %247 = math.tanh %246 : vector<8x64xf32>
    %248 = arith.mulf %243, %247 : vector<8x64xf32>
    %c16_100 = arith.constant 16 : index
    %c0_101 = arith.constant 0 : index
    %249 = vector.load %arg11[%c16_100, %c0_101] : memref<64x128xf32, #tpu.memory_space<vmem>>, vector<8x64xf32>
    tpu.vector_store %arg11[%c16_100, %c0_101], %248 {strides = array<i32>} : memref<64x128xf32, #tpu.memory_space<vmem>>, vector<8x64xf32>,
    %c40_102 = arith.constant 40 : index
    %c64_103 = arith.constant 64 : index
    %250 = vector.load %arg11[%c40_102, %c64_103] : memref<64x128xf32, #tpu.memory_space<vmem>>, vector<8x64xf32>
    tpu.vector_store %arg11[%c40_102, %c64_103], %248 {strides = array<i32>} : memref<64x128xf32, #tpu.memory_space<vmem>>, vector<8x64xf32>,
    %c24_104 = arith.constant 24 : index
    %c0_105 = arith.constant 0 : index
    %251 = vector.load %arg10[%c24_104, %c0_105] : memref<64x256xf32, #tpu.memory_space<vmem>>, vector<8x256xf32>
    %cst_106 = arith.constant dense<0.000000e+00> : vector<8x256xf32>
    %252 = tpu.matmul %248, %185, %cst_106 {dimension_numbers = #tpu.dot_dimension_numbers<[1], [0], [0], [1], [0, 0, 1, 1], [], []>} : vector<8x64xf32>, vector<64x256xf32>, vector<8x256xf32> -> vector<8x256xf32>
    %253 = arith.addf %251, %252 : vector<8x256xf32>
    %254 = vector.extract_strided_slice %253 {offsets = [0, 0], sizes = [8, 192], strides = [1, 1]} : vector<8x256xf32> to vector<8x192xf32>
    %255 = arith.negf %254 : vector<8x192xf32>
    %256 = math.exp %255 : vector<8x192xf32>
    %cst_107 = arith.constant 1.000000e+00 : f32
    %257 = vector.broadcast %cst_107 : f32 to vector<8x192xf32>
    %258 = arith.addf %257, %256 : vector<8x192xf32>
    %259 = arith.divf %257, %258 : vector<8x192xf32>
    %260 = vector.extract_strided_slice %253 {offsets = [0, 192], sizes = [8, 64], strides = [1, 1]} : vector<8x256xf32> to vector<8x64xf32>
    %261 = math.tanh %260 : vector<8x64xf32>
    %262 = vector.extract_strided_slice %259 {offsets = [0, 0], sizes = [8, 64], strides = [1, 1]} : vector<8x192xf32> to vector<8x64xf32>
    %263 = vector.extract_strided_slice %259 {offsets = [0, 64], sizes = [8, 64], strides = [1, 1]} : vector<8x192xf32> to vector<8x64xf32>
    %264 = vector.extract_strided_slice %259 {offsets = [0, 128], sizes = [8, 64], strides = [1, 1]} : vector<8x192xf32> to vector<8x64xf32>
    %265 = arith.mulf %263, %246 : vector<8x64xf32>
    %266 = arith.mulf %262, %261 : vector<8x64xf32>
    %267 = arith.addf %265, %266 : vector<8x64xf32>
    %268 = math.tanh %267 : vector<8x64xf32>
    %269 = arith.mulf %264, %268 : vector<8x64xf32>
    %c24_108 = arith.constant 24 : index
    %c0_109 = arith.constant 0 : index
    %270 = vector.load %arg11[%c24_108, %c0_109] : memref<64x128xf32, #tpu.memory_space<vmem>>, vector<8x64xf32>
    tpu.vector_store %arg11[%c24_108, %c0_109], %269 {strides = array<i32>} : memref<64x128xf32, #tpu.memory_space<vmem>>, vector<8x64xf32>,
    %c32_110 = arith.constant 32 : index
    %c64_111 = arith.constant 64 : index
    %271 = vector.load %arg11[%c32_110, %c64_111] : memref<64x128xf32, #tpu.memory_space<vmem>>, vector<8x64xf32>
    tpu.vector_store %arg11[%c32_110, %c64_111], %269 {strides = array<i32>} : memref<64x128xf32, #tpu.memory_space<vmem>>, vector<8x64xf32>,
    %c32_112 = arith.constant 32 : index
    %c0_113 = arith.constant 0 : index
    %272 = vector.load %arg10[%c32_112, %c0_113] : memref<64x256xf32, #tpu.memory_space<vmem>>, vector<8x256xf32>
    %cst_114 = arith.constant dense<0.000000e+00> : vector<8x256xf32>
    %273 = tpu.matmul %269, %185, %cst_114 {dimension_numbers = #tpu.dot_dimension_numbers<[1], [0], [0], [1], [0, 0, 1, 1], [], []>} : vector<8x64xf32>, vector<64x256xf32>, vector<8x256xf32> -> vector<8x256xf32>
    %274 = arith.addf %272, %273 : vector<8x256xf32>
    %275 = vector.extract_strided_slice %274 {offsets = [0, 0], sizes = [8, 192], strides = [1, 1]} : vector<8x256xf32> to vector<8x192xf32>
    %276 = arith.negf %275 : vector<8x192xf32>
    %277 = math.exp %276 : vector<8x192xf32>
    %cst_115 = arith.constant 1.000000e+00 : f32
    %278 = vector.broadcast %cst_115 : f32 to vector<8x192xf32>
    %279 = arith.addf %278, %277 : vector<8x192xf32>
    %280 = arith.divf %278, %279 : vector<8x192xf32>
    %281 = vector.extract_strided_slice %274 {offsets = [0, 192], sizes = [8, 64], strides = [1, 1]} : vector<8x256xf32> to vector<8x64xf32>
    %282 = math.tanh %281 : vector<8x64xf32>
    %283 = vector.extract_strided_slice %280 {offsets = [0, 0], sizes = [8, 64], strides = [1, 1]} : vector<8x192xf32> to vector<8x64xf32>
    %284 = vector.extract_strided_slice %280 {offsets = [0, 64], sizes = [8, 64], strides = [1, 1]} : vector<8x192xf32> to vector<8x64xf32>
    %285 = vector.extract_strided_slice %280 {offsets = [0, 128], sizes = [8, 64], strides = [1, 1]} : vector<8x192xf32> to vector<8x64xf32>
    %286 = arith.mulf %284, %267 : vector<8x64xf32>
    %287 = arith.mulf %283, %282 : vector<8x64xf32>
    %288 = arith.addf %286, %287 : vector<8x64xf32>
    %289 = math.tanh %288 : vector<8x64xf32>
    %290 = arith.mulf %285, %289 : vector<8x64xf32>
    %c32_116 = arith.constant 32 : index
    %c0_117 = arith.constant 0 : index
    %291 = vector.load %arg11[%c32_116, %c0_117] : memref<64x128xf32, #tpu.memory_space<vmem>>, vector<8x64xf32>
    tpu.vector_store %arg11[%c32_116, %c0_117], %290 {strides = array<i32>} : memref<64x128xf32, #tpu.memory_space<vmem>>, vector<8x64xf32>,
    %c24_118 = arith.constant 24 : index
    %c64_119 = arith.constant 64 : index
    %292 = vector.load %arg11[%c24_118, %c64_119] : memref<64x128xf32, #tpu.memory_space<vmem>>, vector<8x64xf32>
    tpu.vector_store %arg11[%c24_118, %c64_119], %290 {strides = array<i32>} : memref<64x128xf32, #tpu.memory_space<vmem>>, vector<8x64xf32>,
    %c40_120 = arith.constant 40 : index
    %c0_121 = arith.constant 0 : index
    %293 = vector.load %arg10[%c40_120, %c0_121] : memref<64x256xf32, #tpu.memory_space<vmem>>, vector<8x256xf32>
    %cst_122 = arith.constant dense<0.000000e+00> : vector<8x256xf32>
    %294 = tpu.matmul %290, %185, %cst_122 {dimension_numbers = #tpu.dot_dimension_numbers<[1], [0], [0], [1], [0, 0, 1, 1], [], []>} : vector<8x64xf32>, vector<64x256xf32>, vector<8x256xf32> -> vector<8x256xf32>
    %295 = arith.addf %293, %294 : vector<8x256xf32>
    %296 = vector.extract_strided_slice %295 {offsets = [0, 0], sizes = [8, 192], strides = [1, 1]} : vector<8x256xf32> to vector<8x192xf32>
    %297 = arith.negf %296 : vector<8x192xf32>
    %298 = math.exp %297 : vector<8x192xf32>
    %cst_123 = arith.constant 1.000000e+00 : f32
    %299 = vector.broadcast %cst_123 : f32 to vector<8x192xf32>
    %300 = arith.addf %299, %298 : vector<8x192xf32>
    %301 = arith.divf %299, %300 : vector<8x192xf32>
    %302 = vector.extract_strided_slice %295 {offsets = [0, 192], sizes = [8, 64], strides = [1, 1]} : vector<8x256xf32> to vector<8x64xf32>
    %303 = math.tanh %302 : vector<8x64xf32>
    %304 = vector.extract_strided_slice %301 {offsets = [0, 0], sizes = [8, 64], strides = [1, 1]} : vector<8x192xf32> to vector<8x64xf32>
    %305 = vector.extract_strided_slice %301 {offsets = [0, 64], sizes = [8, 64], strides = [1, 1]} : vector<8x192xf32> to vector<8x64xf32>
    %306 = vector.extract_strided_slice %301 {offsets = [0, 128], sizes = [8, 64], strides = [1, 1]} : vector<8x192xf32> to vector<8x64xf32>
    %307 = arith.mulf %305, %288 : vector<8x64xf32>
    %308 = arith.mulf %304, %303 : vector<8x64xf32>
    %309 = arith.addf %307, %308 : vector<8x64xf32>
    %310 = math.tanh %309 : vector<8x64xf32>
    %311 = arith.mulf %306, %310 : vector<8x64xf32>
    %c40_124 = arith.constant 40 : index
    %c0_125 = arith.constant 0 : index
    %312 = vector.load %arg11[%c40_124, %c0_125] : memref<64x128xf32, #tpu.memory_space<vmem>>, vector<8x64xf32>
    tpu.vector_store %arg11[%c40_124, %c0_125], %311 {strides = array<i32>} : memref<64x128xf32, #tpu.memory_space<vmem>>, vector<8x64xf32>,
    %c16_126 = arith.constant 16 : index
    %c64_127 = arith.constant 64 : index
    %313 = vector.load %arg11[%c16_126, %c64_127] : memref<64x128xf32, #tpu.memory_space<vmem>>, vector<8x64xf32>
    tpu.vector_store %arg11[%c16_126, %c64_127], %311 {strides = array<i32>} : memref<64x128xf32, #tpu.memory_space<vmem>>, vector<8x64xf32>,
    %c48_128 = arith.constant 48 : index
    %c0_129 = arith.constant 0 : index
    %314 = vector.load %arg10[%c48_128, %c0_129] : memref<64x256xf32, #tpu.memory_space<vmem>>, vector<8x256xf32>
    %cst_130 = arith.constant dense<0.000000e+00> : vector<8x256xf32>
    %315 = tpu.matmul %311, %185, %cst_130 {dimension_numbers = #tpu.dot_dimension_numbers<[1], [0], [0], [1], [0, 0, 1, 1], [], []>} : vector<8x64xf32>, vector<64x256xf32>, vector<8x256xf32> -> vector<8x256xf32>
    %316 = arith.addf %314, %315 : vector<8x256xf32>
    %317 = vector.extract_strided_slice %316 {offsets = [0, 0], sizes = [8, 192], strides = [1, 1]} : vector<8x256xf32> to vector<8x192xf32>
    %318 = arith.negf %317 : vector<8x192xf32>
    %319 = math.exp %318 : vector<8x192xf32>
    %cst_131 = arith.constant 1.000000e+00 : f32
    %320 = vector.broadcast %cst_131 : f32 to vector<8x192xf32>
    %321 = arith.addf %320, %319 : vector<8x192xf32>
    %322 = arith.divf %320, %321 : vector<8x192xf32>
    %323 = vector.extract_strided_slice %316 {offsets = [0, 192], sizes = [8, 64], strides = [1, 1]} : vector<8x256xf32> to vector<8x64xf32>
    %324 = math.tanh %323 : vector<8x64xf32>
    %325 = vector.extract_strided_slice %322 {offsets = [0, 0], sizes = [8, 64], strides = [1, 1]} : vector<8x192xf32> to vector<8x64xf32>
    %326 = vector.extract_strided_slice %322 {offsets = [0, 64], sizes = [8, 64], strides = [1, 1]} : vector<8x192xf32> to vector<8x64xf32>
    %327 = vector.extract_strided_slice %322 {offsets = [0, 128], sizes = [8, 64], strides = [1, 1]} : vector<8x192xf32> to vector<8x64xf32>
    %328 = arith.mulf %326, %309 : vector<8x64xf32>
    %329 = arith.mulf %325, %324 : vector<8x64xf32>
    %330 = arith.addf %328, %329 : vector<8x64xf32>
    %331 = math.tanh %330 : vector<8x64xf32>
    %332 = arith.mulf %327, %331 : vector<8x64xf32>
    %c48_132 = arith.constant 48 : index
    %c0_133 = arith.constant 0 : index
    %333 = vector.load %arg11[%c48_132, %c0_133] : memref<64x128xf32, #tpu.memory_space<vmem>>, vector<8x64xf32>
    tpu.vector_store %arg11[%c48_132, %c0_133], %332 {strides = array<i32>} : memref<64x128xf32, #tpu.memory_space<vmem>>, vector<8x64xf32>,
    %c8_134 = arith.constant 8 : index
    %c64_135 = arith.constant 64 : index
    %334 = vector.load %arg11[%c8_134, %c64_135] : memref<64x128xf32, #tpu.memory_space<vmem>>, vector<8x64xf32>
    tpu.vector_store %arg11[%c8_134, %c64_135], %332 {strides = array<i32>} : memref<64x128xf32, #tpu.memory_space<vmem>>, vector<8x64xf32>,
    %c56_136 = arith.constant 56 : index
    %c0_137 = arith.constant 0 : index
    %335 = vector.load %arg10[%c56_136, %c0_137] : memref<64x256xf32, #tpu.memory_space<vmem>>, vector<8x256xf32>
    %cst_138 = arith.constant dense<0.000000e+00> : vector<8x256xf32>
    %336 = tpu.matmul %332, %185, %cst_138 {dimension_numbers = #tpu.dot_dimension_numbers<[1], [0], [0], [1], [0, 0, 1, 1], [], []>} : vector<8x64xf32>, vector<64x256xf32>, vector<8x256xf32> -> vector<8x256xf32>
    %337 = arith.addf %335, %336 : vector<8x256xf32>
    %338 = vector.extract_strided_slice %337 {offsets = [0, 0], sizes = [8, 192], strides = [1, 1]} : vector<8x256xf32> to vector<8x192xf32>
    %339 = arith.negf %338 : vector<8x192xf32>
    %340 = math.exp %339 : vector<8x192xf32>
    %cst_139 = arith.constant 1.000000e+00 : f32
    %341 = vector.broadcast %cst_139 : f32 to vector<8x192xf32>
    %342 = arith.addf %341, %340 : vector<8x192xf32>
    %343 = arith.divf %341, %342 : vector<8x192xf32>
    %344 = vector.extract_strided_slice %337 {offsets = [0, 192], sizes = [8, 64], strides = [1, 1]} : vector<8x256xf32> to vector<8x64xf32>
    %345 = math.tanh %344 : vector<8x64xf32>
    %346 = vector.extract_strided_slice %343 {offsets = [0, 0], sizes = [8, 64], strides = [1, 1]} : vector<8x192xf32> to vector<8x64xf32>
    %347 = vector.extract_strided_slice %343 {offsets = [0, 64], sizes = [8, 64], strides = [1, 1]} : vector<8x192xf32> to vector<8x64xf32>
    %348 = vector.extract_strided_slice %343 {offsets = [0, 128], sizes = [8, 64], strides = [1, 1]} : vector<8x192xf32> to vector<8x64xf32>
    %349 = arith.mulf %347, %330 : vector<8x64xf32>
    %350 = arith.mulf %346, %345 : vector<8x64xf32>
    %351 = arith.addf %349, %350 : vector<8x64xf32>
    %352 = math.tanh %351 : vector<8x64xf32>
    %353 = arith.mulf %348, %352 : vector<8x64xf32>
    %c56_140 = arith.constant 56 : index
    %c0_141 = arith.constant 0 : index
    %354 = vector.load %arg11[%c56_140, %c0_141] : memref<64x128xf32, #tpu.memory_space<vmem>>, vector<8x64xf32>
    tpu.vector_store %arg11[%c56_140, %c0_141], %353 {strides = array<i32>} : memref<64x128xf32, #tpu.memory_space<vmem>>, vector<8x64xf32>,
    %c0_142 = arith.constant 0 : index
    %c64_143 = arith.constant 64 : index
    %355 = vector.load %arg11[%c0_142, %c64_143] : memref<64x128xf32, #tpu.memory_space<vmem>>, vector<8x64xf32>
    tpu.vector_store %arg11[%c0_142, %c64_143], %353 {strides = array<i32>} : memref<64x128xf32, #tpu.memory_space<vmem>>, vector<8x64xf32>,
    %c56_144 = arith.constant 56 : index
    %c0_145 = arith.constant 0 : index
    %356 = vector.load %arg11[%c56_144, %c0_145] : memref<64x128xf32, #tpu.memory_space<vmem>>, vector<8x128xf32>
    %c0_146 = arith.constant 0 : index
    %c0_147 = arith.constant 0 : index
    %357 = vector.load %arg7[%c0_146, %c0_147] : memref<128x1xf32, #tpu.memory_space<vmem>>, vector<128x1xf32>
    %cst_148 = arith.constant dense<0.000000e+00> : vector<8x1xf32>
    %358 = tpu.matmul %356, %357, %cst_148 {dimension_numbers = #tpu.dot_dimension_numbers<[1], [0], [0], [1], [0, 0, 1, 1], [], []>} : vector<8x128xf32>, vector<128x1xf32>, vector<8x1xf32> -> vector<8x1xf32>
    %c0_149 = arith.constant 0 : index
    %c0_150 = arith.constant 0 : index
    %359 = vector.load %arg8[%c0_149, %c0_150] : memref<1x1xf32, #tpu.memory_space<vmem>>, vector<1x1xf32>
    %360 = vector.broadcast %359 : vector<1x1xf32> to vector<8x1xf32>
    %361 = arith.addf %358, %360 : vector<8x1xf32>
    %c0_151 = arith.constant 0 : index
    %c0_152 = arith.constant 0 : index
    %362 = vector.load %arg9[%c0_151, %c0_152] : memref<8x1xf32, #tpu.memory_space<vmem>>, vector<8x1xf32>
    tpu.vector_store %arg9[%c0_151, %c0_152], %361 {strides = array<i32>} : memref<8x1xf32, #tpu.memory_space<vmem>>, vector<8x1xf32>,
    return
  }
}

</mosaic_0001>

<llo_original>
// kernel: lstm_classifier_forward.1
$region0: #{lstm_classifier_forward.1}
  #allocation0 [shape = 'u32[]', space=smem, size = 0x4, offset = 0x4, fixed_abs, tag = 'smem constant byte address 0x4 - core index']
  #allocation1 [shape = 'u32[144,128]{1,0:T(1,128)}', space=vmem, size = 0x12000, scoped, tag = 'internal scratch']
  #allocation2 [shape = 'f32[64,256]{1,0:T(8,128)}', space=vmem, size = 0x10000, scoped, tag = 'scratch operand']
  #allocation3 [shape = 'f32[64,128]{1,0:T(8,128)}', space=vmem, size = 0x8000, scoped, tag = 'scratch operand']
  #allocation4 [shape = 'f32[1,1]{1,0:T(1,128)S(1)}', space=vmem, size = 0x200, scoped, tag = 'scoped memory for lstm_classifier_forward.1']
  %s0 = inlined_call_operand.vmem [shape: f32[64,2], index: 0, kind: input, shape index: {}]
  %s1 = inlined_call_operand.vmem [shape: f32[2,256], index: 1, kind: input, shape index: {}]
  %s2 = inlined_call_operand.hbm [shape: f32[64,256], index: 2, kind: input, shape index: {}]
  %s3 = inlined_call_operand.vmem [shape: f32[1,256], index: 3, kind: input, shape index: {}]
  %s4 = inlined_call_operand.vmem [shape: f32[128,256], index: 4, kind: input, shape index: {}]
  %s5 = inlined_call_operand.hbm [shape: f32[64,256], index: 5, kind: input, shape index: {}]
  %s6 = inlined_call_operand.vmem [shape: f32[1,256], index: 6, kind: input, shape index: {}]
  %s7 = inlined_call_operand.vmem [shape: f32[128,1], index: 7, kind: input, shape index: {}]
  %s8 = inlined_call_operand.<no memory space> [shape: f32[1,1], index: 8, kind: input, shape index: {}]
  %s9 = inlined_call_operand.vmem [shape: f32[8,1], index: 9, kind: output, shape index: {}]
  %s10 = sld [smem:[#allocation0]]
  $region54: #{lstm_classifier_forward.1} parent=0
    _
  %s12 = ssub.s32 1, %s10
  %s13 = scalar_select 0, %s12, %s10
  %v14 = vstv %s8
  %15 = vst [vmem:[#allocation4] sm:$0x1] %v14
  $region1: #{lstm_classifier_forward.1} parent=0
    #allocation5 [shape = 'u8[65536]{0}', space=vmem, size = 0x10000, scoped, tag = 'input window, operand 2, single buffered']
    #allocation6 [shape = 's32[1]{0}', space=sflag, size = 0x4, scoped, tag = 'scoped memory for lstm_classifier_forward.1']
    #allocation7 [shape = 'u8[65536]{0}', space=vmem, size = 0x10000, scoped, tag = 'input window, operand 5, single buffered']
    #allocation8 [shape = 's32[1]{0}', space=sflag, size = 0x4, scoped, tag = 'scoped memory for lstm_classifier_forward.1']
    %16 = vsyncpa [#allocation6], 0
    %17 = vsyncpa [#allocation8], 0
    // Predicated region
    $region2: #{lstm_classifier_forward.1} parent=1 // pred_check
      _
    $region3: #{lstm_classifier_forward.1} parent=1 // pred_check_branch
      %19 = sbr.rel (0) target = $region5
    $region4: #{lstm_classifier_forward.1} parent=1 // pred_region
      _
    $region5: #{lstm_classifier_forward.1} parent=1 // pred_fallthru
      _
    // Predicated region
    $region6: #{lstm_classifier_forward.1} parent=1 // pred_check
      _
    $region7: #{lstm_classifier_forward.1} parent=1 // pred_check_branch
      %21 = sbr.rel (0) target = $region9
    $region8: #{lstm_classifier_forward.1} parent=1 // pred_region
      _
    $region9: #{lstm_classifier_forward.1} parent=1 // pred_fallthru
      _
    // Predicated region
    $region10: #{lstm_classifier_forward.1} parent=1 // pred_check
      _
    $region11: #{lstm_classifier_forward.1} parent=1 // pred_check_branch
      %23 = sbr.rel (0) target = $region13
    $region12: #{lstm_classifier_forward.1} parent=1 // pred_region
      %s25 = ssub.s32 2048, 2048
      %26 = vsyncadd [#allocation6], %s25
      %s27 = sshll.u32 [#allocation5], 4
      %s28 = int_to_ptr.vmem [resolvable:$true] %s27
      %33 = dma.hbm_to_vmem [thread:$0]  %s2, 2048, %s28, [#allocation6], 256, 256, 16
    $region13: #{lstm_classifier_forward.1} parent=1 // pred_fallthru
      _
    // Predicated region
    $region14: #{lstm_classifier_forward.1} parent=1 // pred_check
      _
    $region15: #{lstm_classifier_forward.1} parent=1 // pred_check_branch
      %35 = sbr.rel (0) target = $region17
    $region16: #{lstm_classifier_forward.1} parent=1 // pred_region
      _
    $region17: #{lstm_classifier_forward.1} parent=1 // pred_fallthru
      _
    // Predicated region
    $region18: #{lstm_classifier_forward.1} parent=1 // pred_check
      _
    $region19: #{lstm_classifier_forward.1} parent=1 // pred_check_branch
      %37 = sbr.rel (0) target = $region21
    $region20: #{lstm_classifier_forward.1} parent=1 // pred_region
      _
    $region21: #{lstm_classifier_forward.1} parent=1 // pred_fallthru
      _
    // Predicated region
    $region22: #{lstm_classifier_forward.1} parent=1 // pred_check
      _
    $region23: #{lstm_classifier_forward.1} parent=1 // pred_check_branch
      %39 = sbr.rel (0) target = $region25
    $region24: #{lstm_classifier_forward.1} parent=1 // pred_region
      %s41 = ssub.s32 2048, 2048
      %42 = vsyncadd [#allocation8], %s41
      %s43 = sshll.u32 [#allocation7], 4
      %s44 = int_to_ptr.vmem [resolvable:$true] %s43
      %49 = dma.hbm_to_vmem [thread:$0]  %s5, 2048, %s44, [#allocation8], 256, 256, 16
    $region25: #{lstm_classifier_forward.1} parent=1 // pred_fallthru
      _
    // Predicated region
    $region26: #{lstm_classifier_forward.1} parent=1 // pred_check
      _
    $region27: #{lstm_classifier_forward.1} parent=1 // pred_check_branch
      %51 = sbr.rel (0) target = $region29
    $region28: #{lstm_classifier_forward.1} parent=1 // pred_region
      _
    $region29: #{lstm_classifier_forward.1} parent=1 // pred_fallthru
      _
    // Predicated region
    $region30: #{lstm_classifier_forward.1} parent=1 // pred_check
      _
    $region31: #{lstm_classifier_forward.1} parent=1 // pred_check_branch
      %53 = sbr.rel (0) target = $region33
    $region32: #{lstm_classifier_forward.1} parent=1 // pred_region
      _
    $region33: #{lstm_classifier_forward.1} parent=1 // pred_fallthru
      _
    // Predicated region
    $region34: #{lstm_classifier_forward.1} parent=1 // pred_check
      _
    $region35: #{lstm_classifier_forward.1} parent=1 // pred_check_branch
      %55 = sbr.rel (0) target = $region37
    $region36: #{lstm_classifier_forward.1} parent=1 // pred_region
      _
    $region37: #{lstm_classifier_forward.1} parent=1 // pred_fallthru
      _
    // Predicated region
    $region38: #{lstm_classifier_forward.1} parent=1 // pred_check
      _
    $region39: #{lstm_classifier_forward.1} parent=1 // pred_check_branch
      %57 = sbr.rel (0) target = $region41
    $region40: #{lstm_classifier_forward.1} parent=1 // pred_region
      %58 = dma.done [#allocation6], 2048
    $region41: #{lstm_classifier_forward.1} parent=1 // pred_fallthru
      _
    // Predicated region
    $region42: #{lstm_classifier_forward.1} parent=1 // pred_check
      _
    $region43: #{lstm_classifier_forward.1} parent=1 // pred_check_branch
      %60 = sbr.rel (0) target = $region45
    $region44: #{lstm_classifier_forward.1} parent=1 // pred_region
      %61 = dma.done [#allocation8], 2048
    $region45: #{lstm_classifier_forward.1} parent=1 // pred_fallthru
      _
    %v62 = vld [vmem:[%s0] sm:$0xff]
    %v63 = vld [vmem:[%s0 + $0x8] sm:$0xff]
    %v64 = vld [vmem:[%s0 + $0x10] sm:$0xff]
    %v65 = vld [vmem:[%s0 + $0x18] sm:$0xff]
    %v66 = vld [vmem:[%s0 + $0x20] sm:$0xff]
    %v67 = vld [vmem:[%s0 + $0x28] sm:$0xff]
    %v68 = vld [vmem:[%s0 + $0x30] sm:$0xff]
    %v69 = vld [vmem:[%s0 + $0x38] sm:$0xff]
    %v70 = vld [vmem:[%s1] sm:$0xf]
    %v71 = vld [vmem:[%s3] sm:$0x3]
    %v73 = vlaneseq
    %v74 = vshrl.u32 %v73, 7
    %v75 = vsub.s32 0, %v74
    %v76 = vrot.slane %v71, %v75
    %v77 = vlaneseq
    %v78 = vshrl.u32 %v77, 7
    %v79 = vsub.s32 1, %v78
    %v80 = vrot.slane %v71, %v79
    %v85 = vunpack.c.l.s4 1983009808
    %v86 = vunpack.c.0.s8 %v85
    %v87 = vlaneseq
    %v88 = vshrl.u32 %v87, 7
    %v89 = vsub.s32 %v86, %v88
    %v90 = vrot.slane %v70, %v89
    %v91 = vcombine.high %v90, %v90
    %vm92 = vcmask 15360
    %v94 = vsel %vm92, %v62, 0
    %v97 = vsel %vm92, %v63, 0
    %v100 = vsel %vm92, %v64, 0
    %v103 = vsel %vm92, %v65, 0
    %v106 = vsel %vm92, %v66, 0
    %v109 = vsel %vm92, %v67, 0
    %v112 = vsel %vm92, %v68, 0
    %v115 = vsel %vm92, %v69, 0
    %vm117 = vcmask 1041408
    %v118 = vsel %vm117, %v90, 0
    %v120 = vsel %vm117, %v91, 0
    %122 = vmatprep.subr.mxu0 %v120
    %123 = vmatpush1.msra.mxu0 %v118
    %124 = vmatprep.subr.mxu0 0.0
    %125 = vmatpush1.msra.mxu0 0.0
    %126 = vmatprep.subr.mxu0 0.0
    %127 = vmatpush1.msra.mxu0 0.0
    %128 = vmatprep.subr.mxu0 0.0
    %129 = vmatpush1.msra.mxu0 0.0
    %130 = vmatprep.subr.mxu0 0.0
    %131 = vmatpush1.msra.mxu0 0.0
    %132 = vmatprep.subr.mxu0 0.0
    %133 = vmatpush1.msra.mxu0 0.0
    %134 = vmatprep.subr.mxu0 0.0
    %135 = vmatpush1.msra.mxu0 0.0
    %136 = vmatprep.subr.mxu0 0.0
    %137 = vmatpush1.msra.mxu0 0.0
    %138 = vmatprep.subr.mxu0 0.0
    %139 = vmatpush1.msra.mxu0 0.0
    %140 = vmatprep.subr.mxu0 0.0
    %141 = vmatpush1.msra.mxu0 0.0
    %142 = vmatprep.subr.mxu0 0.0
    %143 = vmatpush1.msra.mxu0 0.0
    %144 = vmatprep.subr.mxu0 0.0
    %145 = vmatpush1.msra.mxu0 0.0
    %146 = vmatprep.subr.mxu0 0.0
    %147 = vmatpush1.msra.mxu0 0.0
    %148 = vmatprep.subr.mxu0 0.0
    %149 = vmatpush1.msra.mxu0 0.0
    %150 = vmatprep.subr.mxu0 0.0
    %151 = vmatpush1.msra.mxu0 0.0
    %152 = vmatprep.subr.mxu0 0.0
    %153 = vmatpush1.msra.mxu0 0.0
    %154 = vmatprep.subr.mxu0 0.0
    %155 = vmatpush1.msra.mxu0 0.0
    %156 = vmatprep.subr.mxu0 0.0
    %157 = vmatpush1.msra.mxu0 0.0
    %158 = vmatprep.subr.mxu0 0.0
    %159 = vmatpush1.msra.mxu0 0.0
    %160 = vmatprep.subr.mxu0 0.0
    %161 = vmatpush1.msra.mxu0 0.0
    %162 = vmatprep.subr.mxu0 0.0
    %163 = vmatpush1.msra.mxu0 0.0
    %164 = vmatprep.subr.mxu0 0.0
    %165 = vmatpush1.msra.mxu0 0.0
    %166 = vmatprep.subr.mxu0 0.0
    %167 = vmatpush1.msra.mxu0 0.0
    %168 = vmatprep.subr.mxu0 0.0
    %169 = vmatpush1.msra.mxu0 0.0
    %170 = vmatprep.subr.mxu0 0.0
    %171 = vmatpush1.msra.mxu0 0.0
    %172 = vmatprep.subr.mxu0 0.0
    %173 = vmatpush1.msra.mxu0 0.0
    %174 = vmatprep.subr.mxu0 0.0
    %175 = vmatpush1.msra.mxu0 0.0
    %176 = vmatprep.subr.mxu0 0.0
    %177 = vmatpush1.msra.mxu0 0.0
    %178 = vmatprep.subr.mxu0 0.0
    %179 = vmatpush1.msra.mxu0 0.0
    %180 = vmatprep.subr.mxu0 0.0
    %181 = vmatpush1.msra.mxu0 0.0
    %182 = vmatprep.subr.mxu0 0.0
    %183 = vmatpush1.msra.mxu0 0.0
    %184 = vmatprep.subr.mxu0 0.0
    %185 = vmatpush1.msra.mxu0 0.0
    %186 = vmatprep.mubr.f32.mxu0 0.0
    %187 = vmatmul.mubr.f32.gmra.mrb[0].mxu0 %v94
    %v188 = vpop.f32.mrb[0].mxu0
    %v189 = vadd.f32 %v76, %v188
    %v190 = vpop.f32.mrb[0].mxu0
    %v191 = vadd.f32 %v80, %v190
    %192 = vmatprep.mubr.f32.mxu0 0.0
    %193 = vmatmul.mubr.f32.gmra.mrb[0].mxu0 %v97
    %v194 = vpop.f32.mrb[0].mxu0
    %v195 = vadd.f32 %v76, %v194
    %v196 = vpop.f32.mrb[0].mxu0
    %v197 = vadd.f32 %v80, %v196
    %198 = vmatprep.mubr.f32.mxu0 0.0
    %199 = vmatmul.mubr.f32.gmra.mrb[0].mxu0 %v100
    %v200 = vpop.f32.mrb[0].mxu0
    %v201 = vadd.f32 %v76, %v200
    %v202 = vpop.f32.mrb[0].mxu0
    %v203 = vadd.f32 %v80, %v202
    %204 = vmatprep.mubr.f32.mxu0 0.0
    %205 = vmatmul.mubr.f32.gmra.mrb[0].mxu0 %v103
    %v206 = vpop.f32.mrb[0].mxu0
    %v207 = vadd.f32 %v76, %v206
    %v208 = vpop.f32.mrb[0].mxu0
    %v209 = vadd.f32 %v80, %v208
    %210 = vmatprep.mubr.f32.mxu0 0.0
    %211 = vmatmul.mubr.f32.gmra.mrb[0].mxu0 %v106
    %v212 = vpop.f32.mrb[0].mxu0
    %v213 = vadd.f32 %v76, %v212
    %v214 = vpop.f32.mrb[0].mxu0
    %v215 = vadd.f32 %v80, %v214
    %216 = vmatprep.mubr.f32.mxu0 0.0
    %217 = vmatmul.mubr.f32.gmra.mrb[0].mxu0 %v109
    %v218 = vpop.f32.mrb[0].mxu0
    %v219 = vadd.f32 %v76, %v218
    %v220 = vpop.f32.mrb[0].mxu0
    %v221 = vadd.f32 %v80, %v220
    %222 = vmatprep.mubr.f32.mxu0 0.0
    %223 = vmatmul.mubr.f32.gmra.mrb[0].mxu0 %v112
    %v224 = vpop.f32.mrb[0].mxu0
    %v225 = vadd.f32 %v76, %v224
    %v226 = vpop.f32.mrb[0].mxu0
    %v227 = vadd.f32 %v80, %v226
    %228 = vmatprep.mubr.f32.mxu0 0.0
    %229 = vmatmul.mubr.f32.gmra.mrb[0].mxu0 %v115
    %v230 = vpop.f32.mrb[0].mxu0
    %v231 = vadd.f32 %v76, %v230
    %v232 = vpop.f32.mrb[0].mxu0
    %v233 = vadd.f32 %v80, %v232
    %234 = vdwg.mxu0
    %235 = vst [vmem:[#allocation2] sm:$0xff] %v189
    %236 = vst [vmem:[#allocation2 + $0x8] sm:$0xff] %v191
    %237 = vst [vmem:[#allocation2 + $0x10] sm:$0xff] %v195
    %238 = vst [vmem:[#allocation2 + $0x18] sm:$0xff] %v197
    %239 = vst [vmem:[#allocation2 + $0x20] sm:$0xff] %v201
    %240 = vst [vmem:[#allocation2 + $0x28] sm:$0xff] %v203
    %241 = vst [vmem:[#allocation2 + $0x30] sm:$0xff] %v207
    %242 = vst [vmem:[#allocation2 + $0x38] sm:$0xff] %v209
    %243 = vst [vmem:[#allocation2 + $0x40] sm:$0xff] %v213
    %244 = vst [vmem:[#allocation2 + $0x48] sm:$0xff] %v215
    %245 = vst [vmem:[#allocation2 + $0x50] sm:$0xff] %v219
    %246 = vst [vmem:[#allocation2 + $0x58] sm:$0xff] %v221
    %247 = vst [vmem:[#allocation2 + $0x60] sm:$0xff] %v225
    %248 = vst [vmem:[#allocation2 + $0x68] sm:$0xff] %v227
    %249 = vst [vmem:[#allocation2 + $0x70] sm:$0xff] %v231
    %250 = vst [vmem:[#allocation2 + $0x78] sm:$0xff] %v233
    %v251 = vld [vmem:[#allocation5] sm:$0xff]
    %v252 = vld [vmem:[#allocation5 + $0x8] sm:$0xff]
    %v253 = vld [vmem:[#allocation5 + $0x10] sm:$0xff]
    %v254 = vld [vmem:[#allocation5 + $0x18] sm:$0xff]
    %v255 = vld [vmem:[#allocation5 + $0x20] sm:$0xff]
    %v256 = vld [vmem:[#allocation5 + $0x28] sm:$0xff]
    %v257 = vld [vmem:[#allocation5 + $0x30] sm:$0xff]
    %v258 = vld [vmem:[#allocation5 + $0x38] sm:$0xff]
    %v259 = vld [vmem:[#allocation5 + $0x40] sm:$0xff]
    %v260 = vld [vmem:[#allocation5 + $0x48] sm:$0xff]
    %v261 = vld [vmem:[#allocation5 + $0x50] sm:$0xff]
    %v262 = vld [vmem:[#allocation5 + $0x58] sm:$0xff]
    %v263 = vld [vmem:[#allocation5 + $0x60] sm:$0xff]
    %v264 = vld [vmem:[#allocation5 + $0x68] sm:$0xff]
    %v265 = vld [vmem:[#allocation5 + $0x70] sm:$0xff]
    %v266 = vld [vmem:[#allocation5 + $0x78] sm:$0xff]
    %v267 = vld [vmem:[#allocation2] sm:$0xff]
    %v268 = vld [vmem:[#allocation2 + $0x8] sm:$0xff]
    %vm269 = vcmask 523264
    %v271 = vsel %vm269, 0.0, 0
    %273 = vmatprep.subr.mxu0 %v252
    %274 = vmatpush1.msra.mxu0 %v251
    %275 = vmatprep.subr.mxu0 %v254
    %276 = vmatpush1.msra.mxu0 %v253
    %277 = vmatprep.subr.mxu0 %v256
    %278 = vmatpush1.msra.mxu0 %v255
    %279 = vmatprep.subr.mxu0 %v258
    %280 = vmatpush1.msra.mxu0 %v257
    %281 = vmatprep.subr.mxu0 %v260
    %282 = vmatpush1.msra.mxu0 %v259
    %283 = vmatprep.subr.mxu0 %v262
    %284 = vmatpush1.msra.mxu0 %v261
    %285 = vmatprep.subr.mxu0 %v264
    %286 = vmatpush1.msra.mxu0 %v263
    %287 = vmatprep.subr.mxu0 %v266
    %288 = vmatpush1.msra.mxu0 %v265
    %289 = vmatprep.subr.mxu0 0.0
    %290 = vmatpush1.msra.mxu0 0.0
    %291 = vmatprep.subr.mxu0 0.0
    %292 = vmatpush1.msra.mxu0 0.0
    %293 = vmatprep.subr.mxu0 0.0
    %294 = vmatpush1.msra.mxu0 0.0
    %295 = vmatprep.subr.mxu0 0.0
    %296 = vmatpush1.msra.mxu0 0.0
    %297 = vmatprep.subr.mxu0 0.0
    %298 = vmatpush1.msra.mxu0 0.0
    %299 = vmatprep.subr.mxu0 0.0
    %300 = vmatpush1.msra.mxu0 0.0
    %301 = vmatprep.subr.mxu0 0.0
    %302 = vmatpush1.msra.mxu0 0.0
    %303 = vmatprep.subr.mxu0 0.0
    %304 = vmatpush1.msra.mxu0 0.0
    %305 = vmatprep.subr.mxu0 0.0
    %306 = vmatpush1.msra.mxu0 0.0
    %307 = vmatprep.subr.mxu0 0.0
    %308 = vmatpush1.msra.mxu0 0.0
    %309 = vmatprep.subr.mxu0 0.0
    %310 = vmatpush1.msra.mxu0 0.0
    %311 = vmatprep.subr.mxu0 0.0
    %312 = vmatpush1.msra.mxu0 0.0
    %313 = vmatprep.subr.mxu0 0.0
    %314 = vmatpush1.msra.mxu0 0.0
    %315 = vmatprep.subr.mxu0 0.0
    %316 = vmatpush1.msra.mxu0 0.0
    %317 = vmatprep.subr.mxu0 0.0
    %318 = vmatpush1.msra.mxu0 0.0
    %319 = vmatprep.subr.mxu0 0.0
    %320 = vmatpush1.msra.mxu0 0.0
    %321 = vmatprep.subr.mxu0 0.0
    %322 = vmatpush1.msra.mxu0 0.0
    %323 = vmatprep.subr.mxu0 0.0
    %324 = vmatpush1.msra.mxu0 0.0
    %325 = vmatprep.subr.mxu0 0.0
    %326 = vmatpush1.msra.mxu0 0.0
    %327 = vmatprep.subr.mxu0 0.0
    %328 = vmatpush1.msra.mxu0 0.0
    %329 = vmatprep.subr.mxu0 0.0
    %330 = vmatpush1.msra.mxu0 0.0
    %331 = vmatprep.subr.mxu0 0.0
    %332 = vmatpush1.msra.mxu0 0.0
    %333 = vmatprep.subr.mxu0 0.0
    %334 = vmatpush1.msra.mxu0 0.0
    %335 = vmatprep.subr.mxu0 0.0
    %336 = vmatpush1.msra.mxu0 0.0
    %337 = vmatprep.mubr.f32.mxu0 0.0
    %338 = vmatmul.mubr.f32.gmra.mrb[0].mxu0 %v271
    %v339 = vpop.f32.mrb[0].mxu0
    %v340 = vadd.f32 0.0, %v339
    %v341 = vpop.f32.mrb[0].mxu0
    %v342 = vadd.f32 0.0, %v341
    %343 = vdwg.mxu0
    %v344 = vadd.f32 %v267, %v340
    %v345 = vadd.f32 %v268, %v342
    %v346 = vxor.u32 %v344, 2147483648
    %v347 = vxor.u32 %v345, 2147483648
    %v348 = vmul.f32 %v346, 1.442695
    %v349 = vpow.pop %v348
    %v350 = vmul.f32 %v347, 1.442695
    %v351 = vpow.pop %v350
    %v352 = vadd.f32 %v349, 1.0
    %v353 = vadd.f32 %v351, 1.0
    %v354 = vrcp.pop %v352
    %v355 = vmul.f32 1.0, %v354
    %v356 = vrcp.pop %v353
    %v357 = vmul.f32 1.0, %v356
    %v358 = vtanh.pop %v345
    %v359 = vmul.f32 %v355, 0.0
    %361 = vrot.lane.b32.xlu0 %v358, 64
    %v362 = vpop.permute.xlu0 %361
    %v364 = vmul.f32 %v355, %v362
    %366 = vrot.lane.b32.xlu0 %v364, 64
    %v367 = vpop.permute.xlu0 %366
    %v369 = vadd.f32 %v359, %v367
    %v370 = vtanh.pop %v369
    %372 = vrot.lane.b32.xlu0 %v370, 64
    %v373 = vpop.permute.xlu0 %372
    %v375 = vmul.f32 %v357, %v373
    %376 = vst.msk [vmem:[#allocation3] sm:$0xff] %vm269, %v375
    %378 = vrot.lane.b32.xlu0 %v375, 64
    %v379 = vpop.permute.xlu0 %378
    %vm381 = vcmask 1048064
    %382 = vst.msk [vmem:[#allocation3 + $0x38] sm:$0xff] %vm381, %v379
    %v383 = vld [vmem:[#allocation2 + $0x10] sm:$0xff]
    %v384 = vld [vmem:[#allocation2 + $0x18] sm:$0xff]
    %v385 = vsel %vm269, %v375, 0
    %387 = vmatprep.subr.mxu0 %v252
    %388 = vmatpush1.msra.mxu0 %v251
    %389 = vmatprep.subr.mxu0 %v254
    %390 = vmatpush1.msra.mxu0 %v253
    %391 = vmatprep.subr.mxu0 %v256
    %392 = vmatpush1.msra.mxu0 %v255
    %393 = vmatprep.subr.mxu0 %v258
    %394 = vmatpush1.msra.mxu0 %v257
    %395 = vmatprep.subr.mxu0 %v260
    %396 = vmatpush1.msra.mxu0 %v259
    %397 = vmatprep.subr.mxu0 %v262
    %398 = vmatpush1.msra.mxu0 %v261
    %399 = vmatprep.subr.mxu0 %v264
    %400 = vmatpush1.msra.mxu0 %v263
    %401 = vmatprep.subr.mxu0 %v266
    %402 = vmatpush1.msra.mxu0 %v265
    %403 = vmatprep.subr.mxu0 0.0
    %404 = vmatpush1.msra.mxu0 0.0
    %405 = vmatprep.subr.mxu0 0.0
    %406 = vmatpush1.msra.mxu0 0.0
    %407 = vmatprep.subr.mxu0 0.0
    %408 = vmatpush1.msra.mxu0 0.0
    %409 = vmatprep.subr.mxu0 0.0
    %410 = vmatpush1.msra.mxu0 0.0
    %411 = vmatprep.subr.mxu0 0.0
    %412 = vmatpush1.msra.mxu0 0.0
    %413 = vmatprep.subr.mxu0 0.0
    %414 = vmatpush1.msra.mxu0 0.0
    %415 = vmatprep.subr.mxu0 0.0
    %416 = vmatpush1.msra.mxu0 0.0
    %417 = vmatprep.subr.mxu0 0.0
    %418 = vmatpush1.msra.mxu0 0.0
    %419 = vmatprep.subr.mxu0 0.0
    %420 = vmatpush1.msra.mxu0 0.0
    %421 = vmatprep.subr.mxu0 0.0
    %422 = vmatpush1.msra.mxu0 0.0
    %423 = vmatprep.subr.mxu0 0.0
    %424 = vmatpush1.msra.mxu0 0.0
    %425 = vmatprep.subr.mxu0 0.0
    %426 = vmatpush1.msra.mxu0 0.0
    %427 = vmatprep.subr.mxu0 0.0
    %428 = vmatpush1.msra.mxu0 0.0
    %429 = vmatprep.subr.mxu0 0.0
    %430 = vmatpush1.msra.mxu0 0.0
    %431 = vmatprep.subr.mxu0 0.0
    %432 = vmatpush1.msra.mxu0 0.0
    %433 = vmatprep.subr.mxu0 0.0
    %434 = vmatpush1.msra.mxu0 0.0
    %435 = vmatprep.subr.mxu0 0.0
    %436 = vmatpush1.msra.mxu0 0.0
    %437 = vmatprep.subr.mxu0 0.0
    %438 = vmatpush1.msra.mxu0 0.0
    %439 = vmatprep.subr.mxu0 0.0
    %440 = vmatpush1.msra.mxu0 0.0
    %441 = vmatprep.subr.mxu0 0.0
    %442 = vmatpush1.msra.mxu0 0.0
    %443 = vmatprep.subr.mxu0 0.0
    %444 = vmatpush1.msra.mxu0 0.0
    %445 = vmatprep.subr.mxu0 0.0
    %446 = vmatpush1.msra.mxu0 0.0
    %447 = vmatprep.subr.mxu0 0.0
    %448 = vmatpush1.msra.mxu0 0.0
    %449 = vmatprep.subr.mxu0 0.0
    %450 = vmatpush1.msra.mxu0 0.0
    %451 = vmatprep.mubr.f32.mxu0 0.0
    %452 = vmatmul.mubr.f32.gmra.mrb[0].mxu0 %v385
    %v453 = vpop.f32.mrb[0].mxu0
    %v454 = vadd.f32 0.0, %v453
    %v455 = vpop.f32.mrb[0].mxu0
    %v456 = vadd.f32 0.0, %v455
    %457 = vdwg.mxu0
    %v458 = vadd.f32 %v383, %v454
    %v459 = vadd.f32 %v384, %v456
    %v460 = vxor.u32 %v458, 2147483648
    %v461 = vxor.u32 %v459, 2147483648
    %v462 = vmul.f32 %v460, 1.442695
    %v463 = vpow.pop %v462
    %v464 = vmul.f32 %v461, 1.442695
    %v465 = vpow.pop %v464
    %v466 = vadd.f32 %v463, 1.0
    %v467 = vadd.f32 %v465, 1.0
    %v468 = vrcp.pop %v466
    %v469 = vmul.f32 1.0, %v468
    %v470 = vrcp.pop %v467
    %v471 = vmul.f32 1.0, %v470
    %v472 = vtanh.pop %v459
    %v473 = vmul.f32 %v469, %v369
    %475 = vrot.lane.b32.xlu0 %v472, 64
    %v476 = vpop.permute.xlu0 %475
    %v478 = vmul.f32 %v469, %v476
    %480 = vrot.lane.b32.xlu0 %v478, 64
    %v481 = vpop.permute.xlu0 %480
    %v483 = vadd.f32 %v473, %v481
    %v484 = vtanh.pop %v483
    %486 = vrot.lane.b32.xlu0 %v484, 64
    %v487 = vpop.permute.xlu0 %486
    %v489 = vmul.f32 %v471, %v487
    %490 = vst.msk [vmem:[#allocation3 + $0x8] sm:$0xff] %vm269, %v489
    %492 = vrot.lane.b32.xlu0 %v489, 64
    %v493 = vpop.permute.xlu0 %492
    %495 = vst.msk [vmem:[#allocation3 + $0x30] sm:$0xff] %vm381, %v493
    %v496 = vld [vmem:[#allocation2 + $0x20] sm:$0xff]
    %v497 = vld [vmem:[#allocation2 + $0x28] sm:$0xff]
    %v498 = vsel %vm269, %v489, 0
    %500 = vmatprep.subr.mxu0 %v252
    %501 = vmatpush1.msra.mxu0 %v251
    %502 = vmatprep.subr.mxu0 %v254
    %503 = vmatpush1.msra.mxu0 %v253
    %504 = vmatprep.subr.mxu0 %v256
    %505 = vmatpush1.msra.mxu0 %v255
    %506 = vmatprep.subr.mxu0 %v258
    %507 = vmatpush1.msra.mxu0 %v257
    %508 = vmatprep.subr.mxu0 %v260
    %509 = vmatpush1.msra.mxu0 %v259
    %510 = vmatprep.subr.mxu0 %v262
    %511 = vmatpush1.msra.mxu0 %v261
    %512 = vmatprep.subr.mxu0 %v264
    %513 = vmatpush1.msra.mxu0 %v263
    %514 = vmatprep.subr.mxu0 %v266
    %515 = vmatpush1.msra.mxu0 %v265
    %516 = vmatprep.subr.mxu0 0.0
    %517 = vmatpush1.msra.mxu0 0.0
    %518 = vmatprep.subr.mxu0 0.0
    %519 = vmatpush1.msra.mxu0 0.0
    %520 = vmatprep.subr.mxu0 0.0
    %521 = vmatpush1.msra.mxu0 0.0
    %522 = vmatprep.subr.mxu0 0.0
    %523 = vmatpush1.msra.mxu0 0.0
    %524 = vmatprep.subr.mxu0 0.0
    %525 = vmatpush1.msra.mxu0 0.0
    %526 = vmatprep.subr.mxu0 0.0
    %527 = vmatpush1.msra.mxu0 0.0
    %528 = vmatprep.subr.mxu0 0.0
    %529 = vmatpush1.msra.mxu0 0.0
    %530 = vmatprep.subr.mxu0 0.0
    %531 = vmatpush1.msra.mxu0 0.0
    %532 = vmatprep.subr.mxu0 0.0
    %533 = vmatpush1.msra.mxu0 0.0
    %534 = vmatprep.subr.mxu0 0.0
    %535 = vmatpush1.msra.mxu0 0.0
    %536 = vmatprep.subr.mxu0 0.0
    %537 = vmatpush1.msra.mxu0 0.0
    %538 = vmatprep.subr.mxu0 0.0
    %539 = vmatpush1.msra.mxu0 0.0
    %540 = vmatprep.subr.mxu0 0.0
    %541 = vmatpush1.msra.mxu0 0.0
    %542 = vmatprep.subr.mxu0 0.0
    %543 = vmatpush1.msra.mxu0 0.0
    %544 = vmatprep.subr.mxu0 0.0
    %545 = vmatpush1.msra.mxu0 0.0
    %546 = vmatprep.subr.mxu0 0.0
    %547 = vmatpush1.msra.mxu0 0.0
    %548 = vmatprep.subr.mxu0 0.0
    %549 = vmatpush1.msra.mxu0 0.0
    %550 = vmatprep.subr.mxu0 0.0
    %551 = vmatpush1.msra.mxu0 0.0
    %552 = vmatprep.subr.mxu0 0.0
    %553 = vmatpush1.msra.mxu0 0.0
    %554 = vmatprep.subr.mxu0 0.0
    %555 = vmatpush1.msra.mxu0 0.0
    %556 = vmatprep.subr.mxu0 0.0
    %557 = vmatpush1.msra.mxu0 0.0
    %558 = vmatprep.subr.mxu0 0.0
    %559 = vmatpush1.msra.mxu0 0.0
    %560 = vmatprep.subr.mxu0 0.0
    %561 = vmatpush1.msra.mxu0 0.0
    %562 = vmatprep.subr.mxu0 0.0
    %563 = vmatpush1.msra.mxu0 0.0
    %564 = vmatprep.mubr.f32.mxu0 0.0
    %565 = vmatmul.mubr.f32.gmra.mrb[0].mxu0 %v498
    %v566 = vpop.f32.mrb[0].mxu0
    %v567 = vadd.f32 0.0, %v566
    %v568 = vpop.f32.mrb[0].mxu0
    %v569 = vadd.f32 0.0, %v568
    %570 = vdwg.mxu0
    %v571 = vadd.f32 %v496, %v567
    %v572 = vadd.f32 %v497, %v569
    %v573 = vxor.u32 %v571, 2147483648
    %v574 = vxor.u32 %v572, 2147483648
    %v575 = vmul.f32 %v573, 1.442695
    %v576 = vpow.pop %v575
    %v577 = vmul.f32 %v574, 1.442695
    %v578 = vpow.pop %v577
    %v579 = vadd.f32 %v576, 1.0
    %v580 = vadd.f32 %v578, 1.0
    %v581 = vrcp.pop %v579
    %v582 = vmul.f32 1.0, %v581
    %v583 = vrcp.pop %v580
    %v584 = vmul.f32 1.0, %v583
    %v585 = vtanh.pop %v572
    %v586 = vmul.f32 %v582, %v483
    %588 = vrot.lane.b32.xlu0 %v585, 64
    %v589 = vpop.permute.xlu0 %588
    %v591 = vmul.f32 %v582, %v589
    %593 = vrot.lane.b32.xlu0 %v591, 64
    %v594 = vpop.permute.xlu0 %593
    %v596 = vadd.f32 %v586, %v594
    %v597 = vtanh.pop %v596
    %599 = vrot.lane.b32.xlu0 %v597, 64
    %v600 = vpop.permute.xlu0 %599
    %v602 = vmul.f32 %v584, %v600
    %603 = vst.msk [vmem:[#allocation3 + $0x10] sm:$0xff] %vm269, %v602
    %605 = vrot.lane.b32.xlu0 %v602, 64
    %v606 = vpop.permute.xlu0 %605
    %608 = vst.msk [vmem:[#allocation3 + $0x28] sm:$0xff] %vm381, %v606
    %v609 = vld [vmem:[#allocation2 + $0x30] sm:$0xff]
    %v610 = vld [vmem:[#allocation2 + $0x38] sm:$0xff]
    %v611 = vsel %vm269, %v602, 0
    %613 = vmatprep.subr.mxu0 %v252
    %614 = vmatpush1.msra.mxu0 %v251
    %615 = vmatprep.subr.mxu0 %v254
    %616 = vmatpush1.msra.mxu0 %v253
    %617 = vmatprep.subr.mxu0 %v256
    %618 = vmatpush1.msra.mxu0 %v255
    %619 = vmatprep.subr.mxu0 %v258
    %620 = vmatpush1.msra.mxu0 %v257
    %621 = vmatprep.subr.mxu0 %v260
    %622 = vmatpush1.msra.mxu0 %v259
    %623 = vmatprep.subr.mxu0 %v262
    %624 = vmatpush1.msra.mxu0 %v261
    %625 = vmatprep.subr.mxu0 %v264
    %626 = vmatpush1.msra.mxu0 %v263
    %627 = vmatprep.subr.mxu0 %v266
    %628 = vmatpush1.msra.mxu0 %v265
    %629 = vmatprep.subr.mxu0 0.0
    %630 = vmatpush1.msra.mxu0 0.0
    %631 = vmatprep.subr.mxu0 0.0
    %632 = vmatpush1.msra.mxu0 0.0
    %633 = vmatprep.subr.mxu0 0.0
    %634 = vmatpush1.msra.mxu0 0.0
    %635 = vmatprep.subr.mxu0 0.0
    %636 = vmatpush1.msra.mxu0 0.0
    %637 = vmatprep.subr.mxu0 0.0
    %638 = vmatpush1.msra.mxu0 0.0
    %639 = vmatprep.subr.mxu0 0.0
    %640 = vmatpush1.msra.mxu0 0.0
    %641 = vmatprep.subr.mxu0 0.0
    %642 = vmatpush1.msra.mxu0 0.0
    %643 = vmatprep.subr.mxu0 0.0
    %644 = vmatpush1.msra.mxu0 0.0
    %645 = vmatprep.subr.mxu0 0.0
    %646 = vmatpush1.msra.mxu0 0.0
    %647 = vmatprep.subr.mxu0 0.0
    %648 = vmatpush1.msra.mxu0 0.0
    %649 = vmatprep.subr.mxu0 0.0
    %650 = vmatpush1.msra.mxu0 0.0
    %651 = vmatprep.subr.mxu0 0.0
    %652 = vmatpush1.msra.mxu0 0.0
    %653 = vmatprep.subr.mxu0 0.0
    %654 = vmatpush1.msra.mxu0 0.0
    %655 = vmatprep.subr.mxu0 0.0
    %656 = vmatpush1.msra.mxu0 0.0
    %657 = vmatprep.subr.mxu0 0.0
    %658 = vmatpush1.msra.mxu0 0.0
    %659 = vmatprep.subr.mxu0 0.0
    %660 = vmatpush1.msra.mxu0 0.0
    %661 = vmatprep.subr.mxu0 0.0
    %662 = vmatpush1.msra.mxu0 0.0
    %663 = vmatprep.subr.mxu0 0.0
    %664 = vmatpush1.msra.mxu0 0.0
    %665 = vmatprep.subr.mxu0 0.0
    %666 = vmatpush1.msra.mxu0 0.0
    %667 = vmatprep.subr.mxu0 0.0
    %668 = vmatpush1.msra.mxu0 0.0
    %669 = vmatprep.subr.mxu0 0.0
    %670 = vmatpush1.msra.mxu0 0.0
    %671 = vmatprep.subr.mxu0 0.0
    %672 = vmatpush1.msra.mxu0 0.0
    %673 = vmatprep.subr.mxu0 0.0
    %674 = vmatpush1.msra.mxu0 0.0
    %675 = vmatprep.subr.mxu0 0.0
    %676 = vmatpush1.msra.mxu0 0.0
    %677 = vmatprep.mubr.f32.mxu0 0.0
    %678 = vmatmul.mubr.f32.gmra.mrb[0].mxu0 %v611
    %v679 = vpop.f32.mrb[0].mxu0
    %v680 = vadd.f32 0.0, %v679
    %v681 = vpop.f32.mrb[0].mxu0
    %v682 = vadd.f32 0.0, %v681
    %683 = vdwg.mxu0
    %v684 = vadd.f32 %v609, %v680
    %v685 = vadd.f32 %v610, %v682
    %v686 = vxor.u32 %v684, 2147483648
    %v687 = vxor.u32 %v685, 2147483648
    %v688 = vmul.f32 %v686, 1.442695
    %v689 = vpow.pop %v688
    %v690 = vmul.f32 %v687, 1.442695
    %v691 = vpow.pop %v690
    %v692 = vadd.f32 %v689, 1.0
    %v693 = vadd.f32 %v691, 1.0
    %v694 = vrcp.pop %v692
    %v695 = vmul.f32 1.0, %v694
    %v696 = vrcp.pop %v693
    %v697 = vmul.f32 1.0, %v696
    %v698 = vtanh.pop %v685
    %v699 = vmul.f32 %v695, %v596
    %701 = vrot.lane.b32.xlu0 %v698, 64
    %v702 = vpop.permute.xlu0 %701
    %v704 = vmul.f32 %v695, %v702
    %706 = vrot.lane.b32.xlu0 %v704, 64
    %v707 = vpop.permute.xlu0 %706
    %v709 = vadd.f32 %v699, %v707
    %v710 = vtanh.pop %v709
    %712 = vrot.lane.b32.xlu0 %v710, 64
    %v713 = vpop.permute.xlu0 %712
    %v715 = vmul.f32 %v697, %v713
    %716 = vst.msk [vmem:[#allocation3 + $0x18] sm:$0xff] %vm269, %v715
    %718 = vrot.lane.b32.xlu0 %v715, 64
    %v719 = vpop.permute.xlu0 %718
    %721 = vst.msk [vmem:[#allocation3 + $0x20] sm:$0xff] %vm381, %v719
    %v722 = vld [vmem:[#allocation2 + $0x40] sm:$0xff]
    %v723 = vld [vmem:[#allocation2 + $0x48] sm:$0xff]
    %v724 = vsel %vm269, %v715, 0
    %726 = vmatprep.subr.mxu0 %v252
    %727 = vmatpush1.msra.mxu0 %v251
    %728 = vmatprep.subr.mxu0 %v254
    %729 = vmatpush1.msra.mxu0 %v253
    %730 = vmatprep.subr.mxu0 %v256
    %731 = vmatpush1.msra.mxu0 %v255
    %732 = vmatprep.subr.mxu0 %v258
    %733 = vmatpush1.msra.mxu0 %v257
    %734 = vmatprep.subr.mxu0 %v260
    %735 = vmatpush1.msra.mxu0 %v259
    %736 = vmatprep.subr.mxu0 %v262
    %737 = vmatpush1.msra.mxu0 %v261
    %738 = vmatprep.subr.mxu0 %v264
    %739 = vmatpush1.msra.mxu0 %v263
    %740 = vmatprep.subr.mxu0 %v266
    %741 = vmatpush1.msra.mxu0 %v265
    %742 = vmatprep.subr.mxu0 0.0
    %743 = vmatpush1.msra.mxu0 0.0
    %744 = vmatprep.subr.mxu0 0.0
    %745 = vmatpush1.msra.mxu0 0.0
    %746 = vmatprep.subr.mxu0 0.0
    %747 = vmatpush1.msra.mxu0 0.0
    %748 = vmatprep.subr.mxu0 0.0
    %749 = vmatpush1.msra.mxu0 0.0
    %750 = vmatprep.subr.mxu0 0.0
    %751 = vmatpush1.msra.mxu0 0.0
    %752 = vmatprep.subr.mxu0 0.0
    %753 = vmatpush1.msra.mxu0 0.0
    %754 = vmatprep.subr.mxu0 0.0
    %755 = vmatpush1.msra.mxu0 0.0
    %756 = vmatprep.subr.mxu0 0.0
    %757 = vmatpush1.msra.mxu0 0.0
    %758 = vmatprep.subr.mxu0 0.0
    %759 = vmatpush1.msra.mxu0 0.0
    %760 = vmatprep.subr.mxu0 0.0
    %761 = vmatpush1.msra.mxu0 0.0
    %762 = vmatprep.subr.mxu0 0.0
    %763 = vmatpush1.msra.mxu0 0.0
    %764 = vmatprep.subr.mxu0 0.0
    %765 = vmatpush1.msra.mxu0 0.0
    %766 = vmatprep.subr.mxu0 0.0
    %767 = vmatpush1.msra.mxu0 0.0
    %768 = vmatprep.subr.mxu0 0.0
    %769 = vmatpush1.msra.mxu0 0.0
    %770 = vmatprep.subr.mxu0 0.0
    %771 = vmatpush1.msra.mxu0 0.0
    %772 = vmatprep.subr.mxu0 0.0
    %773 = vmatpush1.msra.mxu0 0.0
    %774 = vmatprep.subr.mxu0 0.0
    %775 = vmatpush1.msra.mxu0 0.0
    %776 = vmatprep.subr.mxu0 0.0
    %777 = vmatpush1.msra.mxu0 0.0
    %778 = vmatprep.subr.mxu0 0.0
    %779 = vmatpush1.msra.mxu0 0.0
    %780 = vmatprep.subr.mxu0 0.0
    %781 = vmatpush1.msra.mxu0 0.0
    %782 = vmatprep.subr.mxu0 0.0
    %783 = vmatpush1.msra.mxu0 0.0
    %784 = vmatprep.subr.mxu0 0.0
    %785 = vmatpush1.msra.mxu0 0.0
    %786 = vmatprep.subr.mxu0 0.0
    %787 = vmatpush1.msra.mxu0 0.0
    %788 = vmatprep.subr.mxu0 0.0
    %789 = vmatpush1.msra.mxu0 0.0
    %790 = vmatprep.mubr.f32.mxu0 0.0
    %791 = vmatmul.mubr.f32.gmra.mrb[0].mxu0 %v724
    %v792 = vpop.f32.mrb[0].mxu0
    %v793 = vadd.f32 0.0, %v792
    %v794 = vpop.f32.mrb[0].mxu0
    %v795 = vadd.f32 0.0, %v794
    %796 = vdwg.mxu0
    %v797 = vadd.f32 %v722, %v793
    %v798 = vadd.f32 %v723, %v795
    %v799 = vxor.u32 %v797, 2147483648
    %v800 = vxor.u32 %v798, 2147483648
    %v801 = vmul.f32 %v799, 1.442695
    %v802 = vpow.pop %v801
    %v803 = vmul.f32 %v800, 1.442695
    %v804 = vpow.pop %v803
    %v805 = vadd.f32 %v802, 1.0
    %v806 = vadd.f32 %v804, 1.0
    %v807 = vrcp.pop %v805
    %v808 = vmul.f32 1.0, %v807
    %v809 = vrcp.pop %v806
    %v810 = vmul.f32 1.0, %v809
    %v811 = vtanh.pop %v798
    %v812 = vmul.f32 %v808, %v709
    %814 = vrot.lane.b32.xlu0 %v811, 64
    %v815 = vpop.permute.xlu0 %814
    %v817 = vmul.f32 %v808, %v815
    %819 = vrot.lane.b32.xlu0 %v817, 64
    %v820 = vpop.permute.xlu0 %819
    %v822 = vadd.f32 %v812, %v820
    %v823 = vtanh.pop %v822
    %825 = vrot.lane.b32.xlu0 %v823, 64
    %v826 = vpop.permute.xlu0 %825
    %v828 = vmul.f32 %v810, %v826
    %829 = vst.msk [vmem:[#allocation3 + $0x20] sm:$0xff] %vm269, %v828
    %831 = vrot.lane.b32.xlu0 %v828, 64
    %v832 = vpop.permute.xlu0 %831
    %834 = vst.msk [vmem:[#allocation3 + $0x18] sm:$0xff] %vm381, %v832
    %v835 = vld [vmem:[#allocation2 + $0x50] sm:$0xff]
    %v836 = vld [vmem:[#allocation2 + $0x58] sm:$0xff]
    %v837 = vsel %vm269, %v828, 0
    %839 = vmatprep.subr.mxu0 %v252
    %840 = vmatpush1.msra.mxu0 %v251
    %841 = vmatprep.subr.mxu0 %v254
    %842 = vmatpush1.msra.mxu0 %v253
    %843 = vmatprep.subr.mxu0 %v256
    %844 = vmatpush1.msra.mxu0 %v255
    %845 = vmatprep.subr.mxu0 %v258
    %846 = vmatpush1.msra.mxu0 %v257
    %847 = vmatprep.subr.mxu0 %v260
    %848 = vmatpush1.msra.mxu0 %v259
    %849 = vmatprep.subr.mxu0 %v262
    %850 = vmatpush1.msra.mxu0 %v261
    %851 = vmatprep.subr.mxu0 %v264
    %852 = vmatpush1.msra.mxu0 %v263
    %853 = vmatprep.subr.mxu0 %v266
    %854 = vmatpush1.msra.mxu0 %v265
    %855 = vmatprep.subr.mxu0 0.0
    %856 = vmatpush1.msra.mxu0 0.0
    %857 = vmatprep.subr.mxu0 0.0
    %858 = vmatpush1.msra.mxu0 0.0
    %859 = vmatprep.subr.mxu0 0.0
    %860 = vmatpush1.msra.mxu0 0.0
    %861 = vmatprep.subr.mxu0 0.0
    %862 = vmatpush1.msra.mxu0 0.0
    %863 = vmatprep.subr.mxu0 0.0
    %864 = vmatpush1.msra.mxu0 0.0
    %865 = vmatprep.subr.mxu0 0.0
    %866 = vmatpush1.msra.mxu0 0.0
    %867 = vmatprep.subr.mxu0 0.0
    %868 = vmatpush1.msra.mxu0 0.0
    %869 = vmatprep.subr.mxu0 0.0
    %870 = vmatpush1.msra.mxu0 0.0
    %871 = vmatprep.subr.mxu0 0.0
    %872 = vmatpush1.msra.mxu0 0.0
    %873 = vmatprep.subr.mxu0 0.0
    %874 = vmatpush1.msra.mxu0 0.0
    %875 = vmatprep.subr.mxu0 0.0
    %876 = vmatpush1.msra.mxu0 0.0
    %877 = vmatprep.subr.mxu0 0.0
    %878 = vmatpush1.msra.mxu0 0.0
    %879 = vmatprep.subr.mxu0 0.0
    %880 = vmatpush1.msra.mxu0 0.0
    %881 = vmatprep.subr.mxu0 0.0
    %882 = vmatpush1.msra.mxu0 0.0
    %883 = vmatprep.subr.mxu0 0.0
    %884 = vmatpush1.msra.mxu0 0.0
    %885 = vmatprep.subr.mxu0 0.0
    %886 = vmatpush1.msra.mxu0 0.0
    %887 = vmatprep.subr.mxu0 0.0
    %888 = vmatpush1.msra.mxu0 0.0
    %889 = vmatprep.subr.mxu0 0.0
    %890 = vmatpush1.msra.mxu0 0.0
    %891 = vmatprep.subr.mxu0 0.0
    %892 = vmatpush1.msra.mxu0 0.0
    %893 = vmatprep.subr.mxu0 0.0
    %894 = vmatpush1.msra.mxu0 0.0
    %895 = vmatprep.subr.mxu0 0.0
    %896 = vmatpush1.msra.mxu0 0.0
    %897 = vmatprep.subr.mxu0 0.0
    %898 = vmatpush1.msra.mxu0 0.0
    %899 = vmatprep.subr.mxu0 0.0
    %900 = vmatpush1.msra.mxu0 0.0
    %901 = vmatprep.subr.mxu0 0.0
    %902 = vmatpush1.msra.mxu0 0.0
    %903 = vmatprep.mubr.f32.mxu0 0.0
    %904 = vmatmul.mubr.f32.gmra.mrb[0].mxu0 %v837
    %v905 = vpop.f32.mrb[0].mxu0
    %v906 = vadd.f32 0.0, %v905
    %v907 = vpop.f32.mrb[0].mxu0
    %v908 = vadd.f32 0.0, %v907
    %909 = vdwg.mxu0
    %v910 = vadd.f32 %v835, %v906
    %v911 = vadd.f32 %v836, %v908
    %v912 = vxor.u32 %v910, 2147483648
    %v913 = vxor.u32 %v911, 2147483648
    %v914 = vmul.f32 %v912, 1.442695
    %v915 = vpow.pop %v914
    %v916 = vmul.f32 %v913, 1.442695
    %v917 = vpow.pop %v916
    %v918 = vadd.f32 %v915, 1.0
    %v919 = vadd.f32 %v917, 1.0
    %v920 = vrcp.pop %v918
    %v921 = vmul.f32 1.0, %v920
    %v922 = vrcp.pop %v919
    %v923 = vmul.f32 1.0, %v922
    %v924 = vtanh.pop %v911
    %v925 = vmul.f32 %v921, %v822
    %927 = vrot.lane.b32.xlu0 %v924, 64
    %v928 = vpop.permute.xlu0 %927
    %v930 = vmul.f32 %v921, %v928
    %932 = vrot.lane.b32.xlu0 %v930, 64
    %v933 = vpop.permute.xlu0 %932
    %v935 = vadd.f32 %v925, %v933
    %v936 = vtanh.pop %v935
    %938 = vrot.lane.b32.xlu0 %v936, 64
    %v939 = vpop.permute.xlu0 %938
    %v941 = vmul.f32 %v923, %v939
    %942 = vst.msk [vmem:[#allocation3 + $0x28] sm:$0xff] %vm269, %v941
    %944 = vrot.lane.b32.xlu0 %v941, 64
    %v945 = vpop.permute.xlu0 %944
    %947 = vst.msk [vmem:[#allocation3 + $0x10] sm:$0xff] %vm381, %v945
    %v948 = vld [vmem:[#allocation2 + $0x60] sm:$0xff]
    %v949 = vld [vmem:[#allocation2 + $0x68] sm:$0xff]
    %v950 = vsel %vm269, %v941, 0
    %952 = vmatprep.subr.mxu0 %v252
    %953 = vmatpush1.msra.mxu0 %v251
    %954 = vmatprep.subr.mxu0 %v254
    %955 = vmatpush1.msra.mxu0 %v253
    %956 = vmatprep.subr.mxu0 %v256
    %957 = vmatpush1.msra.mxu0 %v255
    %958 = vmatprep.subr.mxu0 %v258
    %959 = vmatpush1.msra.mxu0 %v257
    %960 = vmatprep.subr.mxu0 %v260
    %961 = vmatpush1.msra.mxu0 %v259
    %962 = vmatprep.subr.mxu0 %v262
    %963 = vmatpush1.msra.mxu0 %v261
    %964 = vmatprep.subr.mxu0 %v264
    %965 = vmatpush1.msra.mxu0 %v263
    %966 = vmatprep.subr.mxu0 %v266
    %967 = vmatpush1.msra.mxu0 %v265
    %968 = vmatprep.subr.mxu0 0.0
    %969 = vmatpush1.msra.mxu0 0.0
    %970 = vmatprep.subr.mxu0 0.0
    %971 = vmatpush1.msra.mxu0 0.0
    %972 = vmatprep.subr.mxu0 0.0
    %973 = vmatpush1.msra.mxu0 0.0
    %974 = vmatprep.subr.mxu0 0.0
    %975 = vmatpush1.msra.mxu0 0.0
    %976 = vmatprep.subr.mxu0 0.0
    %977 = vmatpush1.msra.mxu0 0.0
    %978 = vmatprep.subr.mxu0 0.0
    %979 = vmatpush1.msra.mxu0 0.0
    %980 = vmatprep.subr.mxu0 0.0
    %981 = vmatpush1.msra.mxu0 0.0
    %982 = vmatprep.subr.mxu0 0.0
    %983 = vmatpush1.msra.mxu0 0.0
    %984 = vmatprep.subr.mxu0 0.0
    %985 = vmatpush1.msra.mxu0 0.0
    %986 = vmatprep.subr.mxu0 0.0
    %987 = vmatpush1.msra.mxu0 0.0
    %988 = vmatprep.subr.mxu0 0.0
    %989 = vmatpush1.msra.mxu0 0.0
    %990 = vmatprep.subr.mxu0 0.0
    %991 = vmatpush1.msra.mxu0 0.0
    %992 = vmatprep.subr.mxu0 0.0
    %993 = vmatpush1.msra.mxu0 0.0
    %994 = vmatprep.subr.mxu0 0.0
    %995 = vmatpush1.msra.mxu0 0.0
    %996 = vmatprep.subr.mxu0 0.0
    %997 = vmatpush1.msra.mxu0 0.0
    %998 = vmatprep.subr.mxu0 0.0
    %999 = vmatpush1.msra.mxu0 0.0
    %1000 = vmatprep.subr.mxu0 0.0
    %1001 = vmatpush1.msra.mxu0 0.0
    %1002 = vmatprep.subr.mxu0 0.0
    %1003 = vmatpush1.msra.mxu0 0.0
    %1004 = vmatprep.subr.mxu0 0.0
    %1005 = vmatpush1.msra.mxu0 0.0
    %1006 = vmatprep.subr.mxu0 0.0
    %1007 = vmatpush1.msra.mxu0 0.0
    %1008 = vmatprep.subr.mxu0 0.0
    %1009 = vmatpush1.msra.mxu0 0.0
    %1010 = vmatprep.subr.mxu0 0.0
    %1011 = vmatpush1.msra.mxu0 0.0
    %1012 = vmatprep.subr.mxu0 0.0
    %1013 = vmatpush1.msra.mxu0 0.0
    %1014 = vmatprep.subr.mxu0 0.0
    %1015 = vmatpush1.msra.mxu0 0.0
    %1016 = vmatprep.mubr.f32.mxu0 0.0
    %1017 = vmatmul.mubr.f32.gmra.mrb[0].mxu0 %v950
    %v1018 = vpop.f32.mrb[0].mxu0
    %v1019 = vadd.f32 0.0, %v1018
    %v1020 = vpop.f32.mrb[0].mxu0
    %v1021 = vadd.f32 0.0, %v1020
    %1022 = vdwg.mxu0
    %v1023 = vadd.f32 %v948, %v1019
    %v1024 = vadd.f32 %v949, %v1021
    %v1025 = vxor.u32 %v1023, 2147483648
    %v1026 = vxor.u32 %v1024, 2147483648
    %v1027 = vmul.f32 %v1025, 1.442695
    %v1028 = vpow.pop %v1027
    %v1029 = vmul.f32 %v1026, 1.442695
    %v1030 = vpow.pop %v1029
    %v1031 = vadd.f32 %v1028, 1.0
    %v1032 = vadd.f32 %v1030, 1.0
    %v1033 = vrcp.pop %v1031
    %v1034 = vmul.f32 1.0, %v1033
    %v1035 = vrcp.pop %v1032
    %v1036 = vmul.f32 1.0, %v1035
    %v1037 = vtanh.pop %v1024
    %v1038 = vmul.f32 %v1034, %v935
    %1040 = vrot.lane.b32.xlu0 %v1037, 64
    %v1041 = vpop.permute.xlu0 %1040
    %v1043 = vmul.f32 %v1034, %v1041
    %1045 = vrot.lane.b32.xlu0 %v1043, 64
    %v1046 = vpop.permute.xlu0 %1045
    %v1048 = vadd.f32 %v1038, %v1046
    %v1049 = vtanh.pop %v1048
    %1051 = vrot.lane.b32.xlu0 %v1049, 64
    %v1052 = vpop.permute.xlu0 %1051
    %v1054 = vmul.f32 %v1036, %v1052
    %1055 = vst.msk [vmem:[#allocation3 + $0x30] sm:$0xff] %vm269, %v1054
    %1057 = vrot.lane.b32.xlu0 %v1054, 64
    %v1058 = vpop.permute.xlu0 %1057
    %1060 = vst.msk [vmem:[#allocation3 + $0x8] sm:$0xff] %vm381, %v1058
    %v1061 = vld [vmem:[#allocation2 + $0x70] sm:$0xff]
    %v1062 = vld [vmem:[#allocation2 + $0x78] sm:$0xff]
    %v1063 = vsel %vm269, %v1054, 0
    %1065 = vmatprep.subr.mxu0 %v252
    %1066 = vmatpush1.msra.mxu0 %v251
    %1067 = vmatprep.subr.mxu0 %v254
    %1068 = vmatpush1.msra.mxu0 %v253
    %1069 = vmatprep.subr.mxu0 %v256
    %1070 = vmatpush1.msra.mxu0 %v255
    %1071 = vmatprep.subr.mxu0 %v258
    %1072 = vmatpush1.msra.mxu0 %v257
    %1073 = vmatprep.subr.mxu0 %v260
    %1074 = vmatpush1.msra.mxu0 %v259
    %1075 = vmatprep.subr.mxu0 %v262
    %1076 = vmatpush1.msra.mxu0 %v261
    %1077 = vmatprep.subr.mxu0 %v264
    %1078 = vmatpush1.msra.mxu0 %v263
    %1079 = vmatprep.subr.mxu0 %v266
    %1080 = vmatpush1.msra.mxu0 %v265
    %1081 = vmatprep.subr.mxu0 0.0
    %1082 = vmatpush1.msra.mxu0 0.0
    %1083 = vmatprep.subr.mxu0 0.0
    %1084 = vmatpush1.msra.mxu0 0.0
    %1085 = vmatprep.subr.mxu0 0.0
    %1086 = vmatpush1.msra.mxu0 0.0
    %1087 = vmatprep.subr.mxu0 0.0
    %1088 = vmatpush1.msra.mxu0 0.0
    %1089 = vmatprep.subr.mxu0 0.0
    %1090 = vmatpush1.msra.mxu0 0.0
    %1091 = vmatprep.subr.mxu0 0.0
    %1092 = vmatpush1.msra.mxu0 0.0
    %1093 = vmatprep.subr.mxu0 0.0
    %1094 = vmatpush1.msra.mxu0 0.0
    %1095 = vmatprep.subr.mxu0 0.0
    %1096 = vmatpush1.msra.mxu0 0.0
    %1097 = vmatprep.subr.mxu0 0.0
    %1098 = vmatpush1.msra.mxu0 0.0
    %1099 = vmatprep.subr.mxu0 0.0
    %1100 = vmatpush1.msra.mxu0 0.0
    %1101 = vmatprep.subr.mxu0 0.0
    %1102 = vmatpush1.msra.mxu0 0.0
    %1103 = vmatprep.subr.mxu0 0.0
    %1104 = vmatpush1.msra.mxu0 0.0
    %1105 = vmatprep.subr.mxu0 0.0
    %1106 = vmatpush1.msra.mxu0 0.0
    %1107 = vmatprep.subr.mxu0 0.0
    %1108 = vmatpush1.msra.mxu0 0.0
    %1109 = vmatprep.subr.mxu0 0.0
    %1110 = vmatpush1.msra.mxu0 0.0
    %1111 = vmatprep.subr.mxu0 0.0
    %1112 = vmatpush1.msra.mxu0 0.0
    %1113 = vmatprep.subr.mxu0 0.0
    %1114 = vmatpush1.msra.mxu0 0.0
    %1115 = vmatprep.subr.mxu0 0.0
    %1116 = vmatpush1.msra.mxu0 0.0
    %1117 = vmatprep.subr.mxu0 0.0
    %1118 = vmatpush1.msra.mxu0 0.0
    %1119 = vmatprep.subr.mxu0 0.0
    %1120 = vmatpush1.msra.mxu0 0.0
    %1121 = vmatprep.subr.mxu0 0.0
    %1122 = vmatpush1.msra.mxu0 0.0
    %1123 = vmatprep.subr.mxu0 0.0
    %1124 = vmatpush1.msra.mxu0 0.0
    %1125 = vmatprep.subr.mxu0 0.0
    %1126 = vmatpush1.msra.mxu0 0.0
    %1127 = vmatprep.subr.mxu0 0.0
    %1128 = vmatpush1.msra.mxu0 0.0
    %1129 = vmatprep.mubr.f32.mxu0 0.0
    %1130 = vmatmul.mubr.f32.gmra.mrb[0].mxu0 %v1063
    %v1131 = vpop.f32.mrb[0].mxu0
    %v1132 = vadd.f32 0.0, %v1131
    %v1133 = vpop.f32.mrb[0].mxu0
    %v1134 = vadd.f32 0.0, %v1133
    %1135 = vdwg.mxu0
    %v1136 = vadd.f32 %v1061, %v1132
    %v1137 = vadd.f32 %v1062, %v1134
    %v1138 = vxor.u32 %v1136, 2147483648
    %v1139 = vxor.u32 %v1137, 2147483648
    %v1140 = vmul.f32 %v1138, 1.442695
    %v1141 = vpow.pop %v1140
    %v1142 = vmul.f32 %v1139, 1.442695
    %v1143 = vpow.pop %v1142
    %v1144 = vadd.f32 %v1141, 1.0
    %v1145 = vadd.f32 %v1143, 1.0
    %v1146 = vrcp.pop %v1144
    %v1147 = vmul.f32 1.0, %v1146
    %v1148 = vrcp.pop %v1145
    %v1149 = vmul.f32 1.0, %v1148
    %v1150 = vtanh.pop %v1137
    %v1151 = vmul.f32 %v1147, %v1048
    %1153 = vrot.lane.b32.xlu0 %v1150, 64
    %v1154 = vpop.permute.xlu0 %1153
    %v1156 = vmul.f32 %v1147, %v1154
    %1158 = vrot.lane.b32.xlu0 %v1156, 64
    %v1159 = vpop.permute.xlu0 %1158
    %v1161 = vadd.f32 %v1151, %v1159
    %v1162 = vtanh.pop %v1161
    %1164 = vrot.lane.b32.xlu0 %v1162, 64
    %v1165 = vpop.permute.xlu0 %1164
    %v1167 = vmul.f32 %v1149, %v1165
    %1168 = vst.msk [vmem:[#allocation3 + $0x38] sm:$0xff] %vm269, %v1167
    %1170 = vrot.lane.b32.xlu0 %v1167, 64
    %v1171 = vpop.permute.xlu0 %1170
    %1173 = vst.msk [vmem:[#allocation3] sm:$0xff] %vm381, %v1171
    %v1174 = vld [vmem:[#allocation3] sm:$0xff]
    %v1175 = vld [vmem:[#allocation3 + $0x8] sm:$0xff]
    %v1176 = vld [vmem:[#allocation3 + $0x10] sm:$0xff]
    %v1177 = vld [vmem:[#allocation3 + $0x18] sm:$0xff]
    %v1178 = vld [vmem:[#allocation3 + $0x20] sm:$0xff]
    %v1179 = vld [vmem:[#allocation3 + $0x28] sm:$0xff]
    %v1180 = vld [vmem:[#allocation3 + $0x30] sm:$0xff]
    %v1181 = vld [vmem:[#allocation3 + $0x38] sm:$0xff]
    %v1182 = vld [vmem:[%s4] sm:$0xff]
    %v1183 = vld [vmem:[%s4 + $0x8] sm:$0xff]
    %v1184 = vld [vmem:[%s4 + $0x10] sm:$0xff]
    %v1185 = vld [vmem:[%s4 + $0x18] sm:$0xff]
    %v1186 = vld [vmem:[%s4 + $0x20] sm:$0xff]
    %v1187 = vld [vmem:[%s4 + $0x28] sm:$0xff]
    %v1188 = vld [vmem:[%s4 + $0x30] sm:$0xff]
    %v1189 = vld [vmem:[%s4 + $0x38] sm:$0xff]
    %v1190 = vld [vmem:[%s4 + $0x40] sm:$0xff]
    %v1191 = vld [vmem:[%s4 + $0x48] sm:$0xff]
    %v1192 = vld [vmem:[%s4 + $0x50] sm:$0xff]
    %v1193 = vld [vmem:[%s4 + $0x58] sm:$0xff]
    %v1194 = vld [vmem:[%s4 + $0x60] sm:$0xff]
    %v1195 = vld [vmem:[%s4 + $0x68] sm:$0xff]
    %v1196 = vld [vmem:[%s4 + $0x70] sm:$0xff]
    %v1197 = vld [vmem:[%s4 + $0x78] sm:$0xff]
    %v1198 = vld [vmem:[%s4 + $0x80] sm:$0xff]
    %v1199 = vld [vmem:[%s4 + $0x88] sm:$0xff]
    %v1200 = vld [vmem:[%s4 + $0x90] sm:$0xff]
    %v1201 = vld [vmem:[%s4 + $0x98] sm:$0xff]
    %v1202 = vld [vmem:[%s4 + $0xa0] sm:$0xff]
    %v1203 = vld [vmem:[%s4 + $0xa8] sm:$0xff]
    %v1204 = vld [vmem:[%s4 + $0xb0] sm:$0xff]
    %v1205 = vld [vmem:[%s4 + $0xb8] sm:$0xff]
    %v1206 = vld [vmem:[%s4 + $0xc0] sm:$0xff]
    %v1207 = vld [vmem:[%s4 + $0xc8] sm:$0xff]
    %v1208 = vld [vmem:[%s4 + $0xd0] sm:$0xff]
    %v1209 = vld [vmem:[%s4 + $0xd8] sm:$0xff]
    %v1210 = vld [vmem:[%s4 + $0xe0] sm:$0xff]
    %v1211 = vld [vmem:[%s4 + $0xe8] sm:$0xff]
    %v1212 = vld [vmem:[%s4 + $0xf0] sm:$0xff]
    %v1213 = vld [vmem:[%s4 + $0xf8] sm:$0xff]
    %v1214 = vld [vmem:[%s6] sm:$0x3]
    %v1216 = vlaneseq
    %v1217 = vshrl.u32 %v1216, 7
    %v1218 = vsub.s32 0, %v1217
    %v1219 = vrot.slane %v1214, %v1218
    %v1220 = vlaneseq
    %v1221 = vshrl.u32 %v1220, 7
    %v1222 = vsub.s32 1, %v1221
    %v1223 = vrot.slane %v1214, %v1222
    %1226 = vmatprep.subr.mxu0 %v1183
    %1227 = vmatpush1.msra.mxu0 %v1182
    %1228 = vmatprep.subr.mxu0 %v1185
    %1229 = vmatpush1.msra.mxu0 %v1184
    %1230 = vmatprep.subr.mxu0 %v1187
    %1231 = vmatpush1.msra.mxu0 %v1186
    %1232 = vmatprep.subr.mxu0 %v1189
    %1233 = vmatpush1.msra.mxu0 %v1188
    %1234 = vmatprep.subr.mxu0 %v1191
    %1235 = vmatpush1.msra.mxu0 %v1190
    %1236 = vmatprep.subr.mxu0 %v1193
    %1237 = vmatpush1.msra.mxu0 %v1192
    %1238 = vmatprep.subr.mxu0 %v1195
    %1239 = vmatpush1.msra.mxu0 %v1194
    %1240 = vmatprep.subr.mxu0 %v1197
    %1241 = vmatpush1.msra.mxu0 %v1196
    %1242 = vmatprep.subr.mxu0 %v1199
    %1243 = vmatpush1.msra.mxu0 %v1198
    %1244 = vmatprep.subr.mxu0 %v1201
    %1245 = vmatpush1.msra.mxu0 %v1200
    %1246 = vmatprep.subr.mxu0 %v1203
    %1247 = vmatpush1.msra.mxu0 %v1202
    %1248 = vmatprep.subr.mxu0 %v1205
    %1249 = vmatpush1.msra.mxu0 %v1204
    %1250 = vmatprep.subr.mxu0 %v1207
    %1251 = vmatpush1.msra.mxu0 %v1206
    %1252 = vmatprep.subr.mxu0 %v1209
    %1253 = vmatpush1.msra.mxu0 %v1208
    %1254 = vmatprep.subr.mxu0 %v1211
    %1255 = vmatpush1.msra.mxu0 %v1210
    %1256 = vmatprep.subr.mxu0 %v1213
    %1257 = vmatpush1.msra.mxu0 %v1212
    %1258 = vmatprep.subr.mxu0 0.0
    %1259 = vmatpush1.msra.mxu0 0.0
    %1260 = vmatprep.subr.mxu0 0.0
    %1261 = vmatpush1.msra.mxu0 0.0
    %1262 = vmatprep.subr.mxu0 0.0
    %1263 = vmatpush1.msra.mxu0 0.0
    %1264 = vmatprep.subr.mxu0 0.0
    %1265 = vmatpush1.msra.mxu0 0.0
    %1266 = vmatprep.subr.mxu0 0.0
    %1267 = vmatpush1.msra.mxu0 0.0
    %1268 = vmatprep.subr.mxu0 0.0
    %1269 = vmatpush1.msra.mxu0 0.0
    %1270 = vmatprep.subr.mxu0 0.0
    %1271 = vmatpush1.msra.mxu0 0.0
    %1272 = vmatprep.subr.mxu0 0.0
    %1273 = vmatpush1.msra.mxu0 0.0
    %1274 = vmatprep.subr.mxu0 0.0
    %1275 = vmatpush1.msra.mxu0 0.0
    %1276 = vmatprep.subr.mxu0 0.0
    %1277 = vmatpush1.msra.mxu0 0.0
    %1278 = vmatprep.subr.mxu0 0.0
    %1279 = vmatpush1.msra.mxu0 0.0
    %1280 = vmatprep.subr.mxu0 0.0
    %1281 = vmatpush1.msra.mxu0 0.0
    %1282 = vmatprep.subr.mxu0 0.0
    %1283 = vmatpush1.msra.mxu0 0.0
    %1284 = vmatprep.subr.mxu0 0.0
    %1285 = vmatpush1.msra.mxu0 0.0
    %1286 = vmatprep.subr.mxu0 0.0
    %1287 = vmatpush1.msra.mxu0 0.0
    %1288 = vmatprep.subr.mxu0 0.0
    %1289 = vmatpush1.msra.mxu0 0.0
    %1290 = vmatprep.mubr.f32.mxu0 0.0
    %1291 = vmatmul.mubr.f32.gmra.mrb[0].mxu0 %v1174
    %v1292 = vpop.f32.mrb[0].mxu0
    %v1293 = vadd.f32 %v1219, %v1292
    %v1294 = vpop.f32.mrb[0].mxu0
    %v1295 = vadd.f32 %v1223, %v1294
    %1296 = vmatprep.mubr.f32.mxu0 0.0
    %1297 = vmatmul.mubr.f32.gmra.mrb[0].mxu0 %v1175
    %v1298 = vpop.f32.mrb[0].mxu0
    %v1299 = vadd.f32 %v1219, %v1298
    %v1300 = vpop.f32.mrb[0].mxu0
    %v1301 = vadd.f32 %v1223, %v1300
    %1302 = vmatprep.mubr.f32.mxu0 0.0
    %1303 = vmatmul.mubr.f32.gmra.mrb[0].mxu0 %v1176
    %v1304 = vpop.f32.mrb[0].mxu0
    %v1305 = vadd.f32 %v1219, %v1304
    %v1306 = vpop.f32.mrb[0].mxu0
    %v1307 = vadd.f32 %v1223, %v1306
    %1308 = vmatprep.mubr.f32.mxu0 0.0
    %1309 = vmatmul.mubr.f32.gmra.mrb[0].mxu0 %v1177
    %v1310 = vpop.f32.mrb[0].mxu0
    %v1311 = vadd.f32 %v1219, %v1310
    %v1312 = vpop.f32.mrb[0].mxu0
    %v1313 = vadd.f32 %v1223, %v1312
    %1314 = vmatprep.mubr.f32.mxu0 0.0
    %1315 = vmatmul.mubr.f32.gmra.mrb[0].mxu0 %v1178
    %v1316 = vpop.f32.mrb[0].mxu0
    %v1317 = vadd.f32 %v1219, %v1316
    %v1318 = vpop.f32.mrb[0].mxu0
    %v1319 = vadd.f32 %v1223, %v1318
    %1320 = vmatprep.mubr.f32.mxu0 0.0
    %1321 = vmatmul.mubr.f32.gmra.mrb[0].mxu0 %v1179
    %v1322 = vpop.f32.mrb[0].mxu0
    %v1323 = vadd.f32 %v1219, %v1322
    %v1324 = vpop.f32.mrb[0].mxu0
    %v1325 = vadd.f32 %v1223, %v1324
    %1326 = vmatprep.mubr.f32.mxu0 0.0
    %1327 = vmatmul.mubr.f32.gmra.mrb[0].mxu0 %v1180
    %v1328 = vpop.f32.mrb[0].mxu0
    %v1329 = vadd.f32 %v1219, %v1328
    %v1330 = vpop.f32.mrb[0].mxu0
    %v1331 = vadd.f32 %v1223, %v1330
    %1332 = vmatprep.mubr.f32.mxu0 0.0
    %1333 = vmatmul.mubr.f32.gmra.mrb[0].mxu0 %v1181
    %v1334 = vpop.f32.mrb[0].mxu0
    %v1335 = vadd.f32 %v1219, %v1334
    %v1336 = vpop.f32.mrb[0].mxu0
    %v1337 = vadd.f32 %v1223, %v1336
    %1338 = vdwg.mxu0
    %1339 = vst [vmem:[#allocation2] sm:$0xff] %v1293
    %1340 = vst [vmem:[#allocation2 + $0x8] sm:$0xff] %v1295
    %1341 = vst [vmem:[#allocation2 + $0x10] sm:$0xff] %v1299
    %1342 = vst [vmem:[#allocation2 + $0x18] sm:$0xff] %v1301
    %1343 = vst [vmem:[#allocation2 + $0x20] sm:$0xff] %v1305
    %1344 = vst [vmem:[#allocation2 + $0x28] sm:$0xff] %v1307
    %1345 = vst [vmem:[#allocation2 + $0x30] sm:$0xff] %v1311
    %1346 = vst [vmem:[#allocation2 + $0x38] sm:$0xff] %v1313
    %1347 = vst [vmem:[#allocation2 + $0x40] sm:$0xff] %v1317
    %1348 = vst [vmem:[#allocation2 + $0x48] sm:$0xff] %v1319
    %1349 = vst [vmem:[#allocation2 + $0x50] sm:$0xff] %v1323
    %1350 = vst [vmem:[#allocation2 + $0x58] sm:$0xff] %v1325
    %1351 = vst [vmem:[#allocation2 + $0x60] sm:$0xff] %v1329
    %1352 = vst [vmem:[#allocation2 + $0x68] sm:$0xff] %v1331
    %1353 = vst [vmem:[#allocation2 + $0x70] sm:$0xff] %v1335
    %1354 = vst [vmem:[#allocation2 + $0x78] sm:$0xff] %v1337
    %v1355 = vld [vmem:[#allocation7] sm:$0xff]
    %v1356 = vld [vmem:[#allocation7 + $0x8] sm:$0xff]
    %v1357 = vld [vmem:[#allocation7 + $0x10] sm:$0xff]
    %v1358 = vld [vmem:[#allocation7 + $0x18] sm:$0xff]
    %v1359 = vld [vmem:[#allocation7 + $0x20] sm:$0xff]
    %v1360 = vld [vmem:[#allocation7 + $0x28] sm:$0xff]
    %v1361 = vld [vmem:[#allocation7 + $0x30] sm:$0xff]
    %v1362 = vld [vmem:[#allocation7 + $0x38] sm:$0xff]
    %v1363 = vld [vmem:[#allocation7 + $0x40] sm:$0xff]
    %v1364 = vld [vmem:[#allocation7 + $0x48] sm:$0xff]
    %v1365 = vld [vmem:[#allocation7 + $0x50] sm:$0xff]
    %v1366 = vld [vmem:[#allocation7 + $0x58] sm:$0xff]
    %v1367 = vld [vmem:[#allocation7 + $0x60] sm:$0xff]
    %v1368 = vld [vmem:[#allocation7 + $0x68] sm:$0xff]
    %v1369 = vld [vmem:[#allocation7 + $0x70] sm:$0xff]
    %v1370 = vld [vmem:[#allocation7 + $0x78] sm:$0xff]
    %v1371 = vld [vmem:[#allocation2] sm:$0xff]
    %v1372 = vld [vmem:[#allocation2 + $0x8] sm:$0xff]
    %1373 = vmatprep.subr.mxu0 %v1356
    %1374 = vmatpush1.msra.mxu0 %v1355
    %1375 = vmatprep.subr.mxu0 %v1358
    %1376 = vmatpush1.msra.mxu0 %v1357
    %1377 = vmatprep.subr.mxu0 %v1360
    %1378 = vmatpush1.msra.mxu0 %v1359
    %1379 = vmatprep.subr.mxu0 %v1362
    %1380 = vmatpush1.msra.mxu0 %v1361
    %1381 = vmatprep.subr.mxu0 %v1364
    %1382 = vmatpush1.msra.mxu0 %v1363
    %1383 = vmatprep.subr.mxu0 %v1366
    %1384 = vmatpush1.msra.mxu0 %v1365
    %1385 = vmatprep.subr.mxu0 %v1368
    %1386 = vmatpush1.msra.mxu0 %v1367
    %1387 = vmatprep.subr.mxu0 %v1370
    %1388 = vmatpush1.msra.mxu0 %v1369
    %1389 = vmatprep.subr.mxu0 0.0
    %1390 = vmatpush1.msra.mxu0 0.0
    %1391 = vmatprep.subr.mxu0 0.0
    %1392 = vmatpush1.msra.mxu0 0.0
    %1393 = vmatprep.subr.mxu0 0.0
    %1394 = vmatpush1.msra.mxu0 0.0
    %1395 = vmatprep.subr.mxu0 0.0
    %1396 = vmatpush1.msra.mxu0 0.0
    %1397 = vmatprep.subr.mxu0 0.0
    %1398 = vmatpush1.msra.mxu0 0.0
    %1399 = vmatprep.subr.mxu0 0.0
    %1400 = vmatpush1.msra.mxu0 0.0
    %1401 = vmatprep.subr.mxu0 0.0
    %1402 = vmatpush1.msra.mxu0 0.0
    %1403 = vmatprep.subr.mxu0 0.0
    %1404 = vmatpush1.msra.mxu0 0.0
    %1405 = vmatprep.subr.mxu0 0.0
    %1406 = vmatpush1.msra.mxu0 0.0
    %1407 = vmatprep.subr.mxu0 0.0
    %1408 = vmatpush1.msra.mxu0 0.0
    %1409 = vmatprep.subr.mxu0 0.0
    %1410 = vmatpush1.msra.mxu0 0.0
    %1411 = vmatprep.subr.mxu0 0.0
    %1412 = vmatpush1.msra.mxu0 0.0
    %1413 = vmatprep.subr.mxu0 0.0
    %1414 = vmatpush1.msra.mxu0 0.0
    %1415 = vmatprep.subr.mxu0 0.0
    %1416 = vmatpush1.msra.mxu0 0.0
    %1417 = vmatprep.subr.mxu0 0.0
    %1418 = vmatpush1.msra.mxu0 0.0
    %1419 = vmatprep.subr.mxu0 0.0
    %1420 = vmatpush1.msra.mxu0 0.0
    %1421 = vmatprep.subr.mxu0 0.0
    %1422 = vmatpush1.msra.mxu0 0.0
    %1423 = vmatprep.subr.mxu0 0.0
    %1424 = vmatpush1.msra.mxu0 0.0
    %1425 = vmatprep.subr.mxu0 0.0
    %1426 = vmatpush1.msra.mxu0 0.0
    %1427 = vmatprep.subr.mxu0 0.0
    %1428 = vmatpush1.msra.mxu0 0.0
    %1429 = vmatprep.subr.mxu0 0.0
    %1430 = vmatpush1.msra.mxu0 0.0
    %1431 = vmatprep.subr.mxu0 0.0
    %1432 = vmatpush1.msra.mxu0 0.0
    %1433 = vmatprep.subr.mxu0 0.0
    %1434 = vmatpush1.msra.mxu0 0.0
    %1435 = vmatprep.subr.mxu0 0.0
    %1436 = vmatpush1.msra.mxu0 0.0
    %1437 = vmatprep.mubr.f32.mxu0 0.0
    %1438 = vmatmul.mubr.f32.gmra.mrb[0].mxu0 %v271
    %v1439 = vpop.f32.mrb[0].mxu0
    %v1440 = vadd.f32 0.0, %v1439
    %v1441 = vpop.f32.mrb[0].mxu0
    %v1442 = vadd.f32 0.0, %v1441
    %1443 = vdwg.mxu0
    %v1444 = vadd.f32 %v1371, %v1440
    %v1445 = vadd.f32 %v1372, %v1442
    %v1446 = vxor.u32 %v1444, 2147483648
    %v1447 = vxor.u32 %v1445, 2147483648
    %v1448 = vmul.f32 %v1446, 1.442695
    %v1449 = vpow.pop %v1448
    %v1450 = vmul.f32 %v1447, 1.442695
    %v1451 = vpow.pop %v1450
    %v1452 = vadd.f32 %v1449, 1.0
    %v1453 = vadd.f32 %v1451, 1.0
    %v1454 = vrcp.pop %v1452
    %v1455 = vmul.f32 1.0, %v1454
    %v1456 = vrcp.pop %v1453
    %v1457 = vmul.f32 1.0, %v1456
    %v1458 = vtanh.pop %v1445
    %v1459 = vmul.f32 %v1455, 0.0
    %1461 = vrot.lane.b32.xlu0 %v1458, 64
    %v1462 = vpop.permute.xlu0 %1461
    %v1464 = vmul.f32 %v1455, %v1462
    %1466 = vrot.lane.b32.xlu0 %v1464, 64
    %v1467 = vpop.permute.xlu0 %1466
    %v1469 = vadd.f32 %v1459, %v1467
    %v1470 = vtanh.pop %v1469
    %1472 = vrot.lane.b32.xlu0 %v1470, 64
    %v1473 = vpop.permute.xlu0 %1472
    %v1475 = vmul.f32 %v1457, %v1473
    %1476 = vst.msk [vmem:[#allocation3] sm:$0xff] %vm269, %v1475
    %1478 = vrot.lane.b32.xlu0 %v1475, 64
    %v1479 = vpop.permute.xlu0 %1478
    %1481 = vst.msk [vmem:[#allocation3 + $0x38] sm:$0xff] %vm381, %v1479
    %v1482 = vld [vmem:[#allocation2 + $0x10] sm:$0xff]
    %v1483 = vld [vmem:[#allocation2 + $0x18] sm:$0xff]
    %v1484 = vsel %vm269, %v1475, 0
    %1486 = vmatprep.subr.mxu0 %v1356
    %1487 = vmatpush1.msra.mxu0 %v1355
    %1488 = vmatprep.subr.mxu0 %v1358
    %1489 = vmatpush1.msra.mxu0 %v1357
    %1490 = vmatprep.subr.mxu0 %v1360
    %1491 = vmatpush1.msra.mxu0 %v1359
    %1492 = vmatprep.subr.mxu0 %v1362
    %1493 = vmatpush1.msra.mxu0 %v1361
    %1494 = vmatprep.subr.mxu0 %v1364
    %1495 = vmatpush1.msra.mxu0 %v1363
    %1496 = vmatprep.subr.mxu0 %v1366
    %1497 = vmatpush1.msra.mxu0 %v1365
    %1498 = vmatprep.subr.mxu0 %v1368
    %1499 = vmatpush1.msra.mxu0 %v1367
    %1500 = vmatprep.subr.mxu0 %v1370
    %1501 = vmatpush1.msra.mxu0 %v1369
    %1502 = vmatprep.subr.mxu0 0.0
    %1503 = vmatpush1.msra.mxu0 0.0
    %1504 = vmatprep.subr.mxu0 0.0
    %1505 = vmatpush1.msra.mxu0 0.0
    %1506 = vmatprep.subr.mxu0 0.0
    %1507 = vmatpush1.msra.mxu0 0.0
    %1508 = vmatprep.subr.mxu0 0.0
    %1509 = vmatpush1.msra.mxu0 0.0
    %1510 = vmatprep.subr.mxu0 0.0
    %1511 = vmatpush1.msra.mxu0 0.0
    %1512 = vmatprep.subr.mxu0 0.0
    %1513 = vmatpush1.msra.mxu0 0.0
    %1514 = vmatprep.subr.mxu0 0.0
    %1515 = vmatpush1.msra.mxu0 0.0
    %1516 = vmatprep.subr.mxu0 0.0
    %1517 = vmatpush1.msra.mxu0 0.0
    %1518 = vmatprep.subr.mxu0 0.0
    %1519 = vmatpush1.msra.mxu0 0.0
    %1520 = vmatprep.subr.mxu0 0.0
    %1521 = vmatpush1.msra.mxu0 0.0
    %1522 = vmatprep.subr.mxu0 0.0
    %1523 = vmatpush1.msra.mxu0 0.0
    %1524 = vmatprep.subr.mxu0 0.0
    %1525 = vmatpush1.msra.mxu0 0.0
    %1526 = vmatprep.subr.mxu0 0.0
    %1527 = vmatpush1.msra.mxu0 0.0
    %1528 = vmatprep.subr.mxu0 0.0
    %1529 = vmatpush1.msra.mxu0 0.0
    %1530 = vmatprep.subr.mxu0 0.0
    %1531 = vmatpush1.msra.mxu0 0.0
    %1532 = vmatprep.subr.mxu0 0.0
    %1533 = vmatpush1.msra.mxu0 0.0
    %1534 = vmatprep.subr.mxu0 0.0
    %1535 = vmatpush1.msra.mxu0 0.0
    %1536 = vmatprep.subr.mxu0 0.0
    %1537 = vmatpush1.msra.mxu0 0.0
    %1538 = vmatprep.subr.mxu0 0.0
    %1539 = vmatpush1.msra.mxu0 0.0
    %1540 = vmatprep.subr.mxu0 0.0
    %1541 = vmatpush1.msra.mxu0 0.0
    %1542 = vmatprep.subr.mxu0 0.0
    %1543 = vmatpush1.msra.mxu0 0.0
    %1544 = vmatprep.subr.mxu0 0.0
    %1545 = vmatpush1.msra.mxu0 0.0
    %1546 = vmatprep.subr.mxu0 0.0
    %1547 = vmatpush1.msra.mxu0 0.0
    %1548 = vmatprep.subr.mxu0 0.0
    %1549 = vmatpush1.msra.mxu0 0.0
    %1550 = vmatprep.mubr.f32.mxu0 0.0
    %1551 = vmatmul.mubr.f32.gmra.mrb[0].mxu0 %v1484
    %v1552 = vpop.f32.mrb[0].mxu0
    %v1553 = vadd.f32 0.0, %v1552
    %v1554 = vpop.f32.mrb[0].mxu0
    %v1555 = vadd.f32 0.0, %v1554
    %1556 = vdwg.mxu0
    %v1557 = vadd.f32 %v1482, %v1553
    %v1558 = vadd.f32 %v1483, %v1555
    %v1559 = vxor.u32 %v1557, 2147483648
    %v1560 = vxor.u32 %v1558, 2147483648
    %v1561 = vmul.f32 %v1559, 1.442695
    %v1562 = vpow.pop %v1561
    %v1563 = vmul.f32 %v1560, 1.442695
    %v1564 = vpow.pop %v1563
    %v1565 = vadd.f32 %v1562, 1.0
    %v1566 = vadd.f32 %v1564, 1.0
    %v1567 = vrcp.pop %v1565
    %v1568 = vmul.f32 1.0, %v1567
    %v1569 = vrcp.pop %v1566
    %v1570 = vmul.f32 1.0, %v1569
    %v1571 = vtanh.pop %v1558
    %v1572 = vmul.f32 %v1568, %v1469
    %1574 = vrot.lane.b32.xlu0 %v1571, 64
    %v1575 = vpop.permute.xlu0 %1574
    %v1577 = vmul.f32 %v1568, %v1575
    %1579 = vrot.lane.b32.xlu0 %v1577, 64
    %v1580 = vpop.permute.xlu0 %1579
    %v1582 = vadd.f32 %v1572, %v1580
    %v1583 = vtanh.pop %v1582
    %1585 = vrot.lane.b32.xlu0 %v1583, 64
    %v1586 = vpop.permute.xlu0 %1585
    %v1588 = vmul.f32 %v1570, %v1586
    %1589 = vst.msk [vmem:[#allocation3 + $0x8] sm:$0xff] %vm269, %v1588
    %1591 = vrot.lane.b32.xlu0 %v1588, 64
    %v1592 = vpop.permute.xlu0 %1591
    %1594 = vst.msk [vmem:[#allocation3 + $0x30] sm:$0xff] %vm381, %v1592
    %v1595 = vld [vmem:[#allocation2 + $0x20] sm:$0xff]
    %v1596 = vld [vmem:[#allocation2 + $0x28] sm:$0xff]
    %v1597 = vsel %vm269, %v1588, 0
    %1599 = vmatprep.subr.mxu0 %v1356
    %1600 = vmatpush1.msra.mxu0 %v1355
    %1601 = vmatprep.subr.mxu0 %v1358
    %1602 = vmatpush1.msra.mxu0 %v1357
    %1603 = vmatprep.subr.mxu0 %v1360
    %1604 = vmatpush1.msra.mxu0 %v1359
    %1605 = vmatprep.subr.mxu0 %v1362
    %1606 = vmatpush1.msra.mxu0 %v1361
    %1607 = vmatprep.subr.mxu0 %v1364
    %1608 = vmatpush1.msra.mxu0 %v1363
    %1609 = vmatprep.subr.mxu0 %v1366
    %1610 = vmatpush1.msra.mxu0 %v1365
    %1611 = vmatprep.subr.mxu0 %v1368
    %1612 = vmatpush1.msra.mxu0 %v1367
    %1613 = vmatprep.subr.mxu0 %v1370
    %1614 = vmatpush1.msra.mxu0 %v1369
    %1615 = vmatprep.subr.mxu0 0.0
    %1616 = vmatpush1.msra.mxu0 0.0
    %1617 = vmatprep.subr.mxu0 0.0
    %1618 = vmatpush1.msra.mxu0 0.0
    %1619 = vmatprep.subr.mxu0 0.0
    %1620 = vmatpush1.msra.mxu0 0.0
    %1621 = vmatprep.subr.mxu0 0.0
    %1622 = vmatpush1.msra.mxu0 0.0
    %1623 = vmatprep.subr.mxu0 0.0
    %1624 = vmatpush1.msra.mxu0 0.0
    %1625 = vmatprep.subr.mxu0 0.0
    %1626 = vmatpush1.msra.mxu0 0.0
    %1627 = vmatprep.subr.mxu0 0.0
    %1628 = vmatpush1.msra.mxu0 0.0
    %1629 = vmatprep.subr.mxu0 0.0
    %1630 = vmatpush1.msra.mxu0 0.0
    %1631 = vmatprep.subr.mxu0 0.0
    %1632 = vmatpush1.msra.mxu0 0.0
    %1633 = vmatprep.subr.mxu0 0.0
    %1634 = vmatpush1.msra.mxu0 0.0
    %1635 = vmatprep.subr.mxu0 0.0
    %1636 = vmatpush1.msra.mxu0 0.0
    %1637 = vmatprep.subr.mxu0 0.0
    %1638 = vmatpush1.msra.mxu0 0.0
    %1639 = vmatprep.subr.mxu0 0.0
    %1640 = vmatpush1.msra.mxu0 0.0
    %1641 = vmatprep.subr.mxu0 0.0
    %1642 = vmatpush1.msra.mxu0 0.0
    %1643 = vmatprep.subr.mxu0 0.0
    %1644 = vmatpush1.msra.mxu0 0.0
    %1645 = vmatprep.subr.mxu0 0.0
    %1646 = vmatpush1.msra.mxu0 0.0
    %1647 = vmatprep.subr.mxu0 0.0
    %1648 = vmatpush1.msra.mxu0 0.0
    %1649 = vmatprep.subr.mxu0 0.0
    %1650 = vmatpush1.msra.mxu0 0.0
    %1651 = vmatprep.subr.mxu0 0.0
    %1652 = vmatpush1.msra.mxu0 0.0
    %1653 = vmatprep.subr.mxu0 0.0
    %1654 = vmatpush1.msra.mxu0 0.0
    %1655 = vmatprep.subr.mxu0 0.0
    %1656 = vmatpush1.msra.mxu0 0.0
    %1657 = vmatprep.subr.mxu0 0.0
    %1658 = vmatpush1.msra.mxu0 0.0
    %1659 = vmatprep.subr.mxu0 0.0
    %1660 = vmatpush1.msra.mxu0 0.0
    %1661 = vmatprep.subr.mxu0 0.0
    %1662 = vmatpush1.msra.mxu0 0.0
    %1663 = vmatprep.mubr.f32.mxu0 0.0
    %1664 = vmatmul.mubr.f32.gmra.mrb[0].mxu0 %v1597
    %v1665 = vpop.f32.mrb[0].mxu0
    %v1666 = vadd.f32 0.0, %v1665
    %v1667 = vpop.f32.mrb[0].mxu0
    %v1668 = vadd.f32 0.0, %v1667
    %1669 = vdwg.mxu0
    %v1670 = vadd.f32 %v1595, %v1666
    %v1671 = vadd.f32 %v1596, %v1668
    %v1672 = vxor.u32 %v1670, 2147483648
    %v1673 = vxor.u32 %v1671, 2147483648
    %v1674 = vmul.f32 %v1672, 1.442695
    %v1675 = vpow.pop %v1674
    %v1676 = vmul.f32 %v1673, 1.442695
    %v1677 = vpow.pop %v1676
    %v1678 = vadd.f32 %v1675, 1.0
    %v1679 = vadd.f32 %v1677, 1.0
    %v1680 = vrcp.pop %v1678
    %v1681 = vmul.f32 1.0, %v1680
    %v1682 = vrcp.pop %v1679
    %v1683 = vmul.f32 1.0, %v1682
    %v1684 = vtanh.pop %v1671
    %v1685 = vmul.f32 %v1681, %v1582
    %1687 = vrot.lane.b32.xlu0 %v1684, 64
    %v1688 = vpop.permute.xlu0 %1687
    %v1690 = vmul.f32 %v1681, %v1688
    %1692 = vrot.lane.b32.xlu0 %v1690, 64
    %v1693 = vpop.permute.xlu0 %1692
    %v1695 = vadd.f32 %v1685, %v1693
    %v1696 = vtanh.pop %v1695
    %1698 = vrot.lane.b32.xlu0 %v1696, 64
    %v1699 = vpop.permute.xlu0 %1698
    %v1701 = vmul.f32 %v1683, %v1699
    %1702 = vst.msk [vmem:[#allocation3 + $0x10] sm:$0xff] %vm269, %v1701
    %1704 = vrot.lane.b32.xlu0 %v1701, 64
    %v1705 = vpop.permute.xlu0 %1704
    %1707 = vst.msk [vmem:[#allocation3 + $0x28] sm:$0xff] %vm381, %v1705
    %v1708 = vld [vmem:[#allocation2 + $0x30] sm:$0xff]
    %v1709 = vld [vmem:[#allocation2 + $0x38] sm:$0xff]
    %v1710 = vsel %vm269, %v1701, 0
    %1712 = vmatprep.subr.mxu0 %v1356
    %1713 = vmatpush1.msra.mxu0 %v1355
    %1714 = vmatprep.subr.mxu0 %v1358
    %1715 = vmatpush1.msra.mxu0 %v1357
    %1716 = vmatprep.subr.mxu0 %v1360
    %1717 = vmatpush1.msra.mxu0 %v1359
    %1718 = vmatprep.subr.mxu0 %v1362
    %1719 = vmatpush1.msra.mxu0 %v1361
    %1720 = vmatprep.subr.mxu0 %v1364
    %1721 = vmatpush1.msra.mxu0 %v1363
    %1722 = vmatprep.subr.mxu0 %v1366
    %1723 = vmatpush1.msra.mxu0 %v1365
    %1724 = vmatprep.subr.mxu0 %v1368
    %1725 = vmatpush1.msra.mxu0 %v1367
    %1726 = vmatprep.subr.mxu0 %v1370
    %1727 = vmatpush1.msra.mxu0 %v1369
    %1728 = vmatprep.subr.mxu0 0.0
    %1729 = vmatpush1.msra.mxu0 0.0
    %1730 = vmatprep.subr.mxu0 0.0
    %1731 = vmatpush1.msra.mxu0 0.0
    %1732 = vmatprep.subr.mxu0 0.0
    %1733 = vmatpush1.msra.mxu0 0.0
    %1734 = vmatprep.subr.mxu0 0.0
    %1735 = vmatpush1.msra.mxu0 0.0
    %1736 = vmatprep.subr.mxu0 0.0
    %1737 = vmatpush1.msra.mxu0 0.0
    %1738 = vmatprep.subr.mxu0 0.0
    %1739 = vmatpush1.msra.mxu0 0.0
    %1740 = vmatprep.subr.mxu0 0.0
    %1741 = vmatpush1.msra.mxu0 0.0
    %1742 = vmatprep.subr.mxu0 0.0
    %1743 = vmatpush1.msra.mxu0 0.0
    %1744 = vmatprep.subr.mxu0 0.0
    %1745 = vmatpush1.msra.mxu0 0.0
    %1746 = vmatprep.subr.mxu0 0.0
    %1747 = vmatpush1.msra.mxu0 0.0
    %1748 = vmatprep.subr.mxu0 0.0
    %1749 = vmatpush1.msra.mxu0 0.0
    %1750 = vmatprep.subr.mxu0 0.0
    %1751 = vmatpush1.msra.mxu0 0.0
    %1752 = vmatprep.subr.mxu0 0.0
    %1753 = vmatpush1.msra.mxu0 0.0
    %1754 = vmatprep.subr.mxu0 0.0
    %1755 = vmatpush1.msra.mxu0 0.0
    %1756 = vmatprep.subr.mxu0 0.0
    %1757 = vmatpush1.msra.mxu0 0.0
    %1758 = vmatprep.subr.mxu0 0.0
    %1759 = vmatpush1.msra.mxu0 0.0
    %1760 = vmatprep.subr.mxu0 0.0
    %1761 = vmatpush1.msra.mxu0 0.0
    %1762 = vmatprep.subr.mxu0 0.0
    %1763 = vmatpush1.msra.mxu0 0.0
    %1764 = vmatprep.subr.mxu0 0.0
    %1765 = vmatpush1.msra.mxu0 0.0
    %1766 = vmatprep.subr.mxu0 0.0
    %1767 = vmatpush1.msra.mxu0 0.0
    %1768 = vmatprep.subr.mxu0 0.0
    %1769 = vmatpush1.msra.mxu0 0.0
    %1770 = vmatprep.subr.mxu0 0.0
    %1771 = vmatpush1.msra.mxu0 0.0
    %1772 = vmatprep.subr.mxu0 0.0
    %1773 = vmatpush1.msra.mxu0 0.0
    %1774 = vmatprep.subr.mxu0 0.0
    %1775 = vmatpush1.msra.mxu0 0.0
    %1776 = vmatprep.mubr.f32.mxu0 0.0
    %1777 = vmatmul.mubr.f32.gmra.mrb[0].mxu0 %v1710
    %v1778 = vpop.f32.mrb[0].mxu0
    %v1779 = vadd.f32 0.0, %v1778
    %v1780 = vpop.f32.mrb[0].mxu0
    %v1781 = vadd.f32 0.0, %v1780
    %1782 = vdwg.mxu0
    %v1783 = vadd.f32 %v1708, %v1779
    %v1784 = vadd.f32 %v1709, %v1781
    %v1785 = vxor.u32 %v1783, 2147483648
    %v1786 = vxor.u32 %v1784, 2147483648
    %v1787 = vmul.f32 %v1785, 1.442695
    %v1788 = vpow.pop %v1787
    %v1789 = vmul.f32 %v1786, 1.442695
    %v1790 = vpow.pop %v1789
    %v1791 = vadd.f32 %v1788, 1.0
    %v1792 = vadd.f32 %v1790, 1.0
    %v1793 = vrcp.pop %v1791
    %v1794 = vmul.f32 1.0, %v1793
    %v1795 = vrcp.pop %v1792
    %v1796 = vmul.f32 1.0, %v1795
    %v1797 = vtanh.pop %v1784
    %v1798 = vmul.f32 %v1794, %v1695
    %1800 = vrot.lane.b32.xlu0 %v1797, 64
    %v1801 = vpop.permute.xlu0 %1800
    %v1803 = vmul.f32 %v1794, %v1801
    %1805 = vrot.lane.b32.xlu0 %v1803, 64
    %v1806 = vpop.permute.xlu0 %1805
    %v1808 = vadd.f32 %v1798, %v1806
    %v1809 = vtanh.pop %v1808
    %1811 = vrot.lane.b32.xlu0 %v1809, 64
    %v1812 = vpop.permute.xlu0 %1811
    %v1814 = vmul.f32 %v1796, %v1812
    %1815 = vst.msk [vmem:[#allocation3 + $0x18] sm:$0xff] %vm269, %v1814
    %1817 = vrot.lane.b32.xlu0 %v1814, 64
    %v1818 = vpop.permute.xlu0 %1817
    %1820 = vst.msk [vmem:[#allocation3 + $0x20] sm:$0xff] %vm381, %v1818
    %v1821 = vld [vmem:[#allocation2 + $0x40] sm:$0xff]
    %v1822 = vld [vmem:[#allocation2 + $0x48] sm:$0xff]
    %v1823 = vsel %vm269, %v1814, 0
    %1825 = vmatprep.subr.mxu0 %v1356
    %1826 = vmatpush1.msra.mxu0 %v1355
    %1827 = vmatprep.subr.mxu0 %v1358
    %1828 = vmatpush1.msra.mxu0 %v1357
    %1829 = vmatprep.subr.mxu0 %v1360
    %1830 = vmatpush1.msra.mxu0 %v1359
    %1831 = vmatprep.subr.mxu0 %v1362
    %1832 = vmatpush1.msra.mxu0 %v1361
    %1833 = vmatprep.subr.mxu0 %v1364
    %1834 = vmatpush1.msra.mxu0 %v1363
    %1835 = vmatprep.subr.mxu0 %v1366
    %1836 = vmatpush1.msra.mxu0 %v1365
    %1837 = vmatprep.subr.mxu0 %v1368
    %1838 = vmatpush1.msra.mxu0 %v1367
    %1839 = vmatprep.subr.mxu0 %v1370
    %1840 = vmatpush1.msra.mxu0 %v1369
    %1841 = vmatprep.subr.mxu0 0.0
    %1842 = vmatpush1.msra.mxu0 0.0
    %1843 = vmatprep.subr.mxu0 0.0
    %1844 = vmatpush1.msra.mxu0 0.0
    %1845 = vmatprep.subr.mxu0 0.0
    %1846 = vmatpush1.msra.mxu0 0.0
    %1847 = vmatprep.subr.mxu0 0.0
    %1848 = vmatpush1.msra.mxu0 0.0
    %1849 = vmatprep.subr.mxu0 0.0
    %1850 = vmatpush1.msra.mxu0 0.0
    %1851 = vmatprep.subr.mxu0 0.0
    %1852 = vmatpush1.msra.mxu0 0.0
    %1853 = vmatprep.subr.mxu0 0.0
    %1854 = vmatpush1.msra.mxu0 0.0
    %1855 = vmatprep.subr.mxu0 0.0
    %1856 = vmatpush1.msra.mxu0 0.0
    %1857 = vmatprep.subr.mxu0 0.0
    %1858 = vmatpush1.msra.mxu0 0.0
    %1859 = vmatprep.subr.mxu0 0.0
    %1860 = vmatpush1.msra.mxu0 0.0
    %1861 = vmatprep.subr.mxu0 0.0
    %1862 = vmatpush1.msra.mxu0 0.0
    %1863 = vmatprep.subr.mxu0 0.0
    %1864 = vmatpush1.msra.mxu0 0.0
    %1865 = vmatprep.subr.mxu0 0.0
    %1866 = vmatpush1.msra.mxu0 0.0
    %1867 = vmatprep.subr.mxu0 0.0
    %1868 = vmatpush1.msra.mxu0 0.0
    %1869 = vmatprep.subr.mxu0 0.0
    %1870 = vmatpush1.msra.mxu0 0.0
    %1871 = vmatprep.subr.mxu0 0.0
    %1872 = vmatpush1.msra.mxu0 0.0
    %1873 = vmatprep.subr.mxu0 0.0
    %1874 = vmatpush1.msra.mxu0 0.0
    %1875 = vmatprep.subr.mxu0 0.0
    %1876 = vmatpush1.msra.mxu0 0.0
    %1877 = vmatprep.subr.mxu0 0.0
    %1878 = vmatpush1.msra.mxu0 0.0
    %1879 = vmatprep.subr.mxu0 0.0
    %1880 = vmatpush1.msra.mxu0 0.0
    %1881 = vmatprep.subr.mxu0 0.0
    %1882 = vmatpush1.msra.mxu0 0.0
    %1883 = vmatprep.subr.mxu0 0.0
    %1884 = vmatpush1.msra.mxu0 0.0
    %1885 = vmatprep.subr.mxu0 0.0
    %1886 = vmatpush1.msra.mxu0 0.0
    %1887 = vmatprep.subr.mxu0 0.0
    %1888 = vmatpush1.msra.mxu0 0.0
    %1889 = vmatprep.mubr.f32.mxu0 0.0
    %1890 = vmatmul.mubr.f32.gmra.mrb[0].mxu0 %v1823
    %v1891 = vpop.f32.mrb[0].mxu0
    %v1892 = vadd.f32 0.0, %v1891
    %v1893 = vpop.f32.mrb[0].mxu0
    %v1894 = vadd.f32 0.0, %v1893
    %1895 = vdwg.mxu0
    %v1896 = vadd.f32 %v1821, %v1892
    %v1897 = vadd.f32 %v1822, %v1894
    %v1898 = vxor.u32 %v1896, 2147483648
    %v1899 = vxor.u32 %v1897, 2147483648
    %v1900 = vmul.f32 %v1898, 1.442695
    %v1901 = vpow.pop %v1900
    %v1902 = vmul.f32 %v1899, 1.442695
    %v1903 = vpow.pop %v1902
    %v1904 = vadd.f32 %v1901, 1.0
    %v1905 = vadd.f32 %v1903, 1.0
    %v1906 = vrcp.pop %v1904
    %v1907 = vmul.f32 1.0, %v1906
    %v1908 = vrcp.pop %v1905
    %v1909 = vmul.f32 1.0, %v1908
    %v1910 = vtanh.pop %v1897
    %v1911 = vmul.f32 %v1907, %v1808
    %1913 = vrot.lane.b32.xlu0 %v1910, 64
    %v1914 = vpop.permute.xlu0 %1913
    %v1916 = vmul.f32 %v1907, %v1914
    %1918 = vrot.lane.b32.xlu0 %v1916, 64
    %v1919 = vpop.permute.xlu0 %1918
    %v1921 = vadd.f32 %v1911, %v1919
    %v1922 = vtanh.pop %v1921
    %1924 = vrot.lane.b32.xlu0 %v1922, 64
    %v1925 = vpop.permute.xlu0 %1924
    %v1927 = vmul.f32 %v1909, %v1925
    %1928 = vst.msk [vmem:[#allocation3 + $0x20] sm:$0xff] %vm269, %v1927
    %1930 = vrot.lane.b32.xlu0 %v1927, 64
    %v1931 = vpop.permute.xlu0 %1930
    %1933 = vst.msk [vmem:[#allocation3 + $0x18] sm:$0xff] %vm381, %v1931
    %v1934 = vld [vmem:[#allocation2 + $0x50] sm:$0xff]
    %v1935 = vld [vmem:[#allocation2 + $0x58] sm:$0xff]
    %v1936 = vsel %vm269, %v1927, 0
    %1938 = vmatprep.subr.mxu0 %v1356
    %1939 = vmatpush1.msra.mxu0 %v1355
    %1940 = vmatprep.subr.mxu0 %v1358
    %1941 = vmatpush1.msra.mxu0 %v1357
    %1942 = vmatprep.subr.mxu0 %v1360
    %1943 = vmatpush1.msra.mxu0 %v1359
    %1944 = vmatprep.subr.mxu0 %v1362
    %1945 = vmatpush1.msra.mxu0 %v1361
    %1946 = vmatprep.subr.mxu0 %v1364
    %1947 = vmatpush1.msra.mxu0 %v1363
    %1948 = vmatprep.subr.mxu0 %v1366
    %1949 = vmatpush1.msra.mxu0 %v1365
    %1950 = vmatprep.subr.mxu0 %v1368
    %1951 = vmatpush1.msra.mxu0 %v1367
    %1952 = vmatprep.subr.mxu0 %v1370
    %1953 = vmatpush1.msra.mxu0 %v1369
    %1954 = vmatprep.subr.mxu0 0.0
    %1955 = vmatpush1.msra.mxu0 0.0
    %1956 = vmatprep.subr.mxu0 0.0
    %1957 = vmatpush1.msra.mxu0 0.0
    %1958 = vmatprep.subr.mxu0 0.0
    %1959 = vmatpush1.msra.mxu0 0.0
    %1960 = vmatprep.subr.mxu0 0.0
    %1961 = vmatpush1.msra.mxu0 0.0
    %1962 = vmatprep.subr.mxu0 0.0
    %1963 = vmatpush1.msra.mxu0 0.0
    %1964 = vmatprep.subr.mxu0 0.0
    %1965 = vmatpush1.msra.mxu0 0.0
    %1966 = vmatprep.subr.mxu0 0.0
    %1967 = vmatpush1.msra.mxu0 0.0
    %1968 = vmatprep.subr.mxu0 0.0
    %1969 = vmatpush1.msra.mxu0 0.0
    %1970 = vmatprep.subr.mxu0 0.0
    %1971 = vmatpush1.msra.mxu0 0.0
    %1972 = vmatprep.subr.mxu0 0.0
    %1973 = vmatpush1.msra.mxu0 0.0
    %1974 = vmatprep.subr.mxu0 0.0
    %1975 = vmatpush1.msra.mxu0 0.0
    %1976 = vmatprep.subr.mxu0 0.0
    %1977 = vmatpush1.msra.mxu0 0.0
    %1978 = vmatprep.subr.mxu0 0.0
    %1979 = vmatpush1.msra.mxu0 0.0
    %1980 = vmatprep.subr.mxu0 0.0
    %1981 = vmatpush1.msra.mxu0 0.0
    %1982 = vmatprep.subr.mxu0 0.0
    %1983 = vmatpush1.msra.mxu0 0.0
    %1984 = vmatprep.subr.mxu0 0.0
    %1985 = vmatpush1.msra.mxu0 0.0
    %1986 = vmatprep.subr.mxu0 0.0
    %1987 = vmatpush1.msra.mxu0 0.0
    %1988 = vmatprep.subr.mxu0 0.0
    %1989 = vmatpush1.msra.mxu0 0.0
    %1990 = vmatprep.subr.mxu0 0.0
    %1991 = vmatpush1.msra.mxu0 0.0
    %1992 = vmatprep.subr.mxu0 0.0
    %1993 = vmatpush1.msra.mxu0 0.0
    %1994 = vmatprep.subr.mxu0 0.0
    %1995 = vmatpush1.msra.mxu0 0.0
    %1996 = vmatprep.subr.mxu0 0.0
    %1997 = vmatpush1.msra.mxu0 0.0
    %1998 = vmatprep.subr.mxu0 0.0
    %1999 = vmatpush1.msra.mxu0 0.0
    %2000 = vmatprep.subr.mxu0 0.0
    %2001 = vmatpush1.msra.mxu0 0.0
    %2002 = vmatprep.mubr.f32.mxu0 0.0
    %2003 = vmatmul.mubr.f32.gmra.mrb[0].mxu0 %v1936
    %v2004 = vpop.f32.mrb[0].mxu0
    %v2005 = vadd.f32 0.0, %v2004
    %v2006 = vpop.f32.mrb[0].mxu0
    %v2007 = vadd.f32 0.0, %v2006
    %2008 = vdwg.mxu0
    %v2009 = vadd.f32 %v1934, %v2005
    %v2010 = vadd.f32 %v1935, %v2007
    %v2011 = vxor.u32 %v2009, 2147483648
    %v2012 = vxor.u32 %v2010, 2147483648
    %v2013 = vmul.f32 %v2011, 1.442695
    %v2014 = vpow.pop %v2013
    %v2015 = vmul.f32 %v2012, 1.442695
    %v2016 = vpow.pop %v2015
    %v2017 = vadd.f32 %v2014, 1.0
    %v2018 = vadd.f32 %v2016, 1.0
    %v2019 = vrcp.pop %v2017
    %v2020 = vmul.f32 1.0, %v2019
    %v2021 = vrcp.pop %v2018
    %v2022 = vmul.f32 1.0, %v2021
    %v2023 = vtanh.pop %v2010
    %v2024 = vmul.f32 %v2020, %v1921
    %2026 = vrot.lane.b32.xlu0 %v2023, 64
    %v2027 = vpop.permute.xlu0 %2026
    %v2029 = vmul.f32 %v2020, %v2027
    %2031 = vrot.lane.b32.xlu0 %v2029, 64
    %v2032 = vpop.permute.xlu0 %2031
    %v2034 = vadd.f32 %v2024, %v2032
    %v2035 = vtanh.pop %v2034
    %2037 = vrot.lane.b32.xlu0 %v2035, 64
    %v2038 = vpop.permute.xlu0 %2037
    %v2040 = vmul.f32 %v2022, %v2038
    %2041 = vst.msk [vmem:[#allocation3 + $0x28] sm:$0xff] %vm269, %v2040
    %2043 = vrot.lane.b32.xlu0 %v2040, 64
    %v2044 = vpop.permute.xlu0 %2043
    %2046 = vst.msk [vmem:[#allocation3 + $0x10] sm:$0xff] %vm381, %v2044
    %v2047 = vld [vmem:[#allocation2 + $0x60] sm:$0xff]
    %v2048 = vld [vmem:[#allocation2 + $0x68] sm:$0xff]
    %v2049 = vsel %vm269, %v2040, 0
    %2051 = vmatprep.subr.mxu0 %v1356
    %2052 = vmatpush1.msra.mxu0 %v1355
    %2053 = vmatprep.subr.mxu0 %v1358
    %2054 = vmatpush1.msra.mxu0 %v1357
    %2055 = vmatprep.subr.mxu0 %v1360
    %2056 = vmatpush1.msra.mxu0 %v1359
    %2057 = vmatprep.subr.mxu0 %v1362
    %2058 = vmatpush1.msra.mxu0 %v1361
    %2059 = vmatprep.subr.mxu0 %v1364
    %2060 = vmatpush1.msra.mxu0 %v1363
    %2061 = vmatprep.subr.mxu0 %v1366
    %2062 = vmatpush1.msra.mxu0 %v1365
    %2063 = vmatprep.subr.mxu0 %v1368
    %2064 = vmatpush1.msra.mxu0 %v1367
    %2065 = vmatprep.subr.mxu0 %v1370
    %2066 = vmatpush1.msra.mxu0 %v1369
    %2067 = vmatprep.subr.mxu0 0.0
    %2068 = vmatpush1.msra.mxu0 0.0
    %2069 = vmatprep.subr.mxu0 0.0
    %2070 = vmatpush1.msra.mxu0 0.0
    %2071 = vmatprep.subr.mxu0 0.0
    %2072 = vmatpush1.msra.mxu0 0.0
    %2073 = vmatprep.subr.mxu0 0.0
    %2074 = vmatpush1.msra.mxu0 0.0
    %2075 = vmatprep.subr.mxu0 0.0
    %2076 = vmatpush1.msra.mxu0 0.0
    %2077 = vmatprep.subr.mxu0 0.0
    %2078 = vmatpush1.msra.mxu0 0.0
    %2079 = vmatprep.subr.mxu0 0.0
    %2080 = vmatpush1.msra.mxu0 0.0
    %2081 = vmatprep.subr.mxu0 0.0
    %2082 = vmatpush1.msra.mxu0 0.0
    %2083 = vmatprep.subr.mxu0 0.0
    %2084 = vmatpush1.msra.mxu0 0.0
    %2085 = vmatprep.subr.mxu0 0.0
    %2086 = vmatpush1.msra.mxu0 0.0
    %2087 = vmatprep.subr.mxu0 0.0
    %2088 = vmatpush1.msra.mxu0 0.0
    %2089 = vmatprep.subr.mxu0 0.0
    %2090 = vmatpush1.msra.mxu0 0.0
    %2091 = vmatprep.subr.mxu0 0.0
    %2092 = vmatpush1.msra.mxu0 0.0
    %2093 = vmatprep.subr.mxu0 0.0
    %2094 = vmatpush1.msra.mxu0 0.0
    %2095 = vmatprep.subr.mxu0 0.0
    %2096 = vmatpush1.msra.mxu0 0.0
    %2097 = vmatprep.subr.mxu0 0.0
    %2098 = vmatpush1.msra.mxu0 0.0
    %2099 = vmatprep.subr.mxu0 0.0
    %2100 = vmatpush1.msra.mxu0 0.0
    %2101 = vmatprep.subr.mxu0 0.0
    %2102 = vmatpush1.msra.mxu0 0.0
    %2103 = vmatprep.subr.mxu0 0.0
    %2104 = vmatpush1.msra.mxu0 0.0
    %2105 = vmatprep.subr.mxu0 0.0
    %2106 = vmatpush1.msra.mxu0 0.0
    %2107 = vmatprep.subr.mxu0 0.0
    %2108 = vmatpush1.msra.mxu0 0.0
    %2109 = vmatprep.subr.mxu0 0.0
    %2110 = vmatpush1.msra.mxu0 0.0
    %2111 = vmatprep.subr.mxu0 0.0
    %2112 = vmatpush1.msra.mxu0 0.0
    %2113 = vmatprep.subr.mxu0 0.0
    %2114 = vmatpush1.msra.mxu0 0.0
    %2115 = vmatprep.mubr.f32.mxu0 0.0
    %2116 = vmatmul.mubr.f32.gmra.mrb[0].mxu0 %v2049
    %v2117 = vpop.f32.mrb[0].mxu0
    %v2118 = vadd.f32 0.0, %v2117
    %v2119 = vpop.f32.mrb[0].mxu0
    %v2120 = vadd.f32 0.0, %v2119
    %2121 = vdwg.mxu0
    %v2122 = vadd.f32 %v2047, %v2118
    %v2123 = vadd.f32 %v2048, %v2120
    %v2124 = vxor.u32 %v2122, 2147483648
    %v2125 = vxor.u32 %v2123, 2147483648
    %v2126 = vmul.f32 %v2124, 1.442695
    %v2127 = vpow.pop %v2126
    %v2128 = vmul.f32 %v2125, 1.442695
    %v2129 = vpow.pop %v2128
    %v2130 = vadd.f32 %v2127, 1.0
    %v2131 = vadd.f32 %v2129, 1.0
    %v2132 = vrcp.pop %v2130
    %v2133 = vmul.f32 1.0, %v2132
    %v2134 = vrcp.pop %v2131
    %v2135 = vmul.f32 1.0, %v2134
    %v2136 = vtanh.pop %v2123
    %v2137 = vmul.f32 %v2133, %v2034
    %2139 = vrot.lane.b32.xlu0 %v2136, 64
    %v2140 = vpop.permute.xlu0 %2139
    %v2142 = vmul.f32 %v2133, %v2140
    %2144 = vrot.lane.b32.xlu0 %v2142, 64
    %v2145 = vpop.permute.xlu0 %2144
    %v2147 = vadd.f32 %v2137, %v2145
    %v2148 = vtanh.pop %v2147
    %2150 = vrot.lane.b32.xlu0 %v2148, 64
    %v2151 = vpop.permute.xlu0 %2150
    %v2153 = vmul.f32 %v2135, %v2151
    %2154 = vst.msk [vmem:[#allocation3 + $0x30] sm:$0xff] %vm269, %v2153
    %2156 = vrot.lane.b32.xlu0 %v2153, 64
    %v2157 = vpop.permute.xlu0 %2156
    %2159 = vst.msk [vmem:[#allocation3 + $0x8] sm:$0xff] %vm381, %v2157
    %v2160 = vld [vmem:[#allocation2 + $0x70] sm:$0xff]
    %v2161 = vld [vmem:[#allocation2 + $0x78] sm:$0xff]
    %v2162 = vsel %vm269, %v2153, 0
    %2164 = vmatprep.subr.mxu0 %v1356
    %2165 = vmatpush1.msra.mxu0 %v1355
    %2166 = vmatprep.subr.mxu0 %v1358
    %2167 = vmatpush1.msra.mxu0 %v1357
    %2168 = vmatprep.subr.mxu0 %v1360
    %2169 = vmatpush1.msra.mxu0 %v1359
    %2170 = vmatprep.subr.mxu0 %v1362
    %2171 = vmatpush1.msra.mxu0 %v1361
    %2172 = vmatprep.subr.mxu0 %v1364
    %2173 = vmatpush1.msra.mxu0 %v1363
    %2174 = vmatprep.subr.mxu0 %v1366
    %2175 = vmatpush1.msra.mxu0 %v1365
    %2176 = vmatprep.subr.mxu0 %v1368
    %2177 = vmatpush1.msra.mxu0 %v1367
    %2178 = vmatprep.subr.mxu0 %v1370
    %2179 = vmatpush1.msra.mxu0 %v1369
    %2180 = vmatprep.subr.mxu0 0.0
    %2181 = vmatpush1.msra.mxu0 0.0
    %2182 = vmatprep.subr.mxu0 0.0
    %2183 = vmatpush1.msra.mxu0 0.0
    %2184 = vmatprep.subr.mxu0 0.0
    %2185 = vmatpush1.msra.mxu0 0.0
    %2186 = vmatprep.subr.mxu0 0.0
    %2187 = vmatpush1.msra.mxu0 0.0
    %2188 = vmatprep.subr.mxu0 0.0
    %2189 = vmatpush1.msra.mxu0 0.0
    %2190 = vmatprep.subr.mxu0 0.0
    %2191 = vmatpush1.msra.mxu0 0.0
    %2192 = vmatprep.subr.mxu0 0.0
    %2193 = vmatpush1.msra.mxu0 0.0
    %2194 = vmatprep.subr.mxu0 0.0
    %2195 = vmatpush1.msra.mxu0 0.0
    %2196 = vmatprep.subr.mxu0 0.0
    %2197 = vmatpush1.msra.mxu0 0.0
    %2198 = vmatprep.subr.mxu0 0.0
    %2199 = vmatpush1.msra.mxu0 0.0
    %2200 = vmatprep.subr.mxu0 0.0
    %2201 = vmatpush1.msra.mxu0 0.0
    %2202 = vmatprep.subr.mxu0 0.0
    %2203 = vmatpush1.msra.mxu0 0.0
    %2204 = vmatprep.subr.mxu0 0.0
    %2205 = vmatpush1.msra.mxu0 0.0
    %2206 = vmatprep.subr.mxu0 0.0
    %2207 = vmatpush1.msra.mxu0 0.0
    %2208 = vmatprep.subr.mxu0 0.0
    %2209 = vmatpush1.msra.mxu0 0.0
    %2210 = vmatprep.subr.mxu0 0.0
    %2211 = vmatpush1.msra.mxu0 0.0
    %2212 = vmatprep.subr.mxu0 0.0
    %2213 = vmatpush1.msra.mxu0 0.0
    %2214 = vmatprep.subr.mxu0 0.0
    %2215 = vmatpush1.msra.mxu0 0.0
    %2216 = vmatprep.subr.mxu0 0.0
    %2217 = vmatpush1.msra.mxu0 0.0
    %2218 = vmatprep.subr.mxu0 0.0
    %2219 = vmatpush1.msra.mxu0 0.0
    %2220 = vmatprep.subr.mxu0 0.0
    %2221 = vmatpush1.msra.mxu0 0.0
    %2222 = vmatprep.subr.mxu0 0.0
    %2223 = vmatpush1.msra.mxu0 0.0
    %2224 = vmatprep.subr.mxu0 0.0
    %2225 = vmatpush1.msra.mxu0 0.0
    %2226 = vmatprep.subr.mxu0 0.0
    %2227 = vmatpush1.msra.mxu0 0.0
    %2228 = vmatprep.mubr.f32.mxu0 0.0
    %2229 = vmatmul.mubr.f32.gmra.mrb[0].mxu0 %v2162
    %v2230 = vpop.f32.mrb[0].mxu0
    %v2231 = vadd.f32 0.0, %v2230
    %v2232 = vpop.f32.mrb[0].mxu0
    %v2233 = vadd.f32 0.0, %v2232
    %2234 = vdwg.mxu0
    %v2235 = vadd.f32 %v2160, %v2231
    %v2236 = vadd.f32 %v2161, %v2233
    %v2237 = vxor.u32 %v2235, 2147483648
    %v2238 = vxor.u32 %v2236, 2147483648
    %v2239 = vmul.f32 %v2237, 1.442695
    %v2240 = vpow.pop %v2239
    %v2241 = vmul.f32 %v2238, 1.442695
    %v2242 = vpow.pop %v2241
    %v2243 = vadd.f32 %v2240, 1.0
    %v2244 = vadd.f32 %v2242, 1.0
    %v2245 = vrcp.pop %v2243
    %v2246 = vmul.f32 1.0, %v2245
    %v2247 = vrcp.pop %v2244
    %v2248 = vmul.f32 1.0, %v2247
    %v2249 = vtanh.pop %v2236
    %v2250 = vmul.f32 %v2246, %v2147
    %2252 = vrot.lane.b32.xlu0 %v2249, 64
    %v2253 = vpop.permute.xlu0 %2252
    %v2255 = vmul.f32 %v2246, %v2253
    %2257 = vrot.lane.b32.xlu0 %v2255, 64
    %v2258 = vpop.permute.xlu0 %2257
    %v2260 = vadd.f32 %v2250, %v2258
    %v2261 = vtanh.pop %v2260
    %2263 = vrot.lane.b32.xlu0 %v2261, 64
    %v2264 = vpop.permute.xlu0 %2263
    %v2266 = vmul.f32 %v2248, %v2264
    %2267 = vst.msk [vmem:[#allocation3 + $0x38] sm:$0xff] %vm269, %v2266
    %2269 = vrot.lane.b32.xlu0 %v2266, 64
    %v2270 = vpop.permute.xlu0 %2269
    %2272 = vst.msk [vmem:[#allocation3] sm:$0xff] %vm381, %v2270
    %v2273 = vld [vmem:[#allocation3 + $0x38] sm:$0xff]
    %v2274 = vld [vmem:[%s7] sm:$0xff]
    %v2275 = vld [vmem:[%s7 + $0x8] sm:$0xff]
    %v2276 = vld [vmem:[%s7 + $0x10] sm:$0xff]
    %v2277 = vld [vmem:[%s7 + $0x18] sm:$0xff]
    %v2278 = vld [vmem:[%s7 + $0x20] sm:$0xff]
    %v2279 = vld [vmem:[%s7 + $0x28] sm:$0xff]
    %v2280 = vld [vmem:[%s7 + $0x30] sm:$0xff]
    %v2281 = vld [vmem:[%s7 + $0x38] sm:$0xff]
    %v2282 = vld [vmem:[%s7 + $0x40] sm:$0xff]
    %v2283 = vld [vmem:[%s7 + $0x48] sm:$0xff]
    %v2284 = vld [vmem:[%s7 + $0x50] sm:$0xff]
    %v2285 = vld [vmem:[%s7 + $0x58] sm:$0xff]
    %v2286 = vld [vmem:[%s7 + $0x60] sm:$0xff]
    %v2287 = vld [vmem:[%s7 + $0x68] sm:$0xff]
    %v2288 = vld [vmem:[%s7 + $0x70] sm:$0xff]
    %v2289 = vld [vmem:[%s7 + $0x78] sm:$0xff]
    %v2290 = vld [vmem:[#allocation4] sm:$0x1]
    %v2292 = vlaneseq
    %v2293 = vshrl.u32 %v2292, 7
    %v2294 = vsub.s32 0, %v2293
    %v2295 = vrot.slane %v2290, %v2294
    %2297 = vmatprep.subr.mxu0 0.0
    %2298 = vmatpush1.msra.mxu0 %v2274
    %2299 = vmatprep.subr.mxu0 0.0
    %2300 = vmatpush1.msra.mxu0 %v2275
    %2301 = vmatprep.subr.mxu0 0.0
    %2302 = vmatpush1.msra.mxu0 %v2276
    %2303 = vmatprep.subr.mxu0 0.0
    %2304 = vmatpush1.msra.mxu0 %v2277
    %2305 = vmatprep.subr.mxu0 0.0
    %2306 = vmatpush1.msra.mxu0 %v2278
    %2307 = vmatprep.subr.mxu0 0.0
    %2308 = vmatpush1.msra.mxu0 %v2279
    %2309 = vmatprep.subr.mxu0 0.0
    %2310 = vmatpush1.msra.mxu0 %v2280
    %2311 = vmatprep.subr.mxu0 0.0
    %2312 = vmatpush1.msra.mxu0 %v2281
    %2313 = vmatprep.subr.mxu0 0.0
    %2314 = vmatpush1.msra.mxu0 %v2282
    %2315 = vmatprep.subr.mxu0 0.0
    %2316 = vmatpush1.msra.mxu0 %v2283
    %2317 = vmatprep.subr.mxu0 0.0
    %2318 = vmatpush1.msra.mxu0 %v2284
    %2319 = vmatprep.subr.mxu0 0.0
    %2320 = vmatpush1.msra.mxu0 %v2285
    %2321 = vmatprep.subr.mxu0 0.0
    %2322 = vmatpush1.msra.mxu0 %v2286
    %2323 = vmatprep.subr.mxu0 0.0
    %2324 = vmatpush1.msra.mxu0 %v2287
    %2325 = vmatprep.subr.mxu0 0.0
    %2326 = vmatpush1.msra.mxu0 %v2288
    %2327 = vmatprep.subr.mxu0 0.0
    %2328 = vmatpush1.msra.mxu0 %v2289
    %2329 = vmatprep.subr.mxu0 0.0
    %2330 = vmatpush1.msra.mxu0 0.0
    %2331 = vmatprep.subr.mxu0 0.0
    %2332 = vmatpush1.msra.mxu0 0.0
    %2333 = vmatprep.subr.mxu0 0.0
    %2334 = vmatpush1.msra.mxu0 0.0
    %2335 = vmatprep.subr.mxu0 0.0
    %2336 = vmatpush1.msra.mxu0 0.0
    %2337 = vmatprep.subr.mxu0 0.0
    %2338 = vmatpush1.msra.mxu0 0.0
    %2339 = vmatprep.subr.mxu0 0.0
    %2340 = vmatpush1.msra.mxu0 0.0
    %2341 = vmatprep.subr.mxu0 0.0
    %2342 = vmatpush1.msra.mxu0 0.0
    %2343 = vmatprep.subr.mxu0 0.0
    %2344 = vmatpush1.msra.mxu0 0.0
    %2345 = vmatprep.subr.mxu0 0.0
    %2346 = vmatpush1.msra.mxu0 0.0
    %2347 = vmatprep.subr.mxu0 0.0
    %2348 = vmatpush1.msra.mxu0 0.0
    %2349 = vmatprep.subr.mxu0 0.0
    %2350 = vmatpush1.msra.mxu0 0.0
    %2351 = vmatprep.subr.mxu0 0.0
    %2352 = vmatpush1.msra.mxu0 0.0
    %2353 = vmatprep.subr.mxu0 0.0
    %2354 = vmatpush1.msra.mxu0 0.0
    %2355 = vmatprep.subr.mxu0 0.0
    %2356 = vmatpush1.msra.mxu0 0.0
    %2357 = vmatprep.subr.mxu0 0.0
    %2358 = vmatpush1.msra.mxu0 0.0
    %2359 = vmatprep.subr.mxu0 0.0
    %2360 = vmatpush1.msra.mxu0 0.0
    %2361 = vmatprep.mubr.f32.mxu0 0.0
    %2362 = vmatmul.mubr.f32.gmra.mrb[0].mxu0 %v2273
    %v2363 = vpop.f32.mrb[0].mxu0
    %v2364 = vadd.f32 %v2295, %v2363
    %v2365 = vpop.f32.mrb[0].mxu0
    %2366 = vdwg.mxu0
    %vm2367 = vcmask 7168
    %2368 = vst.msk [vmem:[%s9] sm:$0xff] %vm2367, %v2364
    // Predicated region
    $region46: #{lstm_classifier_forward.1} parent=1 // pred_check
      _
    $region47: #{lstm_classifier_forward.1} parent=1 // pred_check_branch
      %2370 = sbr.rel (0) target = $region49
    $region48: #{lstm_classifier_forward.1} parent=1 // pred_region
      _
    $region49: #{lstm_classifier_forward.1} parent=1 // pred_fallthru
      _
    // Predicated region
    $region50: #{lstm_classifier_forward.1} parent=1 // pred_check
      _
    $region51: #{lstm_classifier_forward.1} parent=1 // pred_check_branch
      %2372 = sbr.rel (0) target = $region53
    $region52: #{lstm_classifier_forward.1} parent=1 // pred_region
      _
    $region53: #{lstm_classifier_forward.1} parent=1 // pred_fallthru
      _
    %2373 = vsyncpa [#allocation6], 1
    %2374 = vsyncpa [#allocation8], 1

</llo_original>
